<compile_context>
chip_gen: v7x
topology: tpu7x:2x2x1
jax: 0.10.0
libtpu: 0.0.40
codegen_flags: <defaults>
</compile_context>

<pallas_src>
from typing import NamedTuple

import jax
import jax.numpy as jnp
from jax.experimental import pallas as pl
from jax.experimental.pallas import tpu as pltpu


class Config(NamedTuple):
    s_kernelsize: int
    t_kernelsize: int
    s_stride: int
    t_stride: int
    nclasses: int


def _round_up(n, m):
    return ((n + m - 1) // m) * m


def _is_pow2(n):
    return n > 0 and (n & (n - 1)) == 0


def _vec_mod(x, m):
    # power-of-two fast path keeps the lowering to plain bitwise ops
    return jnp.bitwise_and(x, m - 1) if _is_pow2(m) else x % m


def _vec_div(x, m):
    return jnp.right_shift(x, m.bit_length() - 1) if _is_pow2(m) else x // m


# -----------------------------------------------------------------------------
# Fused kernel factory
# -----------------------------------------------------------------------------
def _make_fused_kernel(*, B, H, W, KH, KW, layers, emit_acts):
    """layers: tuple of (Cin, Cout) per conv layer. Requires stride 1, odd kernels."""
    P = H * W
    BP = B * P
    ph, pw = (KH - 1) // 2, (KW - 1) // 2
    L = len(layers)

    def lane_roll(v, s):
        # out[:, g] = v[:, (g + s) % BP]; wrap-around positions are masked by
        # the caller.  Slice+concat has unambiguous semantics and lowers to
        # lane rotations (XLU), which has slack here.
        a = s % BP
        if a == 0:
            return v
        return jnp.concatenate([v[:, a:], v[:, :a]], axis=1)

    def kernel(*refs):
        # ref order: inputs (x, (w,b)*L, fc_w, fc_b), outputs (score, prob[, acts...])
        x_ref = refs[0]
        wb = refs[1:1 + 2 * L]
        fcw_ref = refs[1 + 2 * L]
        fcb_ref = refs[2 + 2 * L]
        score_ref = refs[3 + 2 * L]
        prob_ref = refs[4 + 2 * L]
        act_refs = refs[5 + 2 * L:5 + 3 * L] if emit_acts else ()

        # (B, C0, P) -> (C0, B*P): per-batch lane concat at 256-aligned offsets.
        if B == 1:
            cur = x_ref[0]
        else:
            cur = jnp.concatenate([x_ref[b] for b in range(B)], axis=1)

        # Static per-lane (h, w) coordinates; identical for every layer (stride 1
        # "same" conv keeps H, W).  Used only to build the 9 border masks.
        g = jax.lax.broadcasted_iota(jnp.int32, (1, BP), 1)
        widx = _vec_mod(g, W)
        hidx = _vec_div(_vec_mod(g, P), W)

        def tap_mask(dh, dw):
            conds = []
            if dh < 0:
                conds.append(hidx >= -dh)
            elif dh > 0:
                conds.append(hidx < H - dh)
            if dw < 0:
                conds.append(widx >= -dw)
            elif dw > 0:
                conds.append(widx < W - dw)
            if not conds:
                return None
            m = conds[0]
            for c in conds[1:]:
                m = jnp.logical_and(m, c)
            return m

        masks = [tap_mask(kh - ph, kw - pw) for kh in range(KH) for kw in range(KW)]

        # ---- conv + ReLU layers: one MXU matmul per layer, all lanes live ----
        for li, (cin, cout) in enumerate(layers):
            w_ref, b_ref = wb[2 * li], wb[2 * li + 1]
            taps = []
            for kh in range(KH):
                for kw in range(KW):
                    dh, dw = kh - ph, kw - pw
                    v = lane_roll(cur, dh * W + dw)
                    m = masks[kh * KW + kw]
                    if m is not None:
                        v = jnp.where(m, v, 0.0)          # zero "same" padding
                    taps.append(v)
            slab = jnp.concatenate(taps, axis=0)          # (KH*KW*cin, B*P)
            act = jnp.dot(w_ref[...], slab,
                          preferred_element_type=jnp.float32)   # (cout, B*P)
            act = jnp.maximum(act + b_ref[...], 0.0)      # bias + ReLU
            if emit_acts:
                act_refs[li][...] = act                   # lane-dense (cout, B*P)
            cur = act

        # ---- flatten in torch (C, H, W) order ----
        # In this layout feats[b, c*P + p] = act[c, b*P + p], i.e. already torch
        # flatten order, so this is just aligned 256-wide lane slices + concat.
        Cr = layers[-1][1]
        feats = jnp.concatenate(
            [jnp.concatenate([cur[c:c + 1, b * P:(b + 1) * P] for c in range(Cr)],
                             axis=1)
             for b in range(B)],
            axis=0)                                       # (B, Cr*P) = (B, F)

        # ---- FC (classes lane-padded to 128) + exact softmax(dim=1) ----
        logits = jnp.dot(feats, fcw_ref[...],
                         preferred_element_type=jnp.float32) + fcb_ref[...]
        score_ref[...] = logits
        m = jnp.max(logits, axis=1, keepdims=True)
        e = jnp.exp(logits - m)
        prob_ref[...] = e / jnp.sum(e, axis=1, keepdims=True)   # exact divide

    return kernel


# -----------------------------------------------------------------------------
# Wrapper
# -----------------------------------------------------------------------------
def _forward_impl(packed, x_nchw, *, cfg: Config, return_net: bool = False):
    KH, KW = cfg.s_kernelsize, cfg.t_kernelsize
    # TODO(synk): stride > 1 needs lane subsampling in the HW-on-lanes layout.
    assert cfg.s_stride == 1 and cfg.t_stride == 1, "only stride 1 supported"
    assert KH % 2 == 1 and KW % 2 == 1, "only odd kernel sizes supported"

    B, C0, H, W = x_nchw.shape
    P = H * W
    # Free row-major view (no transpose, no extra dispatched layout op).
    x = x_nchw.reshape(B, C0, P).astype(jnp.float32)

    # Static per-layer geometry (Cin, Cout), inferred from packed weights.
    layers = []
    cin = C0
    for w2, _ in packed["conv"]:
        cout, k = w2.shape
        assert k == KH * KW * cin, "packed conv weight does not match geometry"
        layers.append((cin, cout))
        cin = cout
    layers = tuple(layers)

    F, nc_pad = packed["fc_w"].shape
    assert F == layers[-1][1] * P

    kernel = _make_fused_kernel(B=B, H=H, W=W, KH=KH, KW=KW,
                                layers=layers, emit_acts=return_net)

    vmem = pl.BlockSpec(memory_space=pltpu.MemorySpace.VMEM)
    inputs = [x]
    for w2, b2 in packed["conv"]:
        inputs += [w2, b2]
    inputs += [packed["fc_w"], packed["fc_b"]]

    out_shape = [jax.ShapeDtypeStruct((B, nc_pad), jnp.float32),   # logits (padded)
                 jax.ShapeDtypeStruct((B, nc_pad), jnp.float32)]   # probs  (padded)
    if return_net:
        out_shape += [jax.ShapeDtypeStruct((co, B * P), jnp.float32)
                      for (_, co) in layers]

    outs = pl.pallas_call(
        kernel,
        out_shape=tuple(out_shape),
        in_specs=[vmem] * len(inputs),
        out_specs=tuple([vmem] * len(out_shape)),
    )(*inputs)

    score = outs[0][:, :cfg.nclasses]
    probs = outs[1][:, :cfg.nclasses]
    net = {"score": score}
    if return_net:
        for i, ((_, co), a) in enumerate(zip(layers, outs[2:])):
            net[f"spatiotemporal{i}"] = jnp.transpose(
                a.reshape(co, B, H, W), (1, 0, 2, 3))
    return score, probs, net


spatiotemporal_forward = jax.jit(_forward_impl,
                                 static_argnames=("cfg", "return_net"))


# -----------------------------------------------------------------------------
# Parameter construction / packing (one-time, outside the kernel)
# -----------------------------------------------------------------------------
def init_params(key, input_shape, n_skernels, s_kernelsize, t_kernelsize,
                s_stride, t_stride, nclasses):
    """PyTorch-style U(-1/sqrt(fan_in), 1/sqrt(fan_in)) init."""
    params = {"conv": []}
    cin, H, W = input_shape
    ph, pw = (s_kernelsize - 1) // 2, (t_kernelsize - 1) // 2
    for cout in n_skernels:
        key, kw_, kb_ = jax.random.split(key, 3)
        fan_in = cin * s_kernelsize * t_kernelsize
        bound = 1.0 / float(fan_in) ** 0.5
        w = jax.random.uniform(kw_, (s_kernelsize, t_kernelsize, cin, cout),
                               jnp.float32, -bound, bound)
        b = jax.random.uniform(kb_, (cout,), jnp.float32, -bound, bound)
        params["conv"].append((w, b))
        H = (H + 2 * ph - s_kernelsize) // s_stride + 1
        W = (W + 2 * pw - t_kernelsize) // t_stride + 1
        cin = cout
    F = cin * H * W
    key, kw_, kb_ = jax.random.split(key, 3)
    bound = 1.0 / float(F) ** 0.5
    # fc_w rows follow torch's flatten order (C, H, W); shape (F, nclasses) == weight.T
    params["fc_w"] = jax.random.uniform(kw_, (F, nclasses), jnp.float32, -bound, bound)
    params["fc_b"] = jax.random.uniform(kb_, (nclasses,), jnp.float32, -bound, bound)
    return params


def pack_params(params, lane=128):
    """One-time conversion into the kernel's layouts.

    Conv weight (KH, KW, Cin, Cout) -> (Cout, KH*KW*Cin) matching the tap/channel
    order of the in-kernel slab.  fc_w keeps torch row order (it already matches
    the kernel's flatten order) and only its class columns are lane-padded.
    """
    packed = {"conv": []}
    for w, b in params["conv"]:
        KH, KW, Cin, Cout = w.shape
        w2 = jnp.asarray(w, jnp.float32).reshape(KH * KW * Cin, Cout).T
        b2 = jnp.asarray(b, jnp.float32).reshape(Cout, 1)
        packed["conv"].append((w2, b2))
    F, NC = params["fc_w"].shape
    nc_pad = _round_up(max(NC, lane), lane)
    fcw = jnp.zeros((F, nc_pad), jnp.float32).at[:, :NC].set(params["fc_w"])
    # -1e30 bias on padded columns -> their softmax probability is exactly 0.
    fcb = jnp.full((1, nc_pad), -1e30, jnp.float32).at[0, :NC].set(params["fc_b"])
    packed["fc_w"] = fcw
    packed["fc_b"] = fcb
    return packed


# -----------------------------------------------------------------------------
# Pure-JAX reference for validation
# -----------------------------------------------------------------------------
def reference_forward(params, x_nchw, *, cfg: Config):
    ph, pw = (cfg.s_kernelsize - 1) // 2, (cfg.t_kernelsize - 1) // 2
    acts = []
    score = x_nchw
    for w, b in params["conv"]:
        w_oihw = jnp.transpose(w, (3, 2, 0, 1))
        score = jax.lax.conv_general_dilated(
            score, w_oihw, window_strides=(cfg.s_stride, cfg.t_stride),
            padding=((ph, ph), (pw, pw)),
            dimension_numbers=("NCHW", "OIHW", "NCHW"),
            precision=jax.lax.Precision.HIGHEST)
        score = jnp.maximum(score + b[None, :, None, None], 0.0)
        acts.append(score)
    feats = score.reshape(score.shape[0], -1)
    logits = jnp.dot(feats, params["fc_w"],
                     precision=jax.lax.Precision.HIGHEST) + params["fc_b"]
    probs = jax.nn.softmax(logits, axis=1)
    return logits, probs, acts


if __name__ == "__main__":
    # arch_type='spatiotemporal' (t_kernel==s_kernel, t_stride==s_stride),
    # nlayers=2, n_skernels=[8, 16], 3x3 kernels, stride 1,
    # input_shape [C=2, S=16, T=16], nclasses=10, batch=2,
    # layer_norm=False, task='letter_recognition', build_fc=True.
    cfg = Config(s_kernelsize=3, t_kernelsize=3, s_stride=1, t_stride=1, nclasses=10)
    n_skernels = [8, 16]
    input_shape = (2, 16, 16)
    batch = 2

    key = jax.random.PRNGKey(0)
    k_param, k_x = jax.random.split(key)
    params = init_params(k_param, input_shape, n_skernels, cfg.s_kernelsize,
                         cfg.t_kernelsize, cfg.s_stride, cfg.t_stride, cfg.nclasses)
    packed = pack_params(params)
    x = jax.random.normal(k_x, (batch, *input_shape), jnp.float32)   # NCHW

    score, probs, net = spatiotemporal_forward(packed, x, cfg=cfg)
    jax.block_until_ready((score, probs))

    ref_score, ref_probs, ref_acts = reference_forward(params, x, cfg=cfg)
    assert score.shape == (batch, cfg.nclasses)
    assert probs.shape == (batch, cfg.nclasses)
    assert jnp.allclose(score, ref_score, atol=1e-2, rtol=1e-2), (
        "score mismatch, max abs err %e"
        % float(jnp.max(jnp.abs(score - ref_score))))
    assert jnp.allclose(probs, ref_probs, atol=1e-2, rtol=1e-2), (
        "probs mismatch, max abs err %e"
        % float(jnp.max(jnp.abs(probs - ref_probs))))
    assert jnp.allclose(jnp.sum(probs, axis=1), 1.0, atol=1e-3), (
        "softmax rows do not sum to 1")

    # Exercise the return_net path (per-layer activations) as well.
    score2, probs2, net2 = spatiotemporal_forward(packed, x, cfg=cfg, return_net=True)
    jax.block_until_ready(score2)
    for i, ra in enumerate(ref_acts):
        a = net2[f"spatiotemporal{i}"]
        assert a.shape == ra.shape
        assert jnp.allclose(a, ra, atol=1e-2, rtol=1e-2), (
            "layer %d activation mismatch, max abs err %e"
            % (i, float(jnp.max(jnp.abs(a - ra)))))

    print("KERNEL_OK")
</pallas_src>

<mosaic_0001>
module attributes {stable_mosaic.version = 11 : i64} {
  func.func @kernel(%arg0: memref<2x2x256xf32, #tpu.memory_space<vmem>>, %arg1: memref<8x18xf32, #tpu.memory_space<vmem>>, %arg2: memref<8x1xf32, #tpu.memory_space<vmem>>, %arg3: memref<16x72xf32, #tpu.memory_space<vmem>>, %arg4: memref<16x1xf32, #tpu.memory_space<vmem>>, %arg5: memref<4096x128xf32, #tpu.memory_space<vmem>>, %arg6: memref<1x128xf32, #tpu.memory_space<vmem>>, %arg7: memref<2x128xf32, #tpu.memory_space<vmem>>, %arg8: memref<2x128xf32, #tpu.memory_space<vmem>>) attributes {dimension_semantics = [], scalar_prefetch = 0 : i64, scratch_operands = 0 : i64, tpu.core_type = #tpu.core_type<tc>} {
    %c0 = arith.constant 0 : index
    %c0_0 = arith.constant 0 : index
    %c0_1 = arith.constant 0 : index
    %0 = vector.load %arg0[%c0, %c0_0, %c0_1] : memref<2x2x256xf32, #tpu.memory_space<vmem>>, vector<1x2x256xf32>
    %1 = vector.shape_cast %0 : vector<1x2x256xf32> to vector<2x256xf32>
    %c1 = arith.constant 1 : index
    %c0_2 = arith.constant 0 : index
    %c0_3 = arith.constant 0 : index
    %2 = vector.load %arg0[%c1, %c0_2, %c0_3] : memref<2x2x256xf32, #tpu.memory_space<vmem>>, vector<1x2x256xf32>
    %3 = vector.shape_cast %2 : vector<1x2x256xf32> to vector<2x256xf32>
    %4 = tpu.concatenate %1, %3 in 1 : vector<2x256xf32>, vector<2x256xf32> -> vector<2x512xf32>
    %5 = tpu.iota {dimensions = array<i32: 1>} : vector<1x512xi32>
    %c15_i32 = arith.constant 15 : i32
    %6 = vector.broadcast %c15_i32 : i32 to vector<1x512xi32>
    %7 = arith.andi %5, %6 : vector<1x512xi32>
    %c255_i32 = arith.constant 255 : i32
    %8 = vector.broadcast %c255_i32 : i32 to vector<1x512xi32>
    %9 = arith.andi %5, %8 : vector<1x512xi32>
    %c4_i32 = arith.constant 4 : i32
    %10 = vector.broadcast %c4_i32 : i32 to vector<1x512xi32>
    %11 = arith.shrsi %9, %10 : vector<1x512xi32>
    %c1_i32 = arith.constant 1 : i32
    %12 = vector.broadcast %c1_i32 : i32 to vector<1x512xi32>
    %13 = arith.cmpi sge, %11, %12 : vector<1x512xi32>
    %c1_i32_4 = arith.constant 1 : i32
    %14 = vector.broadcast %c1_i32_4 : i32 to vector<1x512xi32>
    %15 = arith.cmpi sge, %7, %14 : vector<1x512xi32>
    %16 = arith.andi %13, %15 : vector<1x512xi1>
    %c1_i32_5 = arith.constant 1 : i32
    %17 = vector.broadcast %c1_i32_5 : i32 to vector<1x512xi32>
    %18 = arith.cmpi sge, %11, %17 : vector<1x512xi32>
    %c1_i32_6 = arith.constant 1 : i32
    %19 = vector.broadcast %c1_i32_6 : i32 to vector<1x512xi32>
    %20 = arith.cmpi sge, %11, %19 : vector<1x512xi32>
    %c15_i32_7 = arith.constant 15 : i32
    %21 = vector.broadcast %c15_i32_7 : i32 to vector<1x512xi32>
    %22 = arith.cmpi slt, %7, %21 : vector<1x512xi32>
    %23 = arith.andi %20, %22 : vector<1x512xi1>
    %c1_i32_8 = arith.constant 1 : i32
    %24 = vector.broadcast %c1_i32_8 : i32 to vector<1x512xi32>
    %25 = arith.cmpi sge, %7, %24 : vector<1x512xi32>
    %c15_i32_9 = arith.constant 15 : i32
    %26 = vector.broadcast %c15_i32_9 : i32 to vector<1x512xi32>
    %27 = arith.cmpi slt, %7, %26 : vector<1x512xi32>
    %c15_i32_10 = arith.constant 15 : i32
    %28 = vector.broadcast %c15_i32_10 : i32 to vector<1x512xi32>
    %29 = arith.cmpi slt, %11, %28 : vector<1x512xi32>
    %c1_i32_11 = arith.constant 1 : i32
    %30 = vector.broadcast %c1_i32_11 : i32 to vector<1x512xi32>
    %31 = arith.cmpi sge, %7, %30 : vector<1x512xi32>
    %32 = arith.andi %29, %31 : vector<1x512xi1>
    %c15_i32_12 = arith.constant 15 : i32
    %33 = vector.broadcast %c15_i32_12 : i32 to vector<1x512xi32>
    %34 = arith.cmpi slt, %11, %33 : vector<1x512xi32>
    %c15_i32_13 = arith.constant 15 : i32
    %35 = vector.broadcast %c15_i32_13 : i32 to vector<1x512xi32>
    %36 = arith.cmpi slt, %11, %35 : vector<1x512xi32>
    %c15_i32_14 = arith.constant 15 : i32
    %37 = vector.broadcast %c15_i32_14 : i32 to vector<1x512xi32>
    %38 = arith.cmpi slt, %7, %37 : vector<1x512xi32>
    %39 = arith.andi %36, %38 : vector<1x512xi1>
    %40 = vector.extract_strided_slice %4 {offsets = [0, 495], sizes = [2, 17], strides = [1, 1]} : vector<2x512xf32> to vector<2x17xf32>
    %41 = vector.extract_strided_slice %4 {offsets = [0, 0], sizes = [2, 495], strides = [1, 1]} : vector<2x512xf32> to vector<2x495xf32>
    %42 = tpu.concatenate %40, %41 in 1 : vector<2x17xf32>, vector<2x495xf32> -> vector<2x512xf32>
    %cst = arith.constant 0.000000e+00 : f32
    %43 = vector.shape_cast %16 : vector<1x512xi1> to vector<1x512xi1>
    %44 = vector.broadcast %43 : vector<1x512xi1> to vector<2x512xi1>
    %45 = vector.broadcast %cst : f32 to vector<2x512xf32>
    %46 = arith.select %44, %42, %45 : vector<2x512xi1>, vector<2x512xf32>
    %47 = vector.extract_strided_slice %4 {offsets = [0, 496], sizes = [2, 16], strides = [1, 1]} : vector<2x512xf32> to vector<2x16xf32>
    %48 = vector.extract_strided_slice %4 {offsets = [0, 0], sizes = [2, 496], strides = [1, 1]} : vector<2x512xf32> to vector<2x496xf32>
    %49 = tpu.concatenate %47, %48 in 1 : vector<2x16xf32>, vector<2x496xf32> -> vector<2x512xf32>
    %cst_15 = arith.constant 0.000000e+00 : f32
    %50 = vector.shape_cast %18 : vector<1x512xi1> to vector<1x512xi1>
    %51 = vector.broadcast %50 : vector<1x512xi1> to vector<2x512xi1>
    %52 = vector.broadcast %cst_15 : f32 to vector<2x512xf32>
    %53 = arith.select %51, %49, %52 : vector<2x512xi1>, vector<2x512xf32>
    %54 = vector.extract_strided_slice %4 {offsets = [0, 497], sizes = [2, 15], strides = [1, 1]} : vector<2x512xf32> to vector<2x15xf32>
    %55 = vector.extract_strided_slice %4 {offsets = [0, 0], sizes = [2, 497], strides = [1, 1]} : vector<2x512xf32> to vector<2x497xf32>
    %56 = tpu.concatenate %54, %55 in 1 : vector<2x15xf32>, vector<2x497xf32> -> vector<2x512xf32>
    %cst_16 = arith.constant 0.000000e+00 : f32
    %57 = vector.shape_cast %23 : vector<1x512xi1> to vector<1x512xi1>
    %58 = vector.broadcast %57 : vector<1x512xi1> to vector<2x512xi1>
    %59 = vector.broadcast %cst_16 : f32 to vector<2x512xf32>
    %60 = arith.select %58, %56, %59 : vector<2x512xi1>, vector<2x512xf32>
    %61 = vector.extract_strided_slice %4 {offsets = [0, 511], sizes = [2, 1], strides = [1, 1]} : vector<2x512xf32> to vector<2x1xf32>
    %62 = vector.extract_strided_slice %4 {offsets = [0, 0], sizes = [2, 511], strides = [1, 1]} : vector<2x512xf32> to vector<2x511xf32>
    %63 = tpu.concatenate %61, %62 in 1 : vector<2x1xf32>, vector<2x511xf32> -> vector<2x512xf32>
    %cst_17 = arith.constant 0.000000e+00 : f32
    %64 = vector.shape_cast %25 : vector<1x512xi1> to vector<1x512xi1>
    %65 = vector.broadcast %64 : vector<1x512xi1> to vector<2x512xi1>
    %66 = vector.broadcast %cst_17 : f32 to vector<2x512xf32>
    %67 = arith.select %65, %63, %66 : vector<2x512xi1>, vector<2x512xf32>
    %68 = vector.extract_strided_slice %4 {offsets = [0, 1], sizes = [2, 511], strides = [1, 1]} : vector<2x512xf32> to vector<2x511xf32>
    %69 = vector.extract_strided_slice %4 {offsets = [0, 0], sizes = [2, 1], strides = [1, 1]} : vector<2x512xf32> to vector<2x1xf32>
    %70 = tpu.concatenate %68, %69 in 1 : vector<2x511xf32>, vector<2x1xf32> -> vector<2x512xf32>
    %cst_18 = arith.constant 0.000000e+00 : f32
    %71 = vector.shape_cast %27 : vector<1x512xi1> to vector<1x512xi1>
    %72 = vector.broadcast %71 : vector<1x512xi1> to vector<2x512xi1>
    %73 = vector.broadcast %cst_18 : f32 to vector<2x512xf32>
    %74 = arith.select %72, %70, %73 : vector<2x512xi1>, vector<2x512xf32>
    %75 = vector.extract_strided_slice %4 {offsets = [0, 15], sizes = [2, 497], strides = [1, 1]} : vector<2x512xf32> to vector<2x497xf32>
    %76 = vector.extract_strided_slice %4 {offsets = [0, 0], sizes = [2, 15], strides = [1, 1]} : vector<2x512xf32> to vector<2x15xf32>
    %77 = tpu.concatenate %75, %76 in 1 : vector<2x497xf32>, vector<2x15xf32> -> vector<2x512xf32>
    %cst_19 = arith.constant 0.000000e+00 : f32
    %78 = vector.shape_cast %32 : vector<1x512xi1> to vector<1x512xi1>
    %79 = vector.broadcast %78 : vector<1x512xi1> to vector<2x512xi1>
    %80 = vector.broadcast %cst_19 : f32 to vector<2x512xf32>
    %81 = arith.select %79, %77, %80 : vector<2x512xi1>, vector<2x512xf32>
    %82 = vector.extract_strided_slice %4 {offsets = [0, 16], sizes = [2, 496], strides = [1, 1]} : vector<2x512xf32> to vector<2x496xf32>
    %83 = vector.extract_strided_slice %4 {offsets = [0, 0], sizes = [2, 16], strides = [1, 1]} : vector<2x512xf32> to vector<2x16xf32>
    %84 = tpu.concatenate %82, %83 in 1 : vector<2x496xf32>, vector<2x16xf32> -> vector<2x512xf32>
    %cst_20 = arith.constant 0.000000e+00 : f32
    %85 = vector.shape_cast %34 : vector<1x512xi1> to vector<1x512xi1>
    %86 = vector.broadcast %85 : vector<1x512xi1> to vector<2x512xi1>
    %87 = vector.broadcast %cst_20 : f32 to vector<2x512xf32>
    %88 = arith.select %86, %84, %87 : vector<2x512xi1>, vector<2x512xf32>
    %89 = vector.extract_strided_slice %4 {offsets = [0, 17], sizes = [2, 495], strides = [1, 1]} : vector<2x512xf32> to vector<2x495xf32>
    %90 = vector.extract_strided_slice %4 {offsets = [0, 0], sizes = [2, 17], strides = [1, 1]} : vector<2x512xf32> to vector<2x17xf32>
    %91 = tpu.concatenate %89, %90 in 1 : vector<2x495xf32>, vector<2x17xf32> -> vector<2x512xf32>
    %cst_21 = arith.constant 0.000000e+00 : f32
    %92 = vector.shape_cast %39 : vector<1x512xi1> to vector<1x512xi1>
    %93 = vector.broadcast %92 : vector<1x512xi1> to vector<2x512xi1>
    %94 = vector.broadcast %cst_21 : f32 to vector<2x512xf32>
    %95 = arith.select %93, %91, %94 : vector<2x512xi1>, vector<2x512xf32>
    %96 = tpu.concatenate %46, %53, %60, %67, %4, %74, %81, %88, %95 in 0 : vector<2x512xf32>, vector<2x512xf32>, vector<2x512xf32>, vector<2x512xf32>, vector<2x512xf32>, vector<2x512xf32>, vector<2x512xf32>, vector<2x512xf32>, vector<2x512xf32> -> vector<18x512xf32>
    %c0_22 = arith.constant 0 : index
    %c0_23 = arith.constant 0 : index
    %97 = vector.load %arg1[%c0_22, %c0_23] : memref<8x18xf32, #tpu.memory_space<vmem>>, vector<8x18xf32>
    %cst_24 = arith.constant dense<0.000000e+00> : vector<8x512xf32>
    %98 = tpu.matmul %97, %96, %cst_24 {dimension_numbers = #tpu.dot_dimension_numbers<[1], [0], [0], [1], [0, 0, 1, 1], [], []>} : vector<8x18xf32>, vector<18x512xf32>, vector<8x512xf32> -> vector<8x512xf32>
    %c0_25 = arith.constant 0 : index
    %c0_26 = arith.constant 0 : index
    %99 = vector.load %arg2[%c0_25, %c0_26] : memref<8x1xf32, #tpu.memory_space<vmem>>, vector<8x1xf32>
    %100 = vector.broadcast %99 : vector<8x1xf32> to vector<8x512xf32>
    %101 = arith.addf %98, %100 : vector<8x512xf32>
    %cst_27 = arith.constant 0.000000e+00 : f32
    %102 = vector.broadcast %cst_27 : f32 to vector<8x512xf32>
    %103 = arith.maximumf %101, %102 : vector<8x512xf32>
    %104 = vector.extract_strided_slice %103 {offsets = [0, 495], sizes = [8, 17], strides = [1, 1]} : vector<8x512xf32> to vector<8x17xf32>
    %105 = vector.extract_strided_slice %103 {offsets = [0, 0], sizes = [8, 495], strides = [1, 1]} : vector<8x512xf32> to vector<8x495xf32>
    %106 = tpu.concatenate %104, %105 in 1 : vector<8x17xf32>, vector<8x495xf32> -> vector<8x512xf32>
    %cst_28 = arith.constant 0.000000e+00 : f32
    %107 = vector.shape_cast %16 : vector<1x512xi1> to vector<1x512xi1>
    %108 = vector.broadcast %107 : vector<1x512xi1> to vector<8x512xi1>
    %109 = vector.broadcast %cst_28 : f32 to vector<8x512xf32>
    %110 = arith.select %108, %106, %109 : vector<8x512xi1>, vector<8x512xf32>
    %111 = vector.extract_strided_slice %103 {offsets = [0, 496], sizes = [8, 16], strides = [1, 1]} : vector<8x512xf32> to vector<8x16xf32>
    %112 = vector.extract_strided_slice %103 {offsets = [0, 0], sizes = [8, 496], strides = [1, 1]} : vector<8x512xf32> to vector<8x496xf32>
    %113 = tpu.concatenate %111, %112 in 1 : vector<8x16xf32>, vector<8x496xf32> -> vector<8x512xf32>
    %cst_29 = arith.constant 0.000000e+00 : f32
    %114 = vector.shape_cast %18 : vector<1x512xi1> to vector<1x512xi1>
    %115 = vector.broadcast %114 : vector<1x512xi1> to vector<8x512xi1>
    %116 = vector.broadcast %cst_29 : f32 to vector<8x512xf32>
    %117 = arith.select %115, %113, %116 : vector<8x512xi1>, vector<8x512xf32>
    %118 = vector.extract_strided_slice %103 {offsets = [0, 497], sizes = [8, 15], strides = [1, 1]} : vector<8x512xf32> to vector<8x15xf32>
    %119 = vector.extract_strided_slice %103 {offsets = [0, 0], sizes = [8, 497], strides = [1, 1]} : vector<8x512xf32> to vector<8x497xf32>
    %120 = tpu.concatenate %118, %119 in 1 : vector<8x15xf32>, vector<8x497xf32> -> vector<8x512xf32>
    %cst_30 = arith.constant 0.000000e+00 : f32
    %121 = vector.shape_cast %23 : vector<1x512xi1> to vector<1x512xi1>
    %122 = vector.broadcast %121 : vector<1x512xi1> to vector<8x512xi1>
    %123 = vector.broadcast %cst_30 : f32 to vector<8x512xf32>
    %124 = arith.select %122, %120, %123 : vector<8x512xi1>, vector<8x512xf32>
    %125 = vector.extract_strided_slice %103 {offsets = [0, 511], sizes = [8, 1], strides = [1, 1]} : vector<8x512xf32> to vector<8x1xf32>
    %126 = vector.extract_strided_slice %103 {offsets = [0, 0], sizes = [8, 511], strides = [1, 1]} : vector<8x512xf32> to vector<8x511xf32>
    %127 = tpu.concatenate %125, %126 in 1 : vector<8x1xf32>, vector<8x511xf32> -> vector<8x512xf32>
    %cst_31 = arith.constant 0.000000e+00 : f32
    %128 = vector.shape_cast %25 : vector<1x512xi1> to vector<1x512xi1>
    %129 = vector.broadcast %128 : vector<1x512xi1> to vector<8x512xi1>
    %130 = vector.broadcast %cst_31 : f32 to vector<8x512xf32>
    %131 = arith.select %129, %127, %130 : vector<8x512xi1>, vector<8x512xf32>
    %132 = vector.extract_strided_slice %103 {offsets = [0, 1], sizes = [8, 511], strides = [1, 1]} : vector<8x512xf32> to vector<8x511xf32>
    %133 = vector.extract_strided_slice %103 {offsets = [0, 0], sizes = [8, 1], strides = [1, 1]} : vector<8x512xf32> to vector<8x1xf32>
    %134 = tpu.concatenate %132, %133 in 1 : vector<8x511xf32>, vector<8x1xf32> -> vector<8x512xf32>
    %cst_32 = arith.constant 0.000000e+00 : f32
    %135 = vector.shape_cast %27 : vector<1x512xi1> to vector<1x512xi1>
    %136 = vector.broadcast %135 : vector<1x512xi1> to vector<8x512xi1>
    %137 = vector.broadcast %cst_32 : f32 to vector<8x512xf32>
    %138 = arith.select %136, %134, %137 : vector<8x512xi1>, vector<8x512xf32>
    %139 = vector.extract_strided_slice %103 {offsets = [0, 15], sizes = [8, 497], strides = [1, 1]} : vector<8x512xf32> to vector<8x497xf32>
    %140 = vector.extract_strided_slice %103 {offsets = [0, 0], sizes = [8, 15], strides = [1, 1]} : vector<8x512xf32> to vector<8x15xf32>
    %141 = tpu.concatenate %139, %140 in 1 : vector<8x497xf32>, vector<8x15xf32> -> vector<8x512xf32>
    %cst_33 = arith.constant 0.000000e+00 : f32
    %142 = vector.shape_cast %32 : vector<1x512xi1> to vector<1x512xi1>
    %143 = vector.broadcast %142 : vector<1x512xi1> to vector<8x512xi1>
    %144 = vector.broadcast %cst_33 : f32 to vector<8x512xf32>
    %145 = arith.select %143, %141, %144 : vector<8x512xi1>, vector<8x512xf32>
    %146 = vector.extract_strided_slice %103 {offsets = [0, 16], sizes = [8, 496], strides = [1, 1]} : vector<8x512xf32> to vector<8x496xf32>
    %147 = vector.extract_strided_slice %103 {offsets = [0, 0], sizes = [8, 16], strides = [1, 1]} : vector<8x512xf32> to vector<8x16xf32>
    %148 = tpu.concatenate %146, %147 in 1 : vector<8x496xf32>, vector<8x16xf32> -> vector<8x512xf32>
    %cst_34 = arith.constant 0.000000e+00 : f32
    %149 = vector.shape_cast %34 : vector<1x512xi1> to vector<1x512xi1>
    %150 = vector.broadcast %149 : vector<1x512xi1> to vector<8x512xi1>
    %151 = vector.broadcast %cst_34 : f32 to vector<8x512xf32>
    %152 = arith.select %150, %148, %151 : vector<8x512xi1>, vector<8x512xf32>
    %153 = vector.extract_strided_slice %103 {offsets = [0, 17], sizes = [8, 495], strides = [1, 1]} : vector<8x512xf32> to vector<8x495xf32>
    %154 = vector.extract_strided_slice %103 {offsets = [0, 0], sizes = [8, 17], strides = [1, 1]} : vector<8x512xf32> to vector<8x17xf32>
    %155 = tpu.concatenate %153, %154 in 1 : vector<8x495xf32>, vector<8x17xf32> -> vector<8x512xf32>
    %cst_35 = arith.constant 0.000000e+00 : f32
    %156 = vector.shape_cast %39 : vector<1x512xi1> to vector<1x512xi1>
    %157 = vector.broadcast %156 : vector<1x512xi1> to vector<8x512xi1>
    %158 = vector.broadcast %cst_35 : f32 to vector<8x512xf32>
    %159 = arith.select %157, %155, %158 : vector<8x512xi1>, vector<8x512xf32>
    %160 = tpu.concatenate %110, %117, %124, %131, %103, %138, %145, %152, %159 in 0 : vector<8x512xf32>, vector<8x512xf32>, vector<8x512xf32>, vector<8x512xf32>, vector<8x512xf32>, vector<8x512xf32>, vector<8x512xf32>, vector<8x512xf32>, vector<8x512xf32> -> vector<72x512xf32>
    %c0_36 = arith.constant 0 : index
    %c0_37 = arith.constant 0 : index
    %161 = vector.load %arg3[%c0_36, %c0_37] : memref<16x72xf32, #tpu.memory_space<vmem>>, vector<16x72xf32>
    %cst_38 = arith.constant dense<0.000000e+00> : vector<16x512xf32>
    %162 = tpu.matmul %161, %160, %cst_38 {dimension_numbers = #tpu.dot_dimension_numbers<[1], [0], [0], [1], [0, 0, 1, 1], [], []>} : vector<16x72xf32>, vector<72x512xf32>, vector<16x512xf32> -> vector<16x512xf32>
    %c0_39 = arith.constant 0 : index
    %c0_40 = arith.constant 0 : index
    %163 = vector.load %arg4[%c0_39, %c0_40] : memref<16x1xf32, #tpu.memory_space<vmem>>, vector<16x1xf32>
    %164 = vector.broadcast %163 : vector<16x1xf32> to vector<16x512xf32>
    %165 = arith.addf %162, %164 : vector<16x512xf32>
    %cst_41 = arith.constant 0.000000e+00 : f32
    %166 = vector.broadcast %cst_41 : f32 to vector<16x512xf32>
    %167 = arith.maximumf %165, %166 : vector<16x512xf32>
    %168 = vector.extract_strided_slice %167 {offsets = [0, 0], sizes = [1, 256], strides = [1, 1]} : vector<16x512xf32> to vector<1x256xf32>
    %169 = vector.extract_strided_slice %167 {offsets = [1, 0], sizes = [1, 256], strides = [1, 1]} : vector<16x512xf32> to vector<1x256xf32>
    %170 = vector.extract_strided_slice %167 {offsets = [2, 0], sizes = [1, 256], strides = [1, 1]} : vector<16x512xf32> to vector<1x256xf32>
    %171 = vector.extract_strided_slice %167 {offsets = [3, 0], sizes = [1, 256], strides = [1, 1]} : vector<16x512xf32> to vector<1x256xf32>
    %172 = vector.extract_strided_slice %167 {offsets = [4, 0], sizes = [1, 256], strides = [1, 1]} : vector<16x512xf32> to vector<1x256xf32>
    %173 = vector.extract_strided_slice %167 {offsets = [5, 0], sizes = [1, 256], strides = [1, 1]} : vector<16x512xf32> to vector<1x256xf32>
    %174 = vector.extract_strided_slice %167 {offsets = [6, 0], sizes = [1, 256], strides = [1, 1]} : vector<16x512xf32> to vector<1x256xf32>
    %175 = vector.extract_strided_slice %167 {offsets = [7, 0], sizes = [1, 256], strides = [1, 1]} : vector<16x512xf32> to vector<1x256xf32>
    %176 = vector.extract_strided_slice %167 {offsets = [8, 0], sizes = [1, 256], strides = [1, 1]} : vector<16x512xf32> to vector<1x256xf32>
    %177 = vector.extract_strided_slice %167 {offsets = [9, 0], sizes = [1, 256], strides = [1, 1]} : vector<16x512xf32> to vector<1x256xf32>
    %178 = vector.extract_strided_slice %167 {offsets = [10, 0], sizes = [1, 256], strides = [1, 1]} : vector<16x512xf32> to vector<1x256xf32>
    %179 = vector.extract_strided_slice %167 {offsets = [11, 0], sizes = [1, 256], strides = [1, 1]} : vector<16x512xf32> to vector<1x256xf32>
    %180 = vector.extract_strided_slice %167 {offsets = [12, 0], sizes = [1, 256], strides = [1, 1]} : vector<16x512xf32> to vector<1x256xf32>
    %181 = vector.extract_strided_slice %167 {offsets = [13, 0], sizes = [1, 256], strides = [1, 1]} : vector<16x512xf32> to vector<1x256xf32>
    %182 = vector.extract_strided_slice %167 {offsets = [14, 0], sizes = [1, 256], strides = [1, 1]} : vector<16x512xf32> to vector<1x256xf32>
    %183 = vector.extract_strided_slice %167 {offsets = [15, 0], sizes = [1, 256], strides = [1, 1]} : vector<16x512xf32> to vector<1x256xf32>
    %184 = tpu.concatenate %168, %169, %170, %171, %172, %173, %174, %175, %176, %177, %178, %179, %180, %181, %182, %183 in 1 : vector<1x256xf32>, vector<1x256xf32>, vector<1x256xf32>, vector<1x256xf32>, vector<1x256xf32>, vector<1x256xf32>, vector<1x256xf32>, vector<1x256xf32>, vector<1x256xf32>, vector<1x256xf32>, vector<1x256xf32>, vector<1x256xf32>, vector<1x256xf32>, vector<1x256xf32>, vector<1x256xf32>, vector<1x256xf32> -> vector<1x4096xf32>
    %185 = vector.extract_strided_slice %167 {offsets = [0, 256], sizes = [1, 256], strides = [1, 1]} : vector<16x512xf32> to vector<1x256xf32>
    %186 = vector.extract_strided_slice %167 {offsets = [1, 256], sizes = [1, 256], strides = [1, 1]} : vector<16x512xf32> to vector<1x256xf32>
    %187 = vector.extract_strided_slice %167 {offsets = [2, 256], sizes = [1, 256], strides = [1, 1]} : vector<16x512xf32> to vector<1x256xf32>
    %188 = vector.extract_strided_slice %167 {offsets = [3, 256], sizes = [1, 256], strides = [1, 1]} : vector<16x512xf32> to vector<1x256xf32>
    %189 = vector.extract_strided_slice %167 {offsets = [4, 256], sizes = [1, 256], strides = [1, 1]} : vector<16x512xf32> to vector<1x256xf32>
    %190 = vector.extract_strided_slice %167 {offsets = [5, 256], sizes = [1, 256], strides = [1, 1]} : vector<16x512xf32> to vector<1x256xf32>
    %191 = vector.extract_strided_slice %167 {offsets = [6, 256], sizes = [1, 256], strides = [1, 1]} : vector<16x512xf32> to vector<1x256xf32>
    %192 = vector.extract_strided_slice %167 {offsets = [7, 256], sizes = [1, 256], strides = [1, 1]} : vector<16x512xf32> to vector<1x256xf32>
    %193 = vector.extract_strided_slice %167 {offsets = [8, 256], sizes = [1, 256], strides = [1, 1]} : vector<16x512xf32> to vector<1x256xf32>
    %194 = vector.extract_strided_slice %167 {offsets = [9, 256], sizes = [1, 256], strides = [1, 1]} : vector<16x512xf32> to vector<1x256xf32>
    %195 = vector.extract_strided_slice %167 {offsets = [10, 256], sizes = [1, 256], strides = [1, 1]} : vector<16x512xf32> to vector<1x256xf32>
    %196 = vector.extract_strided_slice %167 {offsets = [11, 256], sizes = [1, 256], strides = [1, 1]} : vector<16x512xf32> to vector<1x256xf32>
    %197 = vector.extract_strided_slice %167 {offsets = [12, 256], sizes = [1, 256], strides = [1, 1]} : vector<16x512xf32> to vector<1x256xf32>
    %198 = vector.extract_strided_slice %167 {offsets = [13, 256], sizes = [1, 256], strides = [1, 1]} : vector<16x512xf32> to vector<1x256xf32>
    %199 = vector.extract_strided_slice %167 {offsets = [14, 256], sizes = [1, 256], strides = [1, 1]} : vector<16x512xf32> to vector<1x256xf32>
    %200 = vector.extract_strided_slice %167 {offsets = [15, 256], sizes = [1, 256], strides = [1, 1]} : vector<16x512xf32> to vector<1x256xf32>
    %201 = tpu.concatenate %185, %186, %187, %188, %189, %190, %191, %192, %193, %194, %195, %196, %197, %198, %199, %200 in 1 : vector<1x256xf32>, vector<1x256xf32>, vector<1x256xf32>, vector<1x256xf32>, vector<1x256xf32>, vector<1x256xf32>, vector<1x256xf32>, vector<1x256xf32>, vector<1x256xf32>, vector<1x256xf32>, vector<1x256xf32>, vector<1x256xf32>, vector<1x256xf32>, vector<1x256xf32>, vector<1x256xf32>, vector<1x256xf32> -> vector<1x4096xf32>
    %202 = tpu.concatenate %184, %201 in 0 : vector<1x4096xf32>, vector<1x4096xf32> -> vector<2x4096xf32>
    %c0_42 = arith.constant 0 : index
    %c0_43 = arith.constant 0 : index
    %203 = vector.load %arg5[%c0_42, %c0_43] : memref<4096x128xf32, #tpu.memory_space<vmem>>, vector<4096x128xf32>
    %cst_44 = arith.constant dense<0.000000e+00> : vector<2x128xf32>
    %204 = tpu.matmul %202, %203, %cst_44 {dimension_numbers = #tpu.dot_dimension_numbers<[1], [0], [0], [1], [0, 0, 1, 1], [], []>} : vector<2x4096xf32>, vector<4096x128xf32>, vector<2x128xf32> -> vector<2x128xf32>
    %c0_45 = arith.constant 0 : index
    %c0_46 = arith.constant 0 : index
    %205 = vector.load %arg6[%c0_45, %c0_46] : memref<1x128xf32, #tpu.memory_space<vmem>>, vector<1x128xf32>
    %206 = vector.broadcast %205 : vector<1x128xf32> to vector<2x128xf32>
    %207 = arith.addf %204, %206 : vector<2x128xf32>
    %c0_47 = arith.constant 0 : index
    %c0_48 = arith.constant 0 : index
    %208 = vector.load %arg7[%c0_47, %c0_48] : memref<2x128xf32, #tpu.memory_space<vmem>>, vector<2x128xf32>
    tpu.vector_store %arg7[%c0_47, %c0_48], %207 {strides = array<i32>} : memref<2x128xf32, #tpu.memory_space<vmem>>, vector<2x128xf32>,
    %cst_49 = arith.constant dense<0xFF800000> : vector<2xf32>
    %209 = vector.multi_reduction <maximumf>, %207, %cst_49 [1] : vector<2x128xf32> to vector<2xf32>
    %210 = vector.shape_cast %209 : vector<2xf32> to vector<2x1xf32>
    %211 = vector.broadcast %210 : vector<2x1xf32> to vector<2x128xf32>
    %212 = arith.subf %207, %211 : vector<2x128xf32>
    %213 = math.exp %212 : vector<2x128xf32>
    %cst_50 = arith.constant dense<0.000000e+00> : vector<2xf32>
    %214 = vector.multi_reduction <add>, %213, %cst_50 [1] : vector<2x128xf32> to vector<2xf32>
    %215 = vector.shape_cast %214 : vector<2xf32> to vector<2x1xf32>
    %216 = vector.broadcast %215 : vector<2x1xf32> to vector<2x128xf32>
    %217 = arith.divf %213, %216 : vector<2x128xf32>
    %c0_51 = arith.constant 0 : index
    %c0_52 = arith.constant 0 : index
    %218 = vector.load %arg8[%c0_51, %c0_52] : memref<2x128xf32, #tpu.memory_space<vmem>>, vector<2x128xf32>
    tpu.vector_store %arg8[%c0_51, %c0_52], %217 {strides = array<i32>} : memref<2x128xf32, #tpu.memory_space<vmem>>, vector<2x128xf32>,
    return
  }
}

</mosaic_0001>

<llo_original>
// kernel: _forward_impl.1
$region0: #{_forward_impl.1}
  #allocation0 [shape = 'u32[]', space=smem, size = 0x4, offset = 0x4, fixed_abs, tag = 'smem constant byte address 0x4 - core index']
  #allocation1 [shape = 'u32[144,128]{1,0:T(1,128)}', space=vmem, size = 0x12000, scoped, tag = 'internal scratch']
  %s0 = inlined_call_operand.vmem [shape: f32[2,2,256], index: 0, kind: input, shape index: {}]
  %s1 = inlined_call_operand.hbm [shape: f32[8,18], index: 1, kind: input, shape index: {}]
  %s2 = inlined_call_operand.vmem [shape: f32[8,1], index: 2, kind: input, shape index: {}]
  %s3 = inlined_call_operand.hbm [shape: f32[16,72], index: 3, kind: input, shape index: {}]
  %s4 = inlined_call_operand.vmem [shape: f32[16,1], index: 4, kind: input, shape index: {}]
  %s5 = inlined_call_operand.hbm [shape: f32[4096,128], index: 5, kind: input, shape index: {}]
  %s6 = inlined_call_operand.hbm [shape: f32[1,128], index: 6, kind: input, shape index: {}]
  %s7 = inlined_call_operand.vmem [shape: f32[2,128], index: 7, kind: output, shape index: {0}]
  %s8 = inlined_call_operand.hbm [shape: f32[2,128], index: 8, kind: output, shape index: {1}]
  %9 = xla_tuple %s7, %s8
  %s10 = sld [smem:[#allocation0]]
  $region62: #{_forward_impl.1} parent=0
    _
  %s12 = ssub.s32 1, %s10
  %s13 = scalar_select 0, %s12, %s10
  $region1: #{_forward_impl.1} parent=0
    #allocation2 [shape = 'u8[4096]{0}', space=vmem, size = 0x1000, scoped, tag = 'input window, operand 1, single buffered']
    #allocation3 [shape = 's32[1]{0}', space=sflag, size = 0x4, scoped, tag = 'scoped memory for _forward_impl.1']
    #allocation4 [shape = 's32[1]{0}', space=sflag, size = 0x4, scoped, tag = 'scoped memory for _forward_impl.1']
    #allocation5 [shape = 'u8[8192]{0}', space=vmem, size = 0x2000, scoped, tag = 'input window, operand 3, single buffered']
    #allocation6 [shape = 's32[1]{0}', space=sflag, size = 0x4, scoped, tag = 'scoped memory for _forward_impl.1']
    #allocation7 [shape = 'u8[2097152]{0}', space=vmem, size = 0x200000, scoped, tag = 'input window, operand 5, single buffered']
    #allocation8 [shape = 'u8[512]{0}', space=vmem, size = 0x400, scoped, tag = 'input window, operand 6, single buffered']
    #allocation9 [shape = 's32[1]{0}', space=sflag, size = 0x4, scoped, tag = 'scoped memory for _forward_impl.1']
    #allocation10 [shape = 'u8[1024]{0}', space=vmem, size = 0x400, scoped, tag = 'output window, operand 1, single buffered']
    %14 = vsyncpa [#allocation3], 0
    %15 = vsyncpa [#allocation6], 0
    %16 = vsyncpa [#allocation9], 0
    %17 = vsyncpa [#allocation4], 0
    // Predicated region
    $region2: #{_forward_impl.1} parent=1 // pred_check
      _
    $region3: #{_forward_impl.1} parent=1 // pred_check_branch
      %19 = sbr.rel (0) target = $region5
    $region4: #{_forward_impl.1} parent=1 // pred_region
      _
    $region5: #{_forward_impl.1} parent=1 // pred_fallthru
      _
    // Predicated region
    $region6: #{_forward_impl.1} parent=1 // pred_check
      _
    $region7: #{_forward_impl.1} parent=1 // pred_check_branch
      %21 = sbr.rel (0) target = $region9
    $region8: #{_forward_impl.1} parent=1 // pred_region
      %s23 = ssub.s32 128, 128
      %24 = vsyncadd [#allocation3], %s23
      %s26 = sshll.u32 [#allocation2], 4
      %s27 = int_to_ptr.vmem [resolvable:$true] %s26
      %29 = dma.hbm_to_vmem [thread:$0]  %s1, 128, %s27, [#allocation3]
    $region9: #{_forward_impl.1} parent=1 // pred_fallthru
      _
    // Predicated region
    $region10: #{_forward_impl.1} parent=1 // pred_check
      _
    $region11: #{_forward_impl.1} parent=1 // pred_check_branch
      %31 = sbr.rel (0) target = $region13
    $region12: #{_forward_impl.1} parent=1 // pred_region
      _
    $region13: #{_forward_impl.1} parent=1 // pred_fallthru
      _
    // Predicated region
    $region14: #{_forward_impl.1} parent=1 // pred_check
      _
    $region15: #{_forward_impl.1} parent=1 // pred_check_branch
      %33 = sbr.rel (0) target = $region17
    $region16: #{_forward_impl.1} parent=1 // pred_region
      %s35 = ssub.s32 256, 256
      %36 = vsyncadd [#allocation6], %s35
      %s37 = sshll.u32 [#allocation5], 4
      %s38 = int_to_ptr.vmem [resolvable:$true] %s37
      %43 = dma.hbm_to_vmem [thread:$0]  %s3, 256, %s38, [#allocation6], 128, 128, 8
    $region17: #{_forward_impl.1} parent=1 // pred_fallthru
      _
    // Predicated region
    $region18: #{_forward_impl.1} parent=1 // pred_check
      _
    $region19: #{_forward_impl.1} parent=1 // pred_check_branch
      %45 = sbr.rel (0) target = $region21
    $region20: #{_forward_impl.1} parent=1 // pred_region
      _
    $region21: #{_forward_impl.1} parent=1 // pred_fallthru
      _
    // Predicated region
    $region22: #{_forward_impl.1} parent=1 // pred_check
      _
    $region23: #{_forward_impl.1} parent=1 // pred_check_branch
      %47 = sbr.rel (0) target = $region25
    $region24: #{_forward_impl.1} parent=1 // pred_region
      %s49 = ssub.s32 65536, 65536
      %50 = vsyncadd [#allocation6], %s49
      %s51 = sshll.u32 [#allocation7], 4
      %s52 = int_to_ptr.vmem [resolvable:$true] %s51
      %57 = dma.hbm_to_vmem [thread:$0]  %s5, 65536, %s52, [#allocation6], 128, 128, 8
    $region25: #{_forward_impl.1} parent=1 // pred_fallthru
      _
    // Predicated region
    $region26: #{_forward_impl.1} parent=1 // pred_check
      _
    $region27: #{_forward_impl.1} parent=1 // pred_check_branch
      %59 = sbr.rel (0) target = $region29
    $region28: #{_forward_impl.1} parent=1 // pred_region
      %s61 = ssub.s32 16, 16
      %62 = vsyncadd [#allocation9], %s61
      %s64 = sshll.u32 [#allocation8], 4
      %s65 = int_to_ptr.vmem [resolvable:$true] %s64
      %67 = dma.hbm_to_vmem [thread:$0]  %s6, 16, %s65, [#allocation9]
    $region29: #{_forward_impl.1} parent=1 // pred_fallthru
      _
    // Predicated region
    $region30: #{_forward_impl.1} parent=1 // pred_check
      _
    $region31: #{_forward_impl.1} parent=1 // pred_check_branch
      %69 = sbr.rel (0) target = $region33
    $region32: #{_forward_impl.1} parent=1 // pred_region
      %70 = dma.done [#allocation3], 128
    $region33: #{_forward_impl.1} parent=1 // pred_fallthru
      _
    // Predicated region
    $region34: #{_forward_impl.1} parent=1 // pred_check
      _
    $region35: #{_forward_impl.1} parent=1 // pred_check_branch
      %72 = sbr.rel (0) target = $region37
    $region36: #{_forward_impl.1} parent=1 // pred_region
      %73 = dma.done [#allocation6], 256
    $region37: #{_forward_impl.1} parent=1 // pred_fallthru
      _
    // Predicated region
    $region38: #{_forward_impl.1} parent=1 // pred_check
      _
    $region39: #{_forward_impl.1} parent=1 // pred_check_branch
      %75 = sbr.rel (0) target = $region41
    $region40: #{_forward_impl.1} parent=1 // pred_region
      %76 = dma.done [#allocation6], 65536
    $region41: #{_forward_impl.1} parent=1 // pred_fallthru
      _
    // Predicated region
    $region42: #{_forward_impl.1} parent=1 // pred_check
      _
    $region43: #{_forward_impl.1} parent=1 // pred_check_branch
      %78 = sbr.rel (0) target = $region45
    $region44: #{_forward_impl.1} parent=1 // pred_region
      %79 = dma.done [#allocation9], 16
    $region45: #{_forward_impl.1} parent=1 // pred_fallthru
      _
    %v80 = vld [vmem:[%s0] sm:$0xf]
    %s81 = scalar_lea.vmem %s0, 4
    %v82 = vld [vmem:[%s81] sm:$0xf]
    %v85 = vunpack.c.l.s4 1983009808
    %v86 = vunpack.c.0.s8 %v85
    %v87 = vlaneseq
    %v88 = vshrl.u32 %v87, 7
    %v89 = vsub.s32 %v86, %v88
    %v90 = vrot.slane %v80, %v89
    %v91 = vcombine.high %v90, %v90
    %v96 = vunpack.c.l.s4 1983009808
    %v97 = vunpack.c.0.s8 %v96
    %v98 = vlaneseq
    %v99 = vshrl.u32 %v98, 7
    %v100 = vsub.s32 %v97, %v99
    %v101 = vrot.slane %v82, %v100
    %v102 = vcombine.high %v101, %v101
    %v105 = vlaneseq
    %v106 = vand.u32 %v105, 127
    %v107 = vadd.s32 %v106, 128
    %v108 = vadd.s32 %v106, 256
    %v109 = vadd.s32 %v106, 384
    %v110 = vand.u32 %v106, 15
    %v111 = vand.u32 %v107, 15
    %v112 = vand.u32 %v108, 15
    %v113 = vand.u32 %v109, 15
    %v114 = vand.u32 %v106, 255
    %v115 = vand.u32 %v107, 255
    %v116 = vand.u32 %v108, 255
    %v117 = vand.u32 %v109, 255
    %v118 = vshra.s32 %v114, 4
    %v119 = vshra.s32 %v115, 4
    %v120 = vshra.s32 %v116, 4
    %v121 = vshra.s32 %v117, 4
    %vm122 = vcmp.ge.s32.totalorder %v118, 1
    %vm123 = vcmp.ge.s32.totalorder %v119, 1
    %vm124 = vcmp.ge.s32.totalorder %v120, 1
    %vm125 = vcmp.ge.s32.totalorder %v121, 1
    %vm126 = vcmp.ge.s32.totalorder %v110, 1
    %vm127 = vcmp.ge.s32.totalorder %v111, 1
    %vm128 = vcmp.ge.s32.totalorder %v112, 1
    %vm129 = vcmp.ge.s32.totalorder %v113, 1
    %vm130 = vmand %vm122, %vm126
    %vm131 = vmand %vm123, %vm127
    %vm132 = vmand %vm124, %vm128
    %vm133 = vmand %vm125, %vm129
    %vm134 = vcmp.lt.s32.totalorder %v110, 15
    %vm135 = vcmp.lt.s32.totalorder %v111, 15
    %vm136 = vcmp.lt.s32.totalorder %v112, 15
    %vm137 = vcmp.lt.s32.totalorder %v113, 15
    %vm138 = vmand %vm122, %vm134
    %vm139 = vmand %vm123, %vm135
    %vm140 = vmand %vm124, %vm136
    %vm141 = vmand %vm125, %vm137
    %vm142 = vcmp.lt.s32.totalorder %v118, 15
    %vm143 = vcmp.lt.s32.totalorder %v119, 15
    %vm144 = vcmp.lt.s32.totalorder %v120, 15
    %vm145 = vcmp.lt.s32.totalorder %v121, 15
    %vm146 = vmand %vm142, %vm126
    %vm147 = vmand %vm143, %vm127
    %vm148 = vmand %vm144, %vm128
    %vm149 = vmand %vm145, %vm129
    %vm150 = vmand %vm142, %vm134
    %vm151 = vmand %vm143, %vm135
    %vm152 = vmand %vm144, %vm136
    %vm153 = vmand %vm145, %vm137
    %154 = vrot.lane.b32.xlu0 %v102, 17
    %v155 = vpop.permute.xlu0 %154
    %157 = vrot.lane.b32.xlu0 %v90, 17
    %v158 = vpop.permute.xlu0 %157
    %159 = vrot.lane.b32.xlu0 %v91, 17
    %v160 = vpop.permute.xlu0 %159
    %161 = vrot.lane.b32.xlu0 %v101, 17
    %v162 = vpop.permute.xlu0 %161
    %vm163 = vcmask 138240
    %v164 = vsel %vm163, %v158, %v160
    %v165 = vsel %vm163, %v160, %v162
    %v166 = vsel %vm163, %v162, %v155
    %v171 = vsel %vm163, %v155, %v158
    %v172 = vsel %vm130, 1, 0
    %v173 = vsel %vm131, 1, 0
    %v174 = vsel %vm132, 1, 0
    %v175 = vsel %vm133, 1, 0
    %vm176 = vcmp.eq.s32.totalorder %v172, 1
    %vm177 = vcmp.eq.s32.totalorder %v173, 1
    %vm178 = vcmp.eq.s32.totalorder %v174, 1
    %vm179 = vcmp.eq.s32.totalorder %v175, 1
    %v180 = vsel %vm176, %v171, 0.0
    %v181 = vsel %vm177, %v164, 0.0
    %v182 = vsel %vm178, %v165, 0.0
    %v183 = vsel %vm179, %v166, 0.0
    %184 = vrot.lane.b32.xlu0 %v102, 16
    %v185 = vpop.permute.xlu0 %184
    %187 = vrot.lane.b32.xlu0 %v90, 16
    %v188 = vpop.permute.xlu0 %187
    %189 = vrot.lane.b32.xlu0 %v91, 16
    %v190 = vpop.permute.xlu0 %189
    %191 = vrot.lane.b32.xlu0 %v101, 16
    %v192 = vpop.permute.xlu0 %191
    %vm193 = vcmask 130048
    %v194 = vsel %vm193, %v188, %v190
    %v195 = vsel %vm193, %v190, %v192
    %v196 = vsel %vm193, %v192, %v185
    %v201 = vsel %vm193, %v185, %v188
    %v202 = vsel %vm122, 1, 0
    %v203 = vsel %vm123, 1, 0
    %v204 = vsel %vm124, 1, 0
    %v205 = vsel %vm125, 1, 0
    %vm206 = vcmp.eq.s32.totalorder %v202, 1
    %vm207 = vcmp.eq.s32.totalorder %v203, 1
    %vm208 = vcmp.eq.s32.totalorder %v204, 1
    %vm209 = vcmp.eq.s32.totalorder %v205, 1
    %v210 = vsel %vm206, %v201, 0.0
    %v211 = vsel %vm207, %v194, 0.0
    %v212 = vsel %vm208, %v195, 0.0
    %v213 = vsel %vm209, %v196, 0.0
    %214 = vrot.lane.b32.xlu0 %v102, 15
    %v215 = vpop.permute.xlu0 %214
    %217 = vrot.lane.b32.xlu0 %v90, 15
    %v218 = vpop.permute.xlu0 %217
    %219 = vrot.lane.b32.xlu0 %v91, 15
    %v220 = vpop.permute.xlu0 %219
    %221 = vrot.lane.b32.xlu0 %v101, 15
    %v222 = vpop.permute.xlu0 %221
    %vm223 = vcmask 121856
    %v224 = vsel %vm223, %v218, %v220
    %v225 = vsel %vm223, %v220, %v222
    %v226 = vsel %vm223, %v222, %v215
    %v231 = vsel %vm223, %v215, %v218
    %v232 = vsel %vm138, 1, 0
    %v233 = vsel %vm139, 1, 0
    %v234 = vsel %vm140, 1, 0
    %v235 = vsel %vm141, 1, 0
    %vm236 = vcmp.eq.s32.totalorder %v232, 1
    %vm237 = vcmp.eq.s32.totalorder %v233, 1
    %vm238 = vcmp.eq.s32.totalorder %v234, 1
    %vm239 = vcmp.eq.s32.totalorder %v235, 1
    %v240 = vsel %vm236, %v231, 0.0
    %v241 = vsel %vm237, %v224, 0.0
    %v242 = vsel %vm238, %v225, 0.0
    %v243 = vsel %vm239, %v226, 0.0
    %244 = vrot.lane.b32.xlu0 %v102, 1
    %v245 = vpop.permute.xlu0 %244
    %247 = vrot.lane.b32.xlu0 %v90, 1
    %v248 = vpop.permute.xlu0 %247
    %249 = vrot.lane.b32.xlu0 %v91, 1
    %v250 = vpop.permute.xlu0 %249
    %251 = vrot.lane.b32.xlu0 %v101, 1
    %v252 = vpop.permute.xlu0 %251
    %vm253 = vcmask 7168
    %v254 = vsel %vm253, %v248, %v250
    %v255 = vsel %vm253, %v250, %v252
    %v256 = vsel %vm253, %v252, %v245
    %v261 = vsel %vm253, %v245, %v248
    %v262 = vsel %vm126, 1, 0
    %v263 = vsel %vm127, 1, 0
    %v264 = vsel %vm128, 1, 0
    %v265 = vsel %vm129, 1, 0
    %vm266 = vcmp.eq.s32.totalorder %v262, 1
    %vm267 = vcmp.eq.s32.totalorder %v263, 1
    %vm268 = vcmp.eq.s32.totalorder %v264, 1
    %vm269 = vcmp.eq.s32.totalorder %v265, 1
    %v270 = vsel %vm266, %v261, 0.0
    %v271 = vsel %vm267, %v254, 0.0
    %v272 = vsel %vm268, %v255, 0.0
    %v273 = vsel %vm269, %v256, 0.0
    %274 = vrot.lane.b32.xlu0 %v90, 127
    %v275 = vpop.permute.xlu0 %274
    %276 = vrot.lane.b32.xlu0 %v91, 127
    %v277 = vpop.permute.xlu0 %276
    %278 = vrot.lane.b32.xlu0 %v101, 127
    %v279 = vpop.permute.xlu0 %278
    %280 = vrot.lane.b32.xlu0 %v102, 127
    %v281 = vpop.permute.xlu0 %280
    %vm282 = vcmask 1039360
    %v283 = vsel %vm282, %v275, %v277
    %v284 = vsel %vm282, %v277, %v279
    %v285 = vsel %vm282, %v279, %v281
    %v291 = vsel %vm282, %v281, %v275
    %v292 = vsel %vm134, 1, 0
    %v293 = vsel %vm135, 1, 0
    %v294 = vsel %vm136, 1, 0
    %v295 = vsel %vm137, 1, 0
    %vm296 = vcmp.eq.s32.totalorder %v292, 1
    %vm297 = vcmp.eq.s32.totalorder %v293, 1
    %vm298 = vcmp.eq.s32.totalorder %v294, 1
    %vm299 = vcmp.eq.s32.totalorder %v295, 1
    %v300 = vsel %vm296, %v283, 0.0
    %v301 = vsel %vm297, %v284, 0.0
    %v302 = vsel %vm298, %v285, 0.0
    %v303 = vsel %vm299, %v291, 0.0
    %304 = vrot.lane.b32.xlu0 %v90, 113
    %v305 = vpop.permute.xlu0 %304
    %306 = vrot.lane.b32.xlu0 %v91, 113
    %v307 = vpop.permute.xlu0 %306
    %308 = vrot.lane.b32.xlu0 %v101, 113
    %v309 = vpop.permute.xlu0 %308
    %310 = vrot.lane.b32.xlu0 %v102, 113
    %v311 = vpop.permute.xlu0 %310
    %vm312 = vcmask 924672
    %v313 = vsel %vm312, %v305, %v307
    %v314 = vsel %vm312, %v307, %v309
    %v315 = vsel %vm312, %v309, %v311
    %v321 = vsel %vm312, %v311, %v305
    %v322 = vsel %vm146, 1, 0
    %v323 = vsel %vm147, 1, 0
    %v324 = vsel %vm148, 1, 0
    %v325 = vsel %vm149, 1, 0
    %vm326 = vcmp.eq.s32.totalorder %v322, 1
    %vm327 = vcmp.eq.s32.totalorder %v323, 1
    %vm328 = vcmp.eq.s32.totalorder %v324, 1
    %vm329 = vcmp.eq.s32.totalorder %v325, 1
    %v330 = vsel %vm326, %v313, 0.0
    %v331 = vsel %vm327, %v314, 0.0
    %v332 = vsel %vm328, %v315, 0.0
    %v333 = vsel %vm329, %v321, 0.0
    %334 = vrot.lane.b32.xlu0 %v90, 112
    %v335 = vpop.permute.xlu0 %334
    %336 = vrot.lane.b32.xlu0 %v91, 112
    %v337 = vpop.permute.xlu0 %336
    %338 = vrot.lane.b32.xlu0 %v101, 112
    %v339 = vpop.permute.xlu0 %338
    %340 = vrot.lane.b32.xlu0 %v102, 112
    %v341 = vpop.permute.xlu0 %340
    %vm342 = vcmask 916480
    %v343 = vsel %vm342, %v335, %v337
    %v344 = vsel %vm342, %v337, %v339
    %v345 = vsel %vm342, %v339, %v341
    %v351 = vsel %vm342, %v341, %v335
    %v352 = vsel %vm142, 1, 0
    %v353 = vsel %vm143, 1, 0
    %v354 = vsel %vm144, 1, 0
    %v355 = vsel %vm145, 1, 0
    %vm356 = vcmp.eq.s32.totalorder %v352, 1
    %vm357 = vcmp.eq.s32.totalorder %v353, 1
    %vm358 = vcmp.eq.s32.totalorder %v354, 1
    %vm359 = vcmp.eq.s32.totalorder %v355, 1
    %v360 = vsel %vm356, %v343, 0.0
    %v361 = vsel %vm357, %v344, 0.0
    %v362 = vsel %vm358, %v345, 0.0
    %v363 = vsel %vm359, %v351, 0.0
    %364 = vrot.lane.b32.xlu0 %v90, 111
    %v365 = vpop.permute.xlu0 %364
    %366 = vrot.lane.b32.xlu0 %v91, 111
    %v367 = vpop.permute.xlu0 %366
    %368 = vrot.lane.b32.xlu0 %v101, 111
    %v369 = vpop.permute.xlu0 %368
    %370 = vrot.lane.b32.xlu0 %v102, 111
    %v371 = vpop.permute.xlu0 %370
    %vm372 = vcmask 908288
    %v373 = vsel %vm372, %v365, %v367
    %v374 = vsel %vm372, %v367, %v369
    %v375 = vsel %vm372, %v369, %v371
    %v381 = vsel %vm372, %v371, %v365
    %v382 = vsel %vm150, 1, 0
    %v383 = vsel %vm151, 1, 0
    %v384 = vsel %vm152, 1, 0
    %v385 = vsel %vm153, 1, 0
    %vm386 = vcmp.eq.s32.totalorder %v382, 1
    %vm387 = vcmp.eq.s32.totalorder %v383, 1
    %vm388 = vcmp.eq.s32.totalorder %v384, 1
    %vm389 = vcmp.eq.s32.totalorder %v385, 1
    %v390 = vsel %vm386, %v373, 0.0
    %v391 = vsel %vm387, %v374, 0.0
    %v392 = vsel %vm388, %v375, 0.0
    %v393 = vsel %vm389, %v381, 0.0
    %v398 = vrot.slane %v210, 6
    %v399 = vrot.slane %v211, 6
    %v400 = vrot.slane %v212, 6
    %v401 = vrot.slane %v213, 6
    %v410 = vrot.slane %v240, 4
    %v411 = vrot.slane %v241, 4
    %v412 = vrot.slane %v242, 4
    %v413 = vrot.slane %v243, 4
    %v422 = vrot.slane %v270, 2
    %v423 = vrot.slane %v271, 2
    %v424 = vrot.slane %v272, 2
    %v425 = vrot.slane %v273, 2
    %v434 = vrot.slane %v300, 6
    %v435 = vrot.slane %v301, 6
    %v436 = vrot.slane %v302, 6
    %v437 = vrot.slane %v303, 6
    %v446 = vrot.slane %v330, 4
    %v447 = vrot.slane %v331, 4
    %v448 = vrot.slane %v332, 4
    %v449 = vrot.slane %v333, 4
    %v458 = vrot.slane %v360, 2
    %v459 = vrot.slane %v361, 2
    %v460 = vrot.slane %v362, 2
    %v461 = vrot.slane %v363, 2
    %vm466 = vcmask 1041408
    %v467 = vsel %vm466, %v180, %v398
    %v468 = vsel %vm466, %v181, %v399
    %v469 = vsel %vm466, %v182, %v400
    %v470 = vsel %vm466, %v183, %v401
    %vm471 = vcmask 1043456
    %v472 = vsel %vm471, %v467, %v410
    %v473 = vsel %vm471, %v468, %v411
    %v474 = vsel %vm471, %v469, %v412
    %v475 = vsel %vm471, %v470, %v413
    %vm476 = vcmask 1045504
    %v477 = vsel %vm476, %v472, %v422
    %v478 = vsel %vm476, %v473, %v423
    %v479 = vsel %vm476, %v474, %v424
    %v480 = vsel %vm476, %v475, %v425
    %v481 = vsel %vm466, %v90, %v434
    %v482 = vsel %vm466, %v91, %v435
    %v483 = vsel %vm466, %v101, %v436
    %v484 = vsel %vm466, %v102, %v437
    %v485 = vsel %vm471, %v481, %v446
    %v486 = vsel %vm471, %v482, %v447
    %v487 = vsel %vm471, %v483, %v448
    %v488 = vsel %vm471, %v484, %v449
    %v489 = vsel %vm476, %v485, %v458
    %v490 = vsel %vm476, %v486, %v459
    %v491 = vsel %vm476, %v487, %v460
    %v492 = vsel %vm476, %v488, %v461
    %v493 = vld [vmem:[#allocation2] sm:$0xff]
    %v494 = vld [vmem:[%s2] sm:$0xff]
    %496 = vset.pattern.permute.xlu0 0
    %497 = vperm.xlu0 %496, %v494
    %v498 = vpop.permute.xlu0 %497
    %vm500 = vcmask 146432
    %v502 = vsel %vm500, %v493, 0
    %v505 = vsel %vm466, %v390, 0
    %v508 = vsel %vm466, %v391, 0
    %v511 = vsel %vm466, %v392, 0
    %v514 = vsel %vm466, %v393, 0
    %516 = vmatprep.subr.mxu0 %v478
    %517 = vmatpush1.msra.mxu0 %v477
    %518 = vmatprep.subr.mxu0 %v490
    %519 = vmatpush1.msra.mxu0 %v489
    %520 = vmatprep.subr.mxu0 %v508
    %521 = vmatpush1.msra.mxu0 %v505
    %522 = vmatprep.subr.mxu0 0.0
    %523 = vmatpush1.msra.mxu0 0.0
    %524 = vmatprep.subr.mxu0 0.0
    %525 = vmatpush1.msra.mxu0 0.0
    %526 = vmatprep.subr.mxu0 0.0
    %527 = vmatpush1.msra.mxu0 0.0
    %528 = vmatprep.subr.mxu0 0.0
    %529 = vmatpush1.msra.mxu0 0.0
    %530 = vmatprep.subr.mxu0 0.0
    %531 = vmatpush1.msra.mxu0 0.0
    %532 = vmatprep.subr.mxu0 0.0
    %533 = vmatpush1.msra.mxu0 0.0
    %534 = vmatprep.subr.mxu0 0.0
    %535 = vmatpush1.msra.mxu0 0.0
    %536 = vmatprep.subr.mxu0 0.0
    %537 = vmatpush1.msra.mxu0 0.0
    %538 = vmatprep.subr.mxu0 0.0
    %539 = vmatpush1.msra.mxu0 0.0
    %540 = vmatprep.subr.mxu0 0.0
    %541 = vmatpush1.msra.mxu0 0.0
    %542 = vmatprep.subr.mxu0 0.0
    %543 = vmatpush1.msra.mxu0 0.0
    %544 = vmatprep.subr.mxu0 0.0
    %545 = vmatpush1.msra.mxu0 0.0
    %546 = vmatprep.subr.mxu0 0.0
    %547 = vmatpush1.msra.mxu0 0.0
    %548 = vmatprep.subr.mxu0 0.0
    %549 = vmatpush1.msra.mxu0 0.0
    %550 = vmatprep.subr.mxu0 0.0
    %551 = vmatpush1.msra.mxu0 0.0
    %552 = vmatprep.subr.mxu0 0.0
    %553 = vmatpush1.msra.mxu0 0.0
    %554 = vmatprep.subr.mxu0 0.0
    %555 = vmatpush1.msra.mxu0 0.0
    %556 = vmatprep.subr.mxu0 0.0
    %557 = vmatpush1.msra.mxu0 0.0
    %558 = vmatprep.subr.mxu0 0.0
    %559 = vmatpush1.msra.mxu0 0.0
    %560 = vmatprep.subr.mxu0 0.0
    %561 = vmatpush1.msra.mxu0 0.0
    %562 = vmatprep.subr.mxu0 0.0
    %563 = vmatpush1.msra.mxu0 0.0
    %564 = vmatprep.subr.mxu0 0.0
    %565 = vmatpush1.msra.mxu0 0.0
    %566 = vmatprep.subr.mxu0 0.0
    %567 = vmatpush1.msra.mxu0 0.0
    %568 = vmatprep.subr.mxu0 0.0
    %569 = vmatpush1.msra.mxu0 0.0
    %570 = vmatprep.subr.mxu0 0.0
    %571 = vmatpush1.msra.mxu0 0.0
    %572 = vmatprep.subr.mxu0 0.0
    %573 = vmatpush1.msra.mxu0 0.0
    %574 = vmatprep.subr.mxu0 0.0
    %575 = vmatpush1.msra.mxu0 0.0
    %576 = vmatprep.subr.mxu0 0.0
    %577 = vmatpush1.msra.mxu0 0.0
    %578 = vmatprep.subr.mxu0 0.0
    %579 = vmatpush1.msra.mxu0 0.0
    %580 = vmatprep.mubr.f32.mxu0 0.0
    %581 = vmatmul.mubr.f32.gmra.mrb[0].mxu0 %v502
    %v582 = vpop.f32.mrb[0].mxu0
    %v583 = vadd.f32 %v498, %v582
    %v584 = vpop.f32.mrb[0].mxu0
    %v585 = vadd.f32 %v498, %v584
    %586 = vdwg.mxu0
    %587 = vmatprep.subr.mxu0 %v480
    %588 = vmatpush1.msra.mxu0 %v479
    %589 = vmatprep.subr.mxu0 %v492
    %590 = vmatpush1.msra.mxu0 %v491
    %591 = vmatprep.subr.mxu0 %v514
    %592 = vmatpush1.msra.mxu0 %v511
    %593 = vmatprep.subr.mxu0 0.0
    %594 = vmatpush1.msra.mxu0 0.0
    %595 = vmatprep.subr.mxu0 0.0
    %596 = vmatpush1.msra.mxu0 0.0
    %597 = vmatprep.subr.mxu0 0.0
    %598 = vmatpush1.msra.mxu0 0.0
    %599 = vmatprep.subr.mxu0 0.0
    %600 = vmatpush1.msra.mxu0 0.0
    %601 = vmatprep.subr.mxu0 0.0
    %602 = vmatpush1.msra.mxu0 0.0
    %603 = vmatprep.subr.mxu0 0.0
    %604 = vmatpush1.msra.mxu0 0.0
    %605 = vmatprep.subr.mxu0 0.0
    %606 = vmatpush1.msra.mxu0 0.0
    %607 = vmatprep.subr.mxu0 0.0
    %608 = vmatpush1.msra.mxu0 0.0
    %609 = vmatprep.subr.mxu0 0.0
    %610 = vmatpush1.msra.mxu0 0.0
    %611 = vmatprep.subr.mxu0 0.0
    %612 = vmatpush1.msra.mxu0 0.0
    %613 = vmatprep.subr.mxu0 0.0
    %614 = vmatpush1.msra.mxu0 0.0
    %615 = vmatprep.subr.mxu0 0.0
    %616 = vmatpush1.msra.mxu0 0.0
    %617 = vmatprep.subr.mxu0 0.0
    %618 = vmatpush1.msra.mxu0 0.0
    %619 = vmatprep.subr.mxu0 0.0
    %620 = vmatpush1.msra.mxu0 0.0
    %621 = vmatprep.subr.mxu0 0.0
    %622 = vmatpush1.msra.mxu0 0.0
    %623 = vmatprep.subr.mxu0 0.0
    %624 = vmatpush1.msra.mxu0 0.0
    %625 = vmatprep.subr.mxu0 0.0
    %626 = vmatpush1.msra.mxu0 0.0
    %627 = vmatprep.subr.mxu0 0.0
    %628 = vmatpush1.msra.mxu0 0.0
    %629 = vmatprep.subr.mxu0 0.0
    %630 = vmatpush1.msra.mxu0 0.0
    %631 = vmatprep.subr.mxu0 0.0
    %632 = vmatpush1.msra.mxu0 0.0
    %633 = vmatprep.subr.mxu0 0.0
    %634 = vmatpush1.msra.mxu0 0.0
    %635 = vmatprep.subr.mxu0 0.0
    %636 = vmatpush1.msra.mxu0 0.0
    %637 = vmatprep.subr.mxu0 0.0
    %638 = vmatpush1.msra.mxu0 0.0
    %639 = vmatprep.subr.mxu0 0.0
    %640 = vmatpush1.msra.mxu0 0.0
    %641 = vmatprep.subr.mxu0 0.0
    %642 = vmatpush1.msra.mxu0 0.0
    %643 = vmatprep.subr.mxu0 0.0
    %644 = vmatpush1.msra.mxu0 0.0
    %645 = vmatprep.subr.mxu0 0.0
    %646 = vmatpush1.msra.mxu0 0.0
    %647 = vmatprep.subr.mxu0 0.0
    %648 = vmatpush1.msra.mxu0 0.0
    %649 = vmatprep.subr.mxu0 0.0
    %650 = vmatpush1.msra.mxu0 0.0
    %651 = vmatprep.mubr.f32.mxu0 0.0
    %652 = vmatmul.mubr.f32.gmra.mrb[0].mxu0 %v502
    %v653 = vpop.f32.mrb[0].mxu0
    %v654 = vadd.f32 %v498, %v653
    %v655 = vpop.f32.mrb[0].mxu0
    %v656 = vadd.f32 %v498, %v655
    %657 = vdwg.mxu0
    %v658 = vmax.f32 %v583, 0.0
    %v659 = vmax.f32 %v585, 0.0
    %v660 = vmax.f32 %v654, 0.0
    %v661 = vmax.f32 %v656, 0.0
    %663 = vrot.lane.b32.xlu0 %v661, 17
    %v664 = vpop.permute.xlu0 %663
    %669 = vrot.lane.b32.xlu0 %v658, 17
    %v670 = vpop.permute.xlu0 %669
    %671 = vrot.lane.b32.xlu0 %v659, 17
    %v672 = vpop.permute.xlu0 %671
    %673 = vrot.lane.b32.xlu0 %v660, 17
    %v674 = vpop.permute.xlu0 %673
    %v675 = vsel %vm163, %v670, %v672
    %v676 = vsel %vm163, %v672, %v674
    %v677 = vsel %vm163, %v674, %v664
    %v682 = vsel %vm163, %v664, %v670
    %v683 = vsel %vm176, %v682, 0.0
    %v684 = vsel %vm177, %v675, 0.0
    %v685 = vsel %vm178, %v676, 0.0
    %v686 = vsel %vm179, %v677, 0.0
    %687 = vrot.lane.b32.xlu0 %v661, 16
    %v688 = vpop.permute.xlu0 %687
    %690 = vrot.lane.b32.xlu0 %v658, 16
    %v691 = vpop.permute.xlu0 %690
    %692 = vrot.lane.b32.xlu0 %v659, 16
    %v693 = vpop.permute.xlu0 %692
    %694 = vrot.lane.b32.xlu0 %v660, 16
    %v695 = vpop.permute.xlu0 %694
    %v696 = vsel %vm193, %v691, %v693
    %v697 = vsel %vm193, %v693, %v695
    %v698 = vsel %vm193, %v695, %v688
    %v703 = vsel %vm193, %v688, %v691
    %v704 = vsel %vm206, %v703, 0.0
    %v705 = vsel %vm207, %v696, 0.0
    %v706 = vsel %vm208, %v697, 0.0
    %v707 = vsel %vm209, %v698, 0.0
    %708 = vrot.lane.b32.xlu0 %v661, 15
    %v709 = vpop.permute.xlu0 %708
    %711 = vrot.lane.b32.xlu0 %v658, 15
    %v712 = vpop.permute.xlu0 %711
    %713 = vrot.lane.b32.xlu0 %v659, 15
    %v714 = vpop.permute.xlu0 %713
    %715 = vrot.lane.b32.xlu0 %v660, 15
    %v716 = vpop.permute.xlu0 %715
    %v717 = vsel %vm223, %v712, %v714
    %v718 = vsel %vm223, %v714, %v716
    %v719 = vsel %vm223, %v716, %v709
    %v724 = vsel %vm223, %v709, %v712
    %v725 = vsel %vm236, %v724, 0.0
    %v726 = vsel %vm237, %v717, 0.0
    %v727 = vsel %vm238, %v718, 0.0
    %v728 = vsel %vm239, %v719, 0.0
    %729 = vrot.lane.b32.xlu0 %v661, 1
    %v730 = vpop.permute.xlu0 %729
    %732 = vrot.lane.b32.xlu0 %v658, 1
    %v733 = vpop.permute.xlu0 %732
    %734 = vrot.lane.b32.xlu0 %v659, 1
    %v735 = vpop.permute.xlu0 %734
    %736 = vrot.lane.b32.xlu0 %v660, 1
    %v737 = vpop.permute.xlu0 %736
    %v738 = vsel %vm253, %v733, %v735
    %v739 = vsel %vm253, %v735, %v737
    %v740 = vsel %vm253, %v737, %v730
    %v745 = vsel %vm253, %v730, %v733
    %v746 = vsel %vm266, %v745, 0.0
    %v747 = vsel %vm267, %v738, 0.0
    %v748 = vsel %vm268, %v739, 0.0
    %v749 = vsel %vm269, %v740, 0.0
    %750 = vrot.lane.b32.xlu0 %v658, 127
    %v751 = vpop.permute.xlu0 %750
    %752 = vrot.lane.b32.xlu0 %v659, 127
    %v753 = vpop.permute.xlu0 %752
    %754 = vrot.lane.b32.xlu0 %v660, 127
    %v755 = vpop.permute.xlu0 %754
    %756 = vrot.lane.b32.xlu0 %v661, 127
    %v757 = vpop.permute.xlu0 %756
    %v758 = vsel %vm282, %v751, %v753
    %v759 = vsel %vm282, %v753, %v755
    %v760 = vsel %vm282, %v755, %v757
    %v766 = vsel %vm282, %v757, %v751
    %v767 = vsel %vm296, %v758, 0.0
    %v768 = vsel %vm297, %v759, 0.0
    %v769 = vsel %vm298, %v760, 0.0
    %v770 = vsel %vm299, %v766, 0.0
    %771 = vrot.lane.b32.xlu0 %v658, 113
    %v772 = vpop.permute.xlu0 %771
    %773 = vrot.lane.b32.xlu0 %v659, 113
    %v774 = vpop.permute.xlu0 %773
    %775 = vrot.lane.b32.xlu0 %v660, 113
    %v776 = vpop.permute.xlu0 %775
    %777 = vrot.lane.b32.xlu0 %v661, 113
    %v778 = vpop.permute.xlu0 %777
    %v779 = vsel %vm312, %v772, %v774
    %v780 = vsel %vm312, %v774, %v776
    %v781 = vsel %vm312, %v776, %v778
    %v787 = vsel %vm312, %v778, %v772
    %v788 = vsel %vm326, %v779, 0.0
    %v789 = vsel %vm327, %v780, 0.0
    %v790 = vsel %vm328, %v781, 0.0
    %v791 = vsel %vm329, %v787, 0.0
    %792 = vrot.lane.b32.xlu0 %v658, 112
    %v793 = vpop.permute.xlu0 %792
    %794 = vrot.lane.b32.xlu0 %v659, 112
    %v795 = vpop.permute.xlu0 %794
    %796 = vrot.lane.b32.xlu0 %v660, 112
    %v797 = vpop.permute.xlu0 %796
    %798 = vrot.lane.b32.xlu0 %v661, 112
    %v799 = vpop.permute.xlu0 %798
    %v800 = vsel %vm342, %v793, %v795
    %v801 = vsel %vm342, %v795, %v797
    %v802 = vsel %vm342, %v797, %v799
    %v808 = vsel %vm342, %v799, %v793
    %v809 = vsel %vm356, %v800, 0.0
    %v810 = vsel %vm357, %v801, 0.0
    %v811 = vsel %vm358, %v802, 0.0
    %v812 = vsel %vm359, %v808, 0.0
    %813 = vrot.lane.b32.xlu0 %v658, 111
    %v814 = vpop.permute.xlu0 %813
    %815 = vrot.lane.b32.xlu0 %v659, 111
    %v816 = vpop.permute.xlu0 %815
    %817 = vrot.lane.b32.xlu0 %v660, 111
    %v818 = vpop.permute.xlu0 %817
    %819 = vrot.lane.b32.xlu0 %v661, 111
    %v820 = vpop.permute.xlu0 %819
    %v821 = vsel %vm372, %v814, %v816
    %v822 = vsel %vm372, %v816, %v818
    %v823 = vsel %vm372, %v818, %v820
    %v829 = vsel %vm372, %v820, %v814
    %v830 = vsel %vm386, %v821, 0.0
    %v831 = vsel %vm387, %v822, 0.0
    %v832 = vsel %vm388, %v823, 0.0
    %v833 = vsel %vm389, %v829, 0.0
    %v834 = vld [vmem:[#allocation5] sm:$0xff]
    %v835 = vld [vmem:[#allocation5 + $0x8] sm:$0xff]
    %v836 = vld [vmem:[%s4] sm:$0xff]
    %v837 = vld [vmem:[%s4 + $0x8] sm:$0xff]
    %839 = vset.pattern.permute.xlu0 0
    %840 = vperm.xlu0 %839, %v836
    %v841 = vpop.permute.xlu0 %840
    %844 = vset.pattern.permute.xlu0 0
    %845 = vperm.xlu0 %844, %v837
    %v846 = vpop.permute.xlu0 %845
    %vm848 = vcmask 588800
    %v850 = vsel %vm848, %v834, 0
    %v853 = vsel %vm848, %v835, 0
    %855 = vmatprep.subr.mxu0 %v684
    %856 = vmatpush1.msra.mxu0 %v683
    %857 = vmatprep.subr.mxu0 %v705
    %858 = vmatpush1.msra.mxu0 %v704
    %859 = vmatprep.subr.mxu0 %v726
    %860 = vmatpush1.msra.mxu0 %v725
    %861 = vmatprep.subr.mxu0 %v747
    %862 = vmatpush1.msra.mxu0 %v746
    %863 = vmatprep.subr.mxu0 %v659
    %864 = vmatpush1.msra.mxu0 %v658
    %865 = vmatprep.subr.mxu0 %v768
    %866 = vmatpush1.msra.mxu0 %v767
    %867 = vmatprep.subr.mxu0 %v789
    %868 = vmatpush1.msra.mxu0 %v788
    %869 = vmatprep.subr.mxu0 %v810
    %870 = vmatpush1.msra.mxu0 %v809
    %871 = vmatprep.subr.mxu0 %v831
    %872 = vmatpush1.msra.mxu0 %v830
    %873 = vmatprep.subr.mxu0 0.0
    %874 = vmatpush1.msra.mxu0 0.0
    %875 = vmatprep.subr.mxu0 0.0
    %876 = vmatpush1.msra.mxu0 0.0
    %877 = vmatprep.subr.mxu0 0.0
    %878 = vmatpush1.msra.mxu0 0.0
    %879 = vmatprep.subr.mxu0 0.0
    %880 = vmatpush1.msra.mxu0 0.0
    %881 = vmatprep.subr.mxu0 0.0
    %882 = vmatpush1.msra.mxu0 0.0
    %883 = vmatprep.subr.mxu0 0.0
    %884 = vmatpush1.msra.mxu0 0.0
    %885 = vmatprep.subr.mxu0 0.0
    %886 = vmatpush1.msra.mxu0 0.0
    %887 = vmatprep.subr.mxu0 0.0
    %888 = vmatpush1.msra.mxu0 0.0
    %889 = vmatprep.subr.mxu0 0.0
    %890 = vmatpush1.msra.mxu0 0.0
    %891 = vmatprep.subr.mxu0 0.0
    %892 = vmatpush1.msra.mxu0 0.0
    %893 = vmatprep.subr.mxu0 0.0
    %894 = vmatpush1.msra.mxu0 0.0
    %895 = vmatprep.subr.mxu0 0.0
    %896 = vmatpush1.msra.mxu0 0.0
    %897 = vmatprep.subr.mxu0 0.0
    %898 = vmatpush1.msra.mxu0 0.0
    %899 = vmatprep.subr.mxu0 0.0
    %900 = vmatpush1.msra.mxu0 0.0
    %901 = vmatprep.subr.mxu0 0.0
    %902 = vmatpush1.msra.mxu0 0.0
    %903 = vmatprep.subr.mxu0 0.0
    %904 = vmatpush1.msra.mxu0 0.0
    %905 = vmatprep.subr.mxu0 0.0
    %906 = vmatpush1.msra.mxu0 0.0
    %907 = vmatprep.subr.mxu0 0.0
    %908 = vmatpush1.msra.mxu0 0.0
    %909 = vmatprep.subr.mxu0 0.0
    %910 = vmatpush1.msra.mxu0 0.0
    %911 = vmatprep.subr.mxu0 0.0
    %912 = vmatpush1.msra.mxu0 0.0
    %913 = vmatprep.subr.mxu0 0.0
    %914 = vmatpush1.msra.mxu0 0.0
    %915 = vmatprep.subr.mxu0 0.0
    %916 = vmatpush1.msra.mxu0 0.0
    %917 = vmatprep.subr.mxu0 0.0
    %918 = vmatpush1.msra.mxu0 0.0
    %919 = vmatprep.mubr.f32.mxu0 0.0
    %920 = vmatmul.mubr.f32.gmra.mrb[0].mxu0 %v850
    %v921 = vpop.f32.mrb[0].mxu0
    %v922 = vadd.f32 %v841, %v921
    %v923 = vpop.f32.mrb[0].mxu0
    %v924 = vadd.f32 %v841, %v923
    %925 = vmatprep.mubr.f32.mxu0 0.0
    %926 = vmatmul.mubr.f32.gmra.mrb[0].mxu0 %v853
    %v927 = vpop.f32.mrb[0].mxu0
    %v928 = vadd.f32 %v846, %v927
    %v929 = vpop.f32.mrb[0].mxu0
    %v930 = vadd.f32 %v846, %v929
    %931 = vdwg.mxu0
    %932 = vmatprep.subr.mxu0 %v686
    %933 = vmatpush1.msra.mxu0 %v685
    %934 = vmatprep.subr.mxu0 %v707
    %935 = vmatpush1.msra.mxu0 %v706
    %936 = vmatprep.subr.mxu0 %v728
    %937 = vmatpush1.msra.mxu0 %v727
    %938 = vmatprep.subr.mxu0 %v749
    %939 = vmatpush1.msra.mxu0 %v748
    %940 = vmatprep.subr.mxu0 %v661
    %941 = vmatpush1.msra.mxu0 %v660
    %942 = vmatprep.subr.mxu0 %v770
    %943 = vmatpush1.msra.mxu0 %v769
    %944 = vmatprep.subr.mxu0 %v791
    %945 = vmatpush1.msra.mxu0 %v790
    %946 = vmatprep.subr.mxu0 %v812
    %947 = vmatpush1.msra.mxu0 %v811
    %948 = vmatprep.subr.mxu0 %v833
    %949 = vmatpush1.msra.mxu0 %v832
    %950 = vmatprep.subr.mxu0 0.0
    %951 = vmatpush1.msra.mxu0 0.0
    %952 = vmatprep.subr.mxu0 0.0
    %953 = vmatpush1.msra.mxu0 0.0
    %954 = vmatprep.subr.mxu0 0.0
    %955 = vmatpush1.msra.mxu0 0.0
    %956 = vmatprep.subr.mxu0 0.0
    %957 = vmatpush1.msra.mxu0 0.0
    %958 = vmatprep.subr.mxu0 0.0
    %959 = vmatpush1.msra.mxu0 0.0
    %960 = vmatprep.subr.mxu0 0.0
    %961 = vmatpush1.msra.mxu0 0.0
    %962 = vmatprep.subr.mxu0 0.0
    %963 = vmatpush1.msra.mxu0 0.0
    %964 = vmatprep.subr.mxu0 0.0
    %965 = vmatpush1.msra.mxu0 0.0
    %966 = vmatprep.subr.mxu0 0.0
    %967 = vmatpush1.msra.mxu0 0.0
    %968 = vmatprep.subr.mxu0 0.0
    %969 = vmatpush1.msra.mxu0 0.0
    %970 = vmatprep.subr.mxu0 0.0
    %971 = vmatpush1.msra.mxu0 0.0
    %972 = vmatprep.subr.mxu0 0.0
    %973 = vmatpush1.msra.mxu0 0.0
    %974 = vmatprep.subr.mxu0 0.0
    %975 = vmatpush1.msra.mxu0 0.0
    %976 = vmatprep.subr.mxu0 0.0
    %977 = vmatpush1.msra.mxu0 0.0
    %978 = vmatprep.subr.mxu0 0.0
    %979 = vmatpush1.msra.mxu0 0.0
    %980 = vmatprep.subr.mxu0 0.0
    %981 = vmatpush1.msra.mxu0 0.0
    %982 = vmatprep.subr.mxu0 0.0
    %983 = vmatpush1.msra.mxu0 0.0
    %984 = vmatprep.subr.mxu0 0.0
    %985 = vmatpush1.msra.mxu0 0.0
    %986 = vmatprep.subr.mxu0 0.0
    %987 = vmatpush1.msra.mxu0 0.0
    %988 = vmatprep.subr.mxu0 0.0
    %989 = vmatpush1.msra.mxu0 0.0
    %990 = vmatprep.subr.mxu0 0.0
    %991 = vmatpush1.msra.mxu0 0.0
    %992 = vmatprep.subr.mxu0 0.0
    %993 = vmatpush1.msra.mxu0 0.0
    %994 = vmatprep.subr.mxu0 0.0
    %995 = vmatpush1.msra.mxu0 0.0
    %996 = vmatprep.mubr.f32.mxu0 0.0
    %997 = vmatmul.mubr.f32.gmra.mrb[0].mxu0 %v850
    %v998 = vpop.f32.mrb[0].mxu0
    %v999 = vadd.f32 %v841, %v998
    %v1000 = vpop.f32.mrb[0].mxu0
    %v1001 = vadd.f32 %v841, %v1000
    %1002 = vmatprep.mubr.f32.mxu0 0.0
    %1003 = vmatmul.mubr.f32.gmra.mrb[0].mxu0 %v853
    %v1004 = vpop.f32.mrb[0].mxu0
    %v1005 = vadd.f32 %v846, %v1004
    %v1006 = vpop.f32.mrb[0].mxu0
    %v1007 = vadd.f32 %v846, %v1006
    %1008 = vdwg.mxu0
    %v1009 = vmax.f32 %v922, 0.0
    %v1010 = vmax.f32 %v924, 0.0
    %v1011 = vmax.f32 %v999, 0.0
    %v1012 = vmax.f32 %v1001, 0.0
    %v1013 = vmax.f32 %v928, 0.0
    %v1014 = vmax.f32 %v930, 0.0
    %v1015 = vmax.f32 %v1005, 0.0
    %v1016 = vmax.f32 %v1007, 0.0
    %v1019 = vrot.slane %v1009, 1
    %v1020 = vrot.slane %v1010, 1
    %v1023 = vrot.slane %v1009, 2
    %v1024 = vrot.slane %v1010, 2
    %v1027 = vrot.slane %v1009, 3
    %v1028 = vrot.slane %v1010, 3
    %v1031 = vrot.slane %v1009, 4
    %v1032 = vrot.slane %v1010, 4
    %v1035 = vrot.slane %v1009, 5
    %v1036 = vrot.slane %v1010, 5
    %v1039 = vrot.slane %v1009, 6
    %v1040 = vrot.slane %v1010, 6
    %v1043 = vrot.slane %v1009, 7
    %v1044 = vrot.slane %v1010, 7
    %v1049 = vrot.slane %v1013, 1
    %v1050 = vrot.slane %v1014, 1
    %v1053 = vrot.slane %v1013, 2
    %v1054 = vrot.slane %v1014, 2
    %v1057 = vrot.slane %v1013, 3
    %v1058 = vrot.slane %v1014, 3
    %v1061 = vrot.slane %v1013, 4
    %v1062 = vrot.slane %v1014, 4
    %v1065 = vrot.slane %v1013, 5
    %v1066 = vrot.slane %v1014, 5
    %v1069 = vrot.slane %v1013, 6
    %v1070 = vrot.slane %v1014, 6
    %v1073 = vrot.slane %v1013, 7
    %v1074 = vrot.slane %v1014, 7
    %v1079 = vrot.slane %v1011, 1
    %v1080 = vrot.slane %v1012, 1
    %v1081 = vrot.slane %v1011, 2
    %v1082 = vrot.slane %v1012, 2
    %v1083 = vrot.slane %v1011, 3
    %v1084 = vrot.slane %v1012, 3
    %v1085 = vrot.slane %v1011, 4
    %v1086 = vrot.slane %v1012, 4
    %v1087 = vrot.slane %v1011, 5
    %v1088 = vrot.slane %v1012, 5
    %v1089 = vrot.slane %v1011, 6
    %v1090 = vrot.slane %v1012, 6
    %v1091 = vrot.slane %v1011, 7
    %v1092 = vrot.slane %v1012, 7
    %v1095 = vrot.slane %v1015, 1
    %v1096 = vrot.slane %v1016, 1
    %v1097 = vrot.slane %v1015, 2
    %v1098 = vrot.slane %v1016, 2
    %v1099 = vrot.slane %v1015, 3
    %v1100 = vrot.slane %v1016, 3
    %v1101 = vrot.slane %v1015, 4
    %v1102 = vrot.slane %v1016, 4
    %v1103 = vrot.slane %v1015, 5
    %v1104 = vrot.slane %v1016, 5
    %v1105 = vrot.slane %v1015, 6
    %v1106 = vrot.slane %v1016, 6
    %v1107 = vrot.slane %v1015, 7
    %v1108 = vrot.slane %v1016, 7
    %v1109 = vrot.slane %v1079, 7
    %v1110 = vrot.slane %v1080, 7
    %v1111 = vrot.slane %v1081, 7
    %v1112 = vrot.slane %v1082, 7
    %v1113 = vrot.slane %v1083, 7
    %v1114 = vrot.slane %v1084, 7
    %v1115 = vrot.slane %v1085, 7
    %v1116 = vrot.slane %v1086, 7
    %v1117 = vrot.slane %v1087, 7
    %v1118 = vrot.slane %v1088, 7
    %v1119 = vrot.slane %v1089, 7
    %v1120 = vrot.slane %v1090, 7
    %v1121 = vrot.slane %v1091, 7
    %v1122 = vrot.slane %v1092, 7
    %v1123 = vrot.slane %v1095, 7
    %v1124 = vrot.slane %v1096, 7
    %v1125 = vrot.slane %v1097, 7
    %v1126 = vrot.slane %v1098, 7
    %v1127 = vrot.slane %v1099, 7
    %v1128 = vrot.slane %v1100, 7
    %v1129 = vrot.slane %v1101, 7
    %v1130 = vrot.slane %v1102, 7
    %v1131 = vrot.slane %v1103, 7
    %v1132 = vrot.slane %v1104, 7
    %v1133 = vrot.slane %v1105, 7
    %v1134 = vrot.slane %v1106, 7
    %v1135 = vrot.slane %v1107, 7
    %v1136 = vrot.slane %v1108, 7
    %vm1169 = vcmask 1040384
    %v1170 = vsel %vm1169, %v1009, %v1091
    %v1171 = vsel %vm1169, %v1010, %v1092
    %v1172 = vsel %vm1169, %v1019, %v1109
    %v1173 = vsel %vm1169, %v1020, %v1110
    %v1174 = vsel %vm1169, %v1023, %v1111
    %v1175 = vsel %vm1169, %v1024, %v1112
    %v1176 = vsel %vm1169, %v1027, %v1113
    %v1177 = vsel %vm1169, %v1028, %v1114
    %v1178 = vsel %vm1169, %v1031, %v1115
    %v1179 = vsel %vm1169, %v1032, %v1116
    %v1180 = vsel %vm1169, %v1035, %v1117
    %v1181 = vsel %vm1169, %v1036, %v1118
    %v1182 = vsel %vm1169, %v1039, %v1119
    %v1183 = vsel %vm1169, %v1040, %v1120
    %v1184 = vsel %vm1169, %v1043, %v1121
    %v1185 = vsel %vm1169, %v1044, %v1122
    %v1186 = vsel %vm1169, %v1013, %v1107
    %v1187 = vsel %vm1169, %v1014, %v1108
    %v1188 = vsel %vm1169, %v1049, %v1123
    %v1189 = vsel %vm1169, %v1050, %v1124
    %v1190 = vsel %vm1169, %v1053, %v1125
    %v1191 = vsel %vm1169, %v1054, %v1126
    %v1192 = vsel %vm1169, %v1057, %v1127
    %v1193 = vsel %vm1169, %v1058, %v1128
    %v1194 = vsel %vm1169, %v1061, %v1129
    %v1195 = vsel %vm1169, %v1062, %v1130
    %v1196 = vsel %vm1169, %v1065, %v1131
    %v1197 = vsel %vm1169, %v1066, %v1132
    %v1198 = vsel %vm1169, %v1069, %v1133
    %v1199 = vsel %vm1169, %v1070, %v1134
    %v1200 = vsel %vm1169, %v1073, %v1135
    %v1201 = vsel %vm1169, %v1074, %v1136
    %v1202 = vld [vmem:[#allocation7] sm:$0xff]
    %v1203 = vld [vmem:[#allocation7 + $0x8] sm:$0xff]
    %v1204 = vld [vmem:[#allocation7 + $0x10] sm:$0xff]
    %v1205 = vld [vmem:[#allocation7 + $0x18] sm:$0xff]
    %v1206 = vld [vmem:[#allocation7 + $0x20] sm:$0xff]
    %v1207 = vld [vmem:[#allocation7 + $0x28] sm:$0xff]
    %v1208 = vld [vmem:[#allocation7 + $0x30] sm:$0xff]
    %v1209 = vld [vmem:[#allocation7 + $0x38] sm:$0xff]
    %v1210 = vld [vmem:[#allocation7 + $0x40] sm:$0xff]
    %v1211 = vld [vmem:[#allocation7 + $0x48] sm:$0xff]
    %v1212 = vld [vmem:[#allocation7 + $0x50] sm:$0xff]
    %v1213 = vld [vmem:[#allocation7 + $0x58] sm:$0xff]
    %v1214 = vld [vmem:[#allocation7 + $0x60] sm:$0xff]
    %v1215 = vld [vmem:[#allocation7 + $0x68] sm:$0xff]
    %v1216 = vld [vmem:[#allocation7 + $0x70] sm:$0xff]
    %v1217 = vld [vmem:[#allocation7 + $0x78] sm:$0xff]
    %v1218 = vld [vmem:[#allocation7 + $0x80] sm:$0xff]
    %v1219 = vld [vmem:[#allocation7 + $0x88] sm:$0xff]
    %v1220 = vld [vmem:[#allocation7 + $0x90] sm:$0xff]
    %v1221 = vld [vmem:[#allocation7 + $0x98] sm:$0xff]
    %v1222 = vld [vmem:[#allocation7 + $0xa0] sm:$0xff]
    %v1223 = vld [vmem:[#allocation7 + $0xa8] sm:$0xff]
    %v1224 = vld [vmem:[#allocation7 + $0xb0] sm:$0xff]
    %v1225 = vld [vmem:[#allocation7 + $0xb8] sm:$0xff]
    %v1226 = vld [vmem:[#allocation7 + $0xc0] sm:$0xff]
    %v1227 = vld [vmem:[#allocation7 + $0xc8] sm:$0xff]
    %v1228 = vld [vmem:[#allocation7 + $0xd0] sm:$0xff]
    %v1229 = vld [vmem:[#allocation7 + $0xd8] sm:$0xff]
    %v1230 = vld [vmem:[#allocation7 + $0xe0] sm:$0xff]
    %v1231 = vld [vmem:[#allocation7 + $0xe8] sm:$0xff]
    %v1232 = vld [vmem:[#allocation7 + $0xf0] sm:$0xff]
    %v1233 = vld [vmem:[#allocation7 + $0xf8] sm:$0xff]
    %v1234 = vld [vmem:[#allocation7 + $0x100] sm:$0xff]
    %v1235 = vld [vmem:[#allocation7 + $0x108] sm:$0xff]
    %v1236 = vld [vmem:[#allocation7 + $0x110] sm:$0xff]
    %v1237 = vld [vmem:[#allocation7 + $0x118] sm:$0xff]
    %v1238 = vld [vmem:[#allocation7 + $0x120] sm:$0xff]
    %v1239 = vld [vmem:[#allocation7 + $0x128] sm:$0xff]
    %v1240 = vld [vmem:[#allocation7 + $0x130] sm:$0xff]
    %v1241 = vld [vmem:[#allocation7 + $0x138] sm:$0xff]
    %v1242 = vld [vmem:[#allocation7 + $0x140] sm:$0xff]
    %v1243 = vld [vmem:[#allocation7 + $0x148] sm:$0xff]
    %v1244 = vld [vmem:[#allocation7 + $0x150] sm:$0xff]
    %v1245 = vld [vmem:[#allocation7 + $0x158] sm:$0xff]
    %v1246 = vld [vmem:[#allocation7 + $0x160] sm:$0xff]
    %v1247 = vld [vmem:[#allocation7 + $0x168] sm:$0xff]
    %v1248 = vld [vmem:[#allocation7 + $0x170] sm:$0xff]
    %v1249 = vld [vmem:[#allocation7 + $0x178] sm:$0xff]
    %v1250 = vld [vmem:[#allocation7 + $0x180] sm:$0xff]
    %v1251 = vld [vmem:[#allocation7 + $0x188] sm:$0xff]
    %v1252 = vld [vmem:[#allocation7 + $0x190] sm:$0xff]
    %v1253 = vld [vmem:[#allocation7 + $0x198] sm:$0xff]
    %v1254 = vld [vmem:[#allocation7 + $0x1a0] sm:$0xff]
    %v1255 = vld [vmem:[#allocation7 + $0x1a8] sm:$0xff]
    %v1256 = vld [vmem:[#allocation7 + $0x1b0] sm:$0xff]
    %v1257 = vld [vmem:[#allocation7 + $0x1b8] sm:$0xff]
    %v1258 = vld [vmem:[#allocation7 + $0x1c0] sm:$0xff]
    %v1259 = vld [vmem:[#allocation7 + $0x1c8] sm:$0xff]
    %v1260 = vld [vmem:[#allocation7 + $0x1d0] sm:$0xff]
    %v1261 = vld [vmem:[#allocation7 + $0x1d8] sm:$0xff]
    %v1262 = vld [vmem:[#allocation7 + $0x1e0] sm:$0xff]
    %v1263 = vld [vmem:[#allocation7 + $0x1e8] sm:$0xff]
    %v1264 = vld [vmem:[#allocation7 + $0x1f0] sm:$0xff]
    %v1265 = vld [vmem:[#allocation7 + $0x1f8] sm:$0xff]
    %v1266 = vld [vmem:[#allocation7 + $0x200] sm:$0xff]
    %v1267 = vld [vmem:[#allocation7 + $0x208] sm:$0xff]
    %v1268 = vld [vmem:[#allocation7 + $0x210] sm:$0xff]
    %v1269 = vld [vmem:[#allocation7 + $0x218] sm:$0xff]
    %v1270 = vld [vmem:[#allocation7 + $0x220] sm:$0xff]
    %v1271 = vld [vmem:[#allocation7 + $0x228] sm:$0xff]
    %v1272 = vld [vmem:[#allocation7 + $0x230] sm:$0xff]
    %v1273 = vld [vmem:[#allocation7 + $0x238] sm:$0xff]
    %v1274 = vld [vmem:[#allocation7 + $0x240] sm:$0xff]
    %v1275 = vld [vmem:[#allocation7 + $0x248] sm:$0xff]
    %v1276 = vld [vmem:[#allocation7 + $0x250] sm:$0xff]
    %v1277 = vld [vmem:[#allocation7 + $0x258] sm:$0xff]
    %v1278 = vld [vmem:[#allocation7 + $0x260] sm:$0xff]
    %v1279 = vld [vmem:[#allocation7 + $0x268] sm:$0xff]
    %v1280 = vld [vmem:[#allocation7 + $0x270] sm:$0xff]
    %v1281 = vld [vmem:[#allocation7 + $0x278] sm:$0xff]
    %v1282 = vld [vmem:[#allocation7 + $0x280] sm:$0xff]
    %v1283 = vld [vmem:[#allocation7 + $0x288] sm:$0xff]
    %v1284 = vld [vmem:[#allocation7 + $0x290] sm:$0xff]
    %v1285 = vld [vmem:[#allocation7 + $0x298] sm:$0xff]
    %v1286 = vld [vmem:[#allocation7 + $0x2a0] sm:$0xff]
    %v1287 = vld [vmem:[#allocation7 + $0x2a8] sm:$0xff]
    %v1288 = vld [vmem:[#allocation7 + $0x2b0] sm:$0xff]
    %v1289 = vld [vmem:[#allocation7 + $0x2b8] sm:$0xff]
    %v1290 = vld [vmem:[#allocation7 + $0x2c0] sm:$0xff]
    %v1291 = vld [vmem:[#allocation7 + $0x2c8] sm:$0xff]
    %v1292 = vld [vmem:[#allocation7 + $0x2d0] sm:$0xff]
    %v1293 = vld [vmem:[#allocation7 + $0x2d8] sm:$0xff]
    %v1294 = vld [vmem:[#allocation7 + $0x2e0] sm:$0xff]
    %v1295 = vld [vmem:[#allocation7 + $0x2e8] sm:$0xff]
    %v1296 = vld [vmem:[#allocation7 + $0x2f0] sm:$0xff]
    %v1297 = vld [vmem:[#allocation7 + $0x2f8] sm:$0xff]
    %v1298 = vld [vmem:[#allocation7 + $0x300] sm:$0xff]
    %v1299 = vld [vmem:[#allocation7 + $0x308] sm:$0xff]
    %v1300 = vld [vmem:[#allocation7 + $0x310] sm:$0xff]
    %v1301 = vld [vmem:[#allocation7 + $0x318] sm:$0xff]
    %v1302 = vld [vmem:[#allocation7 + $0x320] sm:$0xff]
    %v1303 = vld [vmem:[#allocation7 + $0x328] sm:$0xff]
    %v1304 = vld [vmem:[#allocation7 + $0x330] sm:$0xff]
    %v1305 = vld [vmem:[#allocation7 + $0x338] sm:$0xff]
    %v1306 = vld [vmem:[#allocation7 + $0x340] sm:$0xff]
    %v1307 = vld [vmem:[#allocation7 + $0x348] sm:$0xff]
    %v1308 = vld [vmem:[#allocation7 + $0x350] sm:$0xff]
    %v1309 = vld [vmem:[#allocation7 + $0x358] sm:$0xff]
    %v1310 = vld [vmem:[#allocation7 + $0x360] sm:$0xff]
    %v1311 = vld [vmem:[#allocation7 + $0x368] sm:$0xff]
    %v1312 = vld [vmem:[#allocation7 + $0x370] sm:$0xff]
    %v1313 = vld [vmem:[#allocation7 + $0x378] sm:$0xff]
    %v1314 = vld [vmem:[#allocation7 + $0x380] sm:$0xff]
    %v1315 = vld [vmem:[#allocation7 + $0x388] sm:$0xff]
    %v1316 = vld [vmem:[#allocation7 + $0x390] sm:$0xff]
    %v1317 = vld [vmem:[#allocation7 + $0x398] sm:$0xff]
    %v1318 = vld [vmem:[#allocation7 + $0x3a0] sm:$0xff]
    %v1319 = vld [vmem:[#allocation7 + $0x3a8] sm:$0xff]
    %v1320 = vld [vmem:[#allocation7 + $0x3b0] sm:$0xff]
    %v1321 = vld [vmem:[#allocation7 + $0x3b8] sm:$0xff]
    %v1322 = vld [vmem:[#allocation7 + $0x3c0] sm:$0xff]
    %v1323 = vld [vmem:[#allocation7 + $0x3c8] sm:$0xff]
    %v1324 = vld [vmem:[#allocation7 + $0x3d0] sm:$0xff]
    %v1325 = vld [vmem:[#allocation7 + $0x3d8] sm:$0xff]
    %v1326 = vld [vmem:[#allocation7 + $0x3e0] sm:$0xff]
    %v1327 = vld [vmem:[#allocation7 + $0x3e8] sm:$0xff]
    %v1328 = vld [vmem:[#allocation7 + $0x3f0] sm:$0xff]
    %v1329 = vld [vmem:[#allocation7 + $0x3f8] sm:$0xff]
    %v1330 = vld [vmem:[#allocation7 + $0x400] sm:$0xff]
    %v1331 = vld [vmem:[#allocation7 + $0x408] sm:$0xff]
    %v1332 = vld [vmem:[#allocation7 + $0x410] sm:$0xff]
    %v1333 = vld [vmem:[#allocation7 + $0x418] sm:$0xff]
    %v1334 = vld [vmem:[#allocation7 + $0x420] sm:$0xff]
    %v1335 = vld [vmem:[#allocation7 + $0x428] sm:$0xff]
    %v1336 = vld [vmem:[#allocation7 + $0x430] sm:$0xff]
    %v1337 = vld [vmem:[#allocation7 + $0x438] sm:$0xff]
    %v1338 = vld [vmem:[#allocation7 + $0x440] sm:$0xff]
    %v1339 = vld [vmem:[#allocation7 + $0x448] sm:$0xff]
    %v1340 = vld [vmem:[#allocation7 + $0x450] sm:$0xff]
    %v1341 = vld [vmem:[#allocation7 + $0x458] sm:$0xff]
    %v1342 = vld [vmem:[#allocation7 + $0x460] sm:$0xff]
    %v1343 = vld [vmem:[#allocation7 + $0x468] sm:$0xff]
    %v1344 = vld [vmem:[#allocation7 + $0x470] sm:$0xff]
    %v1345 = vld [vmem:[#allocation7 + $0x478] sm:$0xff]
    %v1346 = vld [vmem:[#allocation7 + $0x480] sm:$0xff]
    %v1347 = vld [vmem:[#allocation7 + $0x488] sm:$0xff]
    %v1348 = vld [vmem:[#allocation7 + $0x490] sm:$0xff]
    %v1349 = vld [vmem:[#allocation7 + $0x498] sm:$0xff]
    %v1350 = vld [vmem:[#allocation7 + $0x4a0] sm:$0xff]
    %v1351 = vld [vmem:[#allocation7 + $0x4a8] sm:$0xff]
    %v1352 = vld [vmem:[#allocation7 + $0x4b0] sm:$0xff]
    %v1353 = vld [vmem:[#allocation7 + $0x4b8] sm:$0xff]
    %v1354 = vld [vmem:[#allocation7 + $0x4c0] sm:$0xff]
    %v1355 = vld [vmem:[#allocation7 + $0x4c8] sm:$0xff]
    %v1356 = vld [vmem:[#allocation7 + $0x4d0] sm:$0xff]
    %v1357 = vld [vmem:[#allocation7 + $0x4d8] sm:$0xff]
    %v1358 = vld [vmem:[#allocation7 + $0x4e0] sm:$0xff]
    %v1359 = vld [vmem:[#allocation7 + $0x4e8] sm:$0xff]
    %v1360 = vld [vmem:[#allocation7 + $0x4f0] sm:$0xff]
    %v1361 = vld [vmem:[#allocation7 + $0x4f8] sm:$0xff]
    %v1362 = vld [vmem:[#allocation7 + $0x500] sm:$0xff]
    %v1363 = vld [vmem:[#allocation7 + $0x508] sm:$0xff]
    %v1364 = vld [vmem:[#allocation7 + $0x510] sm:$0xff]
    %v1365 = vld [vmem:[#allocation7 + $0x518] sm:$0xff]
    %v1366 = vld [vmem:[#allocation7 + $0x520] sm:$0xff]
    %v1367 = vld [vmem:[#allocation7 + $0x528] sm:$0xff]
    %v1368 = vld [vmem:[#allocation7 + $0x530] sm:$0xff]
    %v1369 = vld [vmem:[#allocation7 + $0x538] sm:$0xff]
    %v1370 = vld [vmem:[#allocation7 + $0x540] sm:$0xff]
    %v1371 = vld [vmem:[#allocation7 + $0x548] sm:$0xff]
    %v1372 = vld [vmem:[#allocation7 + $0x550] sm:$0xff]
    %v1373 = vld [vmem:[#allocation7 + $0x558] sm:$0xff]
    %v1374 = vld [vmem:[#allocation7 + $0x560] sm:$0xff]
    %v1375 = vld [vmem:[#allocation7 + $0x568] sm:$0xff]
    %v1376 = vld [vmem:[#allocation7 + $0x570] sm:$0xff]
    %v1377 = vld [vmem:[#allocation7 + $0x578] sm:$0xff]
    %v1378 = vld [vmem:[#allocation7 + $0x580] sm:$0xff]
    %v1379 = vld [vmem:[#allocation7 + $0x588] sm:$0xff]
    %v1380 = vld [vmem:[#allocation7 + $0x590] sm:$0xff]
    %v1381 = vld [vmem:[#allocation7 + $0x598] sm:$0xff]
    %v1382 = vld [vmem:[#allocation7 + $0x5a0] sm:$0xff]
    %v1383 = vld [vmem:[#allocation7 + $0x5a8] sm:$0xff]
    %v1384 = vld [vmem:[#allocation7 + $0x5b0] sm:$0xff]
    %v1385 = vld [vmem:[#allocation7 + $0x5b8] sm:$0xff]
    %v1386 = vld [vmem:[#allocation7 + $0x5c0] sm:$0xff]
    %v1387 = vld [vmem:[#allocation7 + $0x5c8] sm:$0xff]
    %v1388 = vld [vmem:[#allocation7 + $0x5d0] sm:$0xff]
    %v1389 = vld [vmem:[#allocation7 + $0x5d8] sm:$0xff]
    %v1390 = vld [vmem:[#allocation7 + $0x5e0] sm:$0xff]
    %v1391 = vld [vmem:[#allocation7 + $0x5e8] sm:$0xff]
    %v1392 = vld [vmem:[#allocation7 + $0x5f0] sm:$0xff]
    %v1393 = vld [vmem:[#allocation7 + $0x5f8] sm:$0xff]
    %v1394 = vld [vmem:[#allocation7 + $0x600] sm:$0xff]
    %v1395 = vld [vmem:[#allocation7 + $0x608] sm:$0xff]
    %v1396 = vld [vmem:[#allocation7 + $0x610] sm:$0xff]
    %v1397 = vld [vmem:[#allocation7 + $0x618] sm:$0xff]
    %v1398 = vld [vmem:[#allocation7 + $0x620] sm:$0xff]
    %v1399 = vld [vmem:[#allocation7 + $0x628] sm:$0xff]
    %v1400 = vld [vmem:[#allocation7 + $0x630] sm:$0xff]
    %v1401 = vld [vmem:[#allocation7 + $0x638] sm:$0xff]
    %v1402 = vld [vmem:[#allocation7 + $0x640] sm:$0xff]
    %v1403 = vld [vmem:[#allocation7 + $0x648] sm:$0xff]
    %v1404 = vld [vmem:[#allocation7 + $0x650] sm:$0xff]
    %v1405 = vld [vmem:[#allocation7 + $0x658] sm:$0xff]
    %v1406 = vld [vmem:[#allocation7 + $0x660] sm:$0xff]
    %v1407 = vld [vmem:[#allocation7 + $0x668] sm:$0xff]
    %v1408 = vld [vmem:[#allocation7 + $0x670] sm:$0xff]
    %v1409 = vld [vmem:[#allocation7 + $0x678] sm:$0xff]
    %v1410 = vld [vmem:[#allocation7 + $0x680] sm:$0xff]
    %v1411 = vld [vmem:[#allocation7 + $0x688] sm:$0xff]
    %v1412 = vld [vmem:[#allocation7 + $0x690] sm:$0xff]
    %v1413 = vld [vmem:[#allocation7 + $0x698] sm:$0xff]
    %v1414 = vld [vmem:[#allocation7 + $0x6a0] sm:$0xff]
    %v1415 = vld [vmem:[#allocation7 + $0x6a8] sm:$0xff]
    %v1416 = vld [vmem:[#allocation7 + $0x6b0] sm:$0xff]
    %v1417 = vld [vmem:[#allocation7 + $0x6b8] sm:$0xff]
    %v1418 = vld [vmem:[#allocation7 + $0x6c0] sm:$0xff]
    %v1419 = vld [vmem:[#allocation7 + $0x6c8] sm:$0xff]
    %v1420 = vld [vmem:[#allocation7 + $0x6d0] sm:$0xff]
    %v1421 = vld [vmem:[#allocation7 + $0x6d8] sm:$0xff]
    %v1422 = vld [vmem:[#allocation7 + $0x6e0] sm:$0xff]
    %v1423 = vld [vmem:[#allocation7 + $0x6e8] sm:$0xff]
    %v1424 = vld [vmem:[#allocation7 + $0x6f0] sm:$0xff]
    %v1425 = vld [vmem:[#allocation7 + $0x6f8] sm:$0xff]
    %v1426 = vld [vmem:[#allocation7 + $0x700] sm:$0xff]
    %v1427 = vld [vmem:[#allocation7 + $0x708] sm:$0xff]
    %v1428 = vld [vmem:[#allocation7 + $0x710] sm:$0xff]
    %v1429 = vld [vmem:[#allocation7 + $0x718] sm:$0xff]
    %v1430 = vld [vmem:[#allocation7 + $0x720] sm:$0xff]
    %v1431 = vld [vmem:[#allocation7 + $0x728] sm:$0xff]
    %v1432 = vld [vmem:[#allocation7 + $0x730] sm:$0xff]
    %v1433 = vld [vmem:[#allocation7 + $0x738] sm:$0xff]
    %v1434 = vld [vmem:[#allocation7 + $0x740] sm:$0xff]
    %v1435 = vld [vmem:[#allocation7 + $0x748] sm:$0xff]
    %v1436 = vld [vmem:[#allocation7 + $0x750] sm:$0xff]
    %v1437 = vld [vmem:[#allocation7 + $0x758] sm:$0xff]
    %v1438 = vld [vmem:[#allocation7 + $0x760] sm:$0xff]
    %v1439 = vld [vmem:[#allocation7 + $0x768] sm:$0xff]
    %v1440 = vld [vmem:[#allocation7 + $0x770] sm:$0xff]
    %v1441 = vld [vmem:[#allocation7 + $0x778] sm:$0xff]
    %v1442 = vld [vmem:[#allocation7 + $0x780] sm:$0xff]
    %v1443 = vld [vmem:[#allocation7 + $0x788] sm:$0xff]
    %v1444 = vld [vmem:[#allocation7 + $0x790] sm:$0xff]
    %v1445 = vld [vmem:[#allocation7 + $0x798] sm:$0xff]
    %v1446 = vld [vmem:[#allocation7 + $0x7a0] sm:$0xff]
    %v1447 = vld [vmem:[#allocation7 + $0x7a8] sm:$0xff]
    %v1448 = vld [vmem:[#allocation7 + $0x7b0] sm:$0xff]
    %v1449 = vld [vmem:[#allocation7 + $0x7b8] sm:$0xff]
    %v1450 = vld [vmem:[#allocation7 + $0x7c0] sm:$0xff]
    %v1451 = vld [vmem:[#allocation7 + $0x7c8] sm:$0xff]
    %v1452 = vld [vmem:[#allocation7 + $0x7d0] sm:$0xff]
    %v1453 = vld [vmem:[#allocation7 + $0x7d8] sm:$0xff]
    %v1454 = vld [vmem:[#allocation7 + $0x7e0] sm:$0xff]
    %v1455 = vld [vmem:[#allocation7 + $0x7e8] sm:$0xff]
    %v1456 = vld [vmem:[#allocation7 + $0x7f0] sm:$0xff]
    %v1457 = vld [vmem:[#allocation7 + $0x7f8] sm:$0xff]
    %v1458 = vld [vmem:[#allocation7 + $0x800] sm:$0xff]
    %v1459 = vld [vmem:[#allocation7 + $0x808] sm:$0xff]
    %v1460 = vld [vmem:[#allocation7 + $0x810] sm:$0xff]
    %v1461 = vld [vmem:[#allocation7 + $0x818] sm:$0xff]
    %v1462 = vld [vmem:[#allocation7 + $0x820] sm:$0xff]
    %v1463 = vld [vmem:[#allocation7 + $0x828] sm:$0xff]
    %v1464 = vld [vmem:[#allocation7 + $0x830] sm:$0xff]
    %v1465 = vld [vmem:[#allocation7 + $0x838] sm:$0xff]
    %v1466 = vld [vmem:[#allocation7 + $0x840] sm:$0xff]
    %v1467 = vld [vmem:[#allocation7 + $0x848] sm:$0xff]
    %v1468 = vld [vmem:[#allocation7 + $0x850] sm:$0xff]
    %v1469 = vld [vmem:[#allocation7 + $0x858] sm:$0xff]
    %v1470 = vld [vmem:[#allocation7 + $0x860] sm:$0xff]
    %v1471 = vld [vmem:[#allocation7 + $0x868] sm:$0xff]
    %v1472 = vld [vmem:[#allocation7 + $0x870] sm:$0xff]
    %v1473 = vld [vmem:[#allocation7 + $0x878] sm:$0xff]
    %v1474 = vld [vmem:[#allocation7 + $0x880] sm:$0xff]
    %v1475 = vld [vmem:[#allocation7 + $0x888] sm:$0xff]
    %v1476 = vld [vmem:[#allocation7 + $0x890] sm:$0xff]
    %v1477 = vld [vmem:[#allocation7 + $0x898] sm:$0xff]
    %v1478 = vld [vmem:[#allocation7 + $0x8a0] sm:$0xff]
    %v1479 = vld [vmem:[#allocation7 + $0x8a8] sm:$0xff]
    %v1480 = vld [vmem:[#allocation7 + $0x8b0] sm:$0xff]
    %v1481 = vld [vmem:[#allocation7 + $0x8b8] sm:$0xff]
    %v1482 = vld [vmem:[#allocation7 + $0x8c0] sm:$0xff]
    %v1483 = vld [vmem:[#allocation7 + $0x8c8] sm:$0xff]
    %v1484 = vld [vmem:[#allocation7 + $0x8d0] sm:$0xff]
    %v1485 = vld [vmem:[#allocation7 + $0x8d8] sm:$0xff]
    %v1486 = vld [vmem:[#allocation7 + $0x8e0] sm:$0xff]
    %v1487 = vld [vmem:[#allocation7 + $0x8e8] sm:$0xff]
    %v1488 = vld [vmem:[#allocation7 + $0x8f0] sm:$0xff]
    %v1489 = vld [vmem:[#allocation7 + $0x8f8] sm:$0xff]
    %v1490 = vld [vmem:[#allocation7 + $0x900] sm:$0xff]
    %v1491 = vld [vmem:[#allocation7 + $0x908] sm:$0xff]
    %v1492 = vld [vmem:[#allocation7 + $0x910] sm:$0xff]
    %v1493 = vld [vmem:[#allocation7 + $0x918] sm:$0xff]
    %v1494 = vld [vmem:[#allocation7 + $0x920] sm:$0xff]
    %v1495 = vld [vmem:[#allocation7 + $0x928] sm:$0xff]
    %v1496 = vld [vmem:[#allocation7 + $0x930] sm:$0xff]
    %v1497 = vld [vmem:[#allocation7 + $0x938] sm:$0xff]
    %v1498 = vld [vmem:[#allocation7 + $0x940] sm:$0xff]
    %v1499 = vld [vmem:[#allocation7 + $0x948] sm:$0xff]
    %v1500 = vld [vmem:[#allocation7 + $0x950] sm:$0xff]
    %v1501 = vld [vmem:[#allocation7 + $0x958] sm:$0xff]
    %v1502 = vld [vmem:[#allocation7 + $0x960] sm:$0xff]
    %v1503 = vld [vmem:[#allocation7 + $0x968] sm:$0xff]
    %v1504 = vld [vmem:[#allocation7 + $0x970] sm:$0xff]
    %v1505 = vld [vmem:[#allocation7 + $0x978] sm:$0xff]
    %v1506 = vld [vmem:[#allocation7 + $0x980] sm:$0xff]
    %v1507 = vld [vmem:[#allocation7 + $0x988] sm:$0xff]
    %v1508 = vld [vmem:[#allocation7 + $0x990] sm:$0xff]
    %v1509 = vld [vmem:[#allocation7 + $0x998] sm:$0xff]
    %v1510 = vld [vmem:[#allocation7 + $0x9a0] sm:$0xff]
    %v1511 = vld [vmem:[#allocation7 + $0x9a8] sm:$0xff]
    %v1512 = vld [vmem:[#allocation7 + $0x9b0] sm:$0xff]
    %v1513 = vld [vmem:[#allocation7 + $0x9b8] sm:$0xff]
    %v1514 = vld [vmem:[#allocation7 + $0x9c0] sm:$0xff]
    %v1515 = vld [vmem:[#allocation7 + $0x9c8] sm:$0xff]
    %v1516 = vld [vmem:[#allocation7 + $0x9d0] sm:$0xff]
    %v1517 = vld [vmem:[#allocation7 + $0x9d8] sm:$0xff]
    %v1518 = vld [vmem:[#allocation7 + $0x9e0] sm:$0xff]
    %v1519 = vld [vmem:[#allocation7 + $0x9e8] sm:$0xff]
    %v1520 = vld [vmem:[#allocation7 + $0x9f0] sm:$0xff]
    %v1521 = vld [vmem:[#allocation7 + $0x9f8] sm:$0xff]
    %v1522 = vld [vmem:[#allocation7 + $0xa00] sm:$0xff]
    %v1523 = vld [vmem:[#allocation7 + $0xa08] sm:$0xff]
    %v1524 = vld [vmem:[#allocation7 + $0xa10] sm:$0xff]
    %v1525 = vld [vmem:[#allocation7 + $0xa18] sm:$0xff]
    %v1526 = vld [vmem:[#allocation7 + $0xa20] sm:$0xff]
    %v1527 = vld [vmem:[#allocation7 + $0xa28] sm:$0xff]
    %v1528 = vld [vmem:[#allocation7 + $0xa30] sm:$0xff]
    %v1529 = vld [vmem:[#allocation7 + $0xa38] sm:$0xff]
    %v1530 = vld [vmem:[#allocation7 + $0xa40] sm:$0xff]
    %v1531 = vld [vmem:[#allocation7 + $0xa48] sm:$0xff]
    %v1532 = vld [vmem:[#allocation7 + $0xa50] sm:$0xff]
    %v1533 = vld [vmem:[#allocation7 + $0xa58] sm:$0xff]
    %v1534 = vld [vmem:[#allocation7 + $0xa60] sm:$0xff]
    %v1535 = vld [vmem:[#allocation7 + $0xa68] sm:$0xff]
    %v1536 = vld [vmem:[#allocation7 + $0xa70] sm:$0xff]
    %v1537 = vld [vmem:[#allocation7 + $0xa78] sm:$0xff]
    %v1538 = vld [vmem:[#allocation7 + $0xa80] sm:$0xff]
    %v1539 = vld [vmem:[#allocation7 + $0xa88] sm:$0xff]
    %v1540 = vld [vmem:[#allocation7 + $0xa90] sm:$0xff]
    %v1541 = vld [vmem:[#allocation7 + $0xa98] sm:$0xff]
    %v1542 = vld [vmem:[#allocation7 + $0xaa0] sm:$0xff]
    %v1543 = vld [vmem:[#allocation7 + $0xaa8] sm:$0xff]
    %v1544 = vld [vmem:[#allocation7 + $0xab0] sm:$0xff]
    %v1545 = vld [vmem:[#allocation7 + $0xab8] sm:$0xff]
    %v1546 = vld [vmem:[#allocation7 + $0xac0] sm:$0xff]
    %v1547 = vld [vmem:[#allocation7 + $0xac8] sm:$0xff]
    %v1548 = vld [vmem:[#allocation7 + $0xad0] sm:$0xff]
    %v1549 = vld [vmem:[#allocation7 + $0xad8] sm:$0xff]
    %v1550 = vld [vmem:[#allocation7 + $0xae0] sm:$0xff]
    %v1551 = vld [vmem:[#allocation7 + $0xae8] sm:$0xff]
    %v1552 = vld [vmem:[#allocation7 + $0xaf0] sm:$0xff]
    %v1553 = vld [vmem:[#allocation7 + $0xaf8] sm:$0xff]
    %v1554 = vld [vmem:[#allocation7 + $0xb00] sm:$0xff]
    %v1555 = vld [vmem:[#allocation7 + $0xb08] sm:$0xff]
    %v1556 = vld [vmem:[#allocation7 + $0xb10] sm:$0xff]
    %v1557 = vld [vmem:[#allocation7 + $0xb18] sm:$0xff]
    %v1558 = vld [vmem:[#allocation7 + $0xb20] sm:$0xff]
    %v1559 = vld [vmem:[#allocation7 + $0xb28] sm:$0xff]
    %v1560 = vld [vmem:[#allocation7 + $0xb30] sm:$0xff]
    %v1561 = vld [vmem:[#allocation7 + $0xb38] sm:$0xff]
    %v1562 = vld [vmem:[#allocation7 + $0xb40] sm:$0xff]
    %v1563 = vld [vmem:[#allocation7 + $0xb48] sm:$0xff]
    %v1564 = vld [vmem:[#allocation7 + $0xb50] sm:$0xff]
    %v1565 = vld [vmem:[#allocation7 + $0xb58] sm:$0xff]
    %v1566 = vld [vmem:[#allocation7 + $0xb60] sm:$0xff]
    %v1567 = vld [vmem:[#allocation7 + $0xb68] sm:$0xff]
    %v1568 = vld [vmem:[#allocation7 + $0xb70] sm:$0xff]
    %v1569 = vld [vmem:[#allocation7 + $0xb78] sm:$0xff]
    %v1570 = vld [vmem:[#allocation7 + $0xb80] sm:$0xff]
    %v1571 = vld [vmem:[#allocation7 + $0xb88] sm:$0xff]
    %v1572 = vld [vmem:[#allocation7 + $0xb90] sm:$0xff]
    %v1573 = vld [vmem:[#allocation7 + $0xb98] sm:$0xff]
    %v1574 = vld [vmem:[#allocation7 + $0xba0] sm:$0xff]
    %v1575 = vld [vmem:[#allocation7 + $0xba8] sm:$0xff]
    %v1576 = vld [vmem:[#allocation7 + $0xbb0] sm:$0xff]
    %v1577 = vld [vmem:[#allocation7 + $0xbb8] sm:$0xff]
    %v1578 = vld [vmem:[#allocation7 + $0xbc0] sm:$0xff]
    %v1579 = vld [vmem:[#allocation7 + $0xbc8] sm:$0xff]
    %v1580 = vld [vmem:[#allocation7 + $0xbd0] sm:$0xff]
    %v1581 = vld [vmem:[#allocation7 + $0xbd8] sm:$0xff]
    %v1582 = vld [vmem:[#allocation7 + $0xbe0] sm:$0xff]
    %v1583 = vld [vmem:[#allocation7 + $0xbe8] sm:$0xff]
    %v1584 = vld [vmem:[#allocation7 + $0xbf0] sm:$0xff]
    %v1585 = vld [vmem:[#allocation7 + $0xbf8] sm:$0xff]
    %v1586 = vld [vmem:[#allocation7 + $0xc00] sm:$0xff]
    %v1587 = vld [vmem:[#allocation7 + $0xc08] sm:$0xff]
    %v1588 = vld [vmem:[#allocation7 + $0xc10] sm:$0xff]
    %v1589 = vld [vmem:[#allocation7 + $0xc18] sm:$0xff]
    %v1590 = vld [vmem:[#allocation7 + $0xc20] sm:$0xff]
    %v1591 = vld [vmem:[#allocation7 + $0xc28] sm:$0xff]
    %v1592 = vld [vmem:[#allocation7 + $0xc30] sm:$0xff]
    %v1593 = vld [vmem:[#allocation7 + $0xc38] sm:$0xff]
    %v1594 = vld [vmem:[#allocation7 + $0xc40] sm:$0xff]
    %v1595 = vld [vmem:[#allocation7 + $0xc48] sm:$0xff]
    %v1596 = vld [vmem:[#allocation7 + $0xc50] sm:$0xff]
    %v1597 = vld [vmem:[#allocation7 + $0xc58] sm:$0xff]
    %v1598 = vld [vmem:[#allocation7 + $0xc60] sm:$0xff]
    %v1599 = vld [vmem:[#allocation7 + $0xc68] sm:$0xff]
    %v1600 = vld [vmem:[#allocation7 + $0xc70] sm:$0xff]
    %v1601 = vld [vmem:[#allocation7 + $0xc78] sm:$0xff]
    %v1602 = vld [vmem:[#allocation7 + $0xc80] sm:$0xff]
    %v1603 = vld [vmem:[#allocation7 + $0xc88] sm:$0xff]
    %v1604 = vld [vmem:[#allocation7 + $0xc90] sm:$0xff]
    %v1605 = vld [vmem:[#allocation7 + $0xc98] sm:$0xff]
    %v1606 = vld [vmem:[#allocation7 + $0xca0] sm:$0xff]
    %v1607 = vld [vmem:[#allocation7 + $0xca8] sm:$0xff]
    %v1608 = vld [vmem:[#allocation7 + $0xcb0] sm:$0xff]
    %v1609 = vld [vmem:[#allocation7 + $0xcb8] sm:$0xff]
    %v1610 = vld [vmem:[#allocation7 + $0xcc0] sm:$0xff]
    %v1611 = vld [vmem:[#allocation7 + $0xcc8] sm:$0xff]
    %v1612 = vld [vmem:[#allocation7 + $0xcd0] sm:$0xff]
    %v1613 = vld [vmem:[#allocation7 + $0xcd8] sm:$0xff]
    %v1614 = vld [vmem:[#allocation7 + $0xce0] sm:$0xff]
    %v1615 = vld [vmem:[#allocation7 + $0xce8] sm:$0xff]
    %v1616 = vld [vmem:[#allocation7 + $0xcf0] sm:$0xff]
    %v1617 = vld [vmem:[#allocation7 + $0xcf8] sm:$0xff]
    %v1618 = vld [vmem:[#allocation7 + $0xd00] sm:$0xff]
    %v1619 = vld [vmem:[#allocation7 + $0xd08] sm:$0xff]
    %v1620 = vld [vmem:[#allocation7 + $0xd10] sm:$0xff]
    %v1621 = vld [vmem:[#allocation7 + $0xd18] sm:$0xff]
    %v1622 = vld [vmem:[#allocation7 + $0xd20] sm:$0xff]
    %v1623 = vld [vmem:[#allocation7 + $0xd28] sm:$0xff]
    %v1624 = vld [vmem:[#allocation7 + $0xd30] sm:$0xff]
    %v1625 = vld [vmem:[#allocation7 + $0xd38] sm:$0xff]
    %v1626 = vld [vmem:[#allocation7 + $0xd40] sm:$0xff]
    %v1627 = vld [vmem:[#allocation7 + $0xd48] sm:$0xff]
    %v1628 = vld [vmem:[#allocation7 + $0xd50] sm:$0xff]
    %v1629 = vld [vmem:[#allocation7 + $0xd58] sm:$0xff]
    %v1630 = vld [vmem:[#allocation7 + $0xd60] sm:$0xff]
    %v1631 = vld [vmem:[#allocation7 + $0xd68] sm:$0xff]
    %v1632 = vld [vmem:[#allocation7 + $0xd70] sm:$0xff]
    %v1633 = vld [vmem:[#allocation7 + $0xd78] sm:$0xff]
    %v1634 = vld [vmem:[#allocation7 + $0xd80] sm:$0xff]
    %v1635 = vld [vmem:[#allocation7 + $0xd88] sm:$0xff]
    %v1636 = vld [vmem:[#allocation7 + $0xd90] sm:$0xff]
    %v1637 = vld [vmem:[#allocation7 + $0xd98] sm:$0xff]
    %v1638 = vld [vmem:[#allocation7 + $0xda0] sm:$0xff]
    %v1639 = vld [vmem:[#allocation7 + $0xda8] sm:$0xff]
    %v1640 = vld [vmem:[#allocation7 + $0xdb0] sm:$0xff]
    %v1641 = vld [vmem:[#allocation7 + $0xdb8] sm:$0xff]
    %v1642 = vld [vmem:[#allocation7 + $0xdc0] sm:$0xff]
    %v1643 = vld [vmem:[#allocation7 + $0xdc8] sm:$0xff]
    %v1644 = vld [vmem:[#allocation7 + $0xdd0] sm:$0xff]
    %v1645 = vld [vmem:[#allocation7 + $0xdd8] sm:$0xff]
    %v1646 = vld [vmem:[#allocation7 + $0xde0] sm:$0xff]
    %v1647 = vld [vmem:[#allocation7 + $0xde8] sm:$0xff]
    %v1648 = vld [vmem:[#allocation7 + $0xdf0] sm:$0xff]
    %v1649 = vld [vmem:[#allocation7 + $0xdf8] sm:$0xff]
    %v1650 = vld [vmem:[#allocation7 + $0xe00] sm:$0xff]
    %v1651 = vld [vmem:[#allocation7 + $0xe08] sm:$0xff]
    %v1652 = vld [vmem:[#allocation7 + $0xe10] sm:$0xff]
    %v1653 = vld [vmem:[#allocation7 + $0xe18] sm:$0xff]
    %v1654 = vld [vmem:[#allocation7 + $0xe20] sm:$0xff]
    %v1655 = vld [vmem:[#allocation7 + $0xe28] sm:$0xff]
    %v1656 = vld [vmem:[#allocation7 + $0xe30] sm:$0xff]
    %v1657 = vld [vmem:[#allocation7 + $0xe38] sm:$0xff]
    %v1658 = vld [vmem:[#allocation7 + $0xe40] sm:$0xff]
    %v1659 = vld [vmem:[#allocation7 + $0xe48] sm:$0xff]
    %v1660 = vld [vmem:[#allocation7 + $0xe50] sm:$0xff]
    %v1661 = vld [vmem:[#allocation7 + $0xe58] sm:$0xff]
    %v1662 = vld [vmem:[#allocation7 + $0xe60] sm:$0xff]
    %v1663 = vld [vmem:[#allocation7 + $0xe68] sm:$0xff]
    %v1664 = vld [vmem:[#allocation7 + $0xe70] sm:$0xff]
    %v1665 = vld [vmem:[#allocation7 + $0xe78] sm:$0xff]
    %v1666 = vld [vmem:[#allocation7 + $0xe80] sm:$0xff]
    %v1667 = vld [vmem:[#allocation7 + $0xe88] sm:$0xff]
    %v1668 = vld [vmem:[#allocation7 + $0xe90] sm:$0xff]
    %v1669 = vld [vmem:[#allocation7 + $0xe98] sm:$0xff]
    %v1670 = vld [vmem:[#allocation7 + $0xea0] sm:$0xff]
    %v1671 = vld [vmem:[#allocation7 + $0xea8] sm:$0xff]
    %v1672 = vld [vmem:[#allocation7 + $0xeb0] sm:$0xff]
    %v1673 = vld [vmem:[#allocation7 + $0xeb8] sm:$0xff]
    %v1674 = vld [vmem:[#allocation7 + $0xec0] sm:$0xff]
    %v1675 = vld [vmem:[#allocation7 + $0xec8] sm:$0xff]
    %v1676 = vld [vmem:[#allocation7 + $0xed0] sm:$0xff]
    %v1677 = vld [vmem:[#allocation7 + $0xed8] sm:$0xff]
    %v1678 = vld [vmem:[#allocation7 + $0xee0] sm:$0xff]
    %v1679 = vld [vmem:[#allocation7 + $0xee8] sm:$0xff]
    %v1680 = vld [vmem:[#allocation7 + $0xef0] sm:$0xff]
    %v1681 = vld [vmem:[#allocation7 + $0xef8] sm:$0xff]
    %v1682 = vld [vmem:[#allocation7 + $0xf00] sm:$0xff]
    %v1683 = vld [vmem:[#allocation7 + $0xf08] sm:$0xff]
    %v1684 = vld [vmem:[#allocation7 + $0xf10] sm:$0xff]
    %v1685 = vld [vmem:[#allocation7 + $0xf18] sm:$0xff]
    %v1686 = vld [vmem:[#allocation7 + $0xf20] sm:$0xff]
    %v1687 = vld [vmem:[#allocation7 + $0xf28] sm:$0xff]
    %v1688 = vld [vmem:[#allocation7 + $0xf30] sm:$0xff]
    %v1689 = vld [vmem:[#allocation7 + $0xf38] sm:$0xff]
    %v1690 = vld [vmem:[#allocation7 + $0xf40] sm:$0xff]
    %v1691 = vld [vmem:[#allocation7 + $0xf48] sm:$0xff]
    %v1692 = vld [vmem:[#allocation7 + $0xf50] sm:$0xff]
    %v1693 = vld [vmem:[#allocation7 + $0xf58] sm:$0xff]
    %v1694 = vld [vmem:[#allocation7 + $0xf60] sm:$0xff]
    %v1695 = vld [vmem:[#allocation7 + $0xf68] sm:$0xff]
    %v1696 = vld [vmem:[#allocation7 + $0xf70] sm:$0xff]
    %v1697 = vld [vmem:[#allocation7 + $0xf78] sm:$0xff]
    %v1698 = vld [vmem:[#allocation7 + $0xf80] sm:$0xff]
    %v1699 = vld [vmem:[#allocation7 + $0xf88] sm:$0xff]
    %v1700 = vld [vmem:[#allocation7 + $0xf90] sm:$0xff]
    %v1701 = vld [vmem:[#allocation7 + $0xf98] sm:$0xff]
    %v1702 = vld [vmem:[#allocation7 + $0xfa0] sm:$0xff]
    %v1703 = vld [vmem:[#allocation7 + $0xfa8] sm:$0xff]
    %v1704 = vld [vmem:[#allocation7 + $0xfb0] sm:$0xff]
    %v1705 = vld [vmem:[#allocation7 + $0xfb8] sm:$0xff]
    %v1706 = vld [vmem:[#allocation7 + $0xfc0] sm:$0xff]
    %v1707 = vld [vmem:[#allocation7 + $0xfc8] sm:$0xff]
    %v1708 = vld [vmem:[#allocation7 + $0xfd0] sm:$0xff]
    %v1709 = vld [vmem:[#allocation7 + $0xfd8] sm:$0xff]
    %v1710 = vld [vmem:[#allocation7 + $0xfe0] sm:$0xff]
    %v1711 = vld [vmem:[#allocation7 + $0xfe8] sm:$0xff]
    %v1712 = vld [vmem:[#allocation7 + $0xff0] sm:$0xff]
    %v1713 = vld [vmem:[#allocation7 + $0xff8] sm:$0xff]
    %v1714 = vld [vmem:[#allocation8] sm:$0x1]
    %v1716 = vlaneseq
    %v1717 = vshrl.u32 %v1716, 7
    %v1718 = vsub.s32 0, %v1717
    %v1719 = vrot.slane %v1714, %v1718
    %1721 = vmatprep.subr.mxu0 0.0
    %1722 = vmatpush1.msra.mxu0 %v1202
    %1723 = vmatprep.subr.mxu0 0.0
    %1724 = vmatpush1.msra.mxu0 %v1203
    %1725 = vmatprep.subr.mxu0 0.0
    %1726 = vmatpush1.msra.mxu0 %v1204
    %1727 = vmatprep.subr.mxu0 0.0
    %1728 = vmatpush1.msra.mxu0 %v1205
    %1729 = vmatprep.subr.mxu0 0.0
    %1730 = vmatpush1.msra.mxu0 %v1206
    %1731 = vmatprep.subr.mxu0 0.0
    %1732 = vmatpush1.msra.mxu0 %v1207
    %1733 = vmatprep.subr.mxu0 0.0
    %1734 = vmatpush1.msra.mxu0 %v1208
    %1735 = vmatprep.subr.mxu0 0.0
    %1736 = vmatpush1.msra.mxu0 %v1209
    %1737 = vmatprep.subr.mxu0 0.0
    %1738 = vmatpush1.msra.mxu0 %v1210
    %1739 = vmatprep.subr.mxu0 0.0
    %1740 = vmatpush1.msra.mxu0 %v1211
    %1741 = vmatprep.subr.mxu0 0.0
    %1742 = vmatpush1.msra.mxu0 %v1212
    %1743 = vmatprep.subr.mxu0 0.0
    %1744 = vmatpush1.msra.mxu0 %v1213
    %1745 = vmatprep.subr.mxu0 0.0
    %1746 = vmatpush1.msra.mxu0 %v1214
    %1747 = vmatprep.subr.mxu0 0.0
    %1748 = vmatpush1.msra.mxu0 %v1215
    %1749 = vmatprep.subr.mxu0 0.0
    %1750 = vmatpush1.msra.mxu0 %v1216
    %1751 = vmatprep.subr.mxu0 0.0
    %1752 = vmatpush1.msra.mxu0 %v1217
    %1753 = vmatprep.subr.mxu0 0.0
    %1754 = vmatpush1.msra.mxu0 %v1218
    %1755 = vmatprep.subr.mxu0 0.0
    %1756 = vmatpush1.msra.mxu0 %v1219
    %1757 = vmatprep.subr.mxu0 0.0
    %1758 = vmatpush1.msra.mxu0 %v1220
    %1759 = vmatprep.subr.mxu0 0.0
    %1760 = vmatpush1.msra.mxu0 %v1221
    %1761 = vmatprep.subr.mxu0 0.0
    %1762 = vmatpush1.msra.mxu0 %v1222
    %1763 = vmatprep.subr.mxu0 0.0
    %1764 = vmatpush1.msra.mxu0 %v1223
    %1765 = vmatprep.subr.mxu0 0.0
    %1766 = vmatpush1.msra.mxu0 %v1224
    %1767 = vmatprep.subr.mxu0 0.0
    %1768 = vmatpush1.msra.mxu0 %v1225
    %1769 = vmatprep.subr.mxu0 0.0
    %1770 = vmatpush1.msra.mxu0 %v1226
    %1771 = vmatprep.subr.mxu0 0.0
    %1772 = vmatpush1.msra.mxu0 %v1227
    %1773 = vmatprep.subr.mxu0 0.0
    %1774 = vmatpush1.msra.mxu0 %v1228
    %1775 = vmatprep.subr.mxu0 0.0
    %1776 = vmatpush1.msra.mxu0 %v1229
    %1777 = vmatprep.subr.mxu0 0.0
    %1778 = vmatpush1.msra.mxu0 %v1230
    %1779 = vmatprep.subr.mxu0 0.0
    %1780 = vmatpush1.msra.mxu0 %v1231
    %1781 = vmatprep.subr.mxu0 0.0
    %1782 = vmatpush1.msra.mxu0 %v1232
    %1783 = vmatprep.subr.mxu0 0.0
    %1784 = vmatpush1.msra.mxu0 %v1233
    %1785 = vmatprep.mubr.f32.mxu0 %v1171
    %1786 = vmatmul.mubr.f32.gmra.mrb[0].mxu0 %v1170
    %v1787 = vpop.f32.mrb[0].mxu0
    %v1788 = vadd.f32 %v1719, %v1787
    %v1789 = vpop.f32.mrb[0].mxu0
    %1790 = vdwg.mxu0
    %1791 = vmatprep.subr.mxu0 0.0
    %1792 = vmatpush1.msra.mxu0 %v1234
    %1793 = vmatprep.subr.mxu0 0.0
    %1794 = vmatpush1.msra.mxu0 %v1235
    %1795 = vmatprep.subr.mxu0 0.0
    %1796 = vmatpush1.msra.mxu0 %v1236
    %1797 = vmatprep.subr.mxu0 0.0
    %1798 = vmatpush1.msra.mxu0 %v1237
    %1799 = vmatprep.subr.mxu0 0.0
    %1800 = vmatpush1.msra.mxu0 %v1238
    %1801 = vmatprep.subr.mxu0 0.0
    %1802 = vmatpush1.msra.mxu0 %v1239
    %1803 = vmatprep.subr.mxu0 0.0
    %1804 = vmatpush1.msra.mxu0 %v1240
    %1805 = vmatprep.subr.mxu0 0.0
    %1806 = vmatpush1.msra.mxu0 %v1241
    %1807 = vmatprep.subr.mxu0 0.0
    %1808 = vmatpush1.msra.mxu0 %v1242
    %1809 = vmatprep.subr.mxu0 0.0
    %1810 = vmatpush1.msra.mxu0 %v1243
    %1811 = vmatprep.subr.mxu0 0.0
    %1812 = vmatpush1.msra.mxu0 %v1244
    %1813 = vmatprep.subr.mxu0 0.0
    %1814 = vmatpush1.msra.mxu0 %v1245
    %1815 = vmatprep.subr.mxu0 0.0
    %1816 = vmatpush1.msra.mxu0 %v1246
    %1817 = vmatprep.subr.mxu0 0.0
    %1818 = vmatpush1.msra.mxu0 %v1247
    %1819 = vmatprep.subr.mxu0 0.0
    %1820 = vmatpush1.msra.mxu0 %v1248
    %1821 = vmatprep.subr.mxu0 0.0
    %1822 = vmatpush1.msra.mxu0 %v1249
    %1823 = vmatprep.subr.mxu0 0.0
    %1824 = vmatpush1.msra.mxu0 %v1250
    %1825 = vmatprep.subr.mxu0 0.0
    %1826 = vmatpush1.msra.mxu0 %v1251
    %1827 = vmatprep.subr.mxu0 0.0
    %1828 = vmatpush1.msra.mxu0 %v1252
    %1829 = vmatprep.subr.mxu0 0.0
    %1830 = vmatpush1.msra.mxu0 %v1253
    %1831 = vmatprep.subr.mxu0 0.0
    %1832 = vmatpush1.msra.mxu0 %v1254
    %1833 = vmatprep.subr.mxu0 0.0
    %1834 = vmatpush1.msra.mxu0 %v1255
    %1835 = vmatprep.subr.mxu0 0.0
    %1836 = vmatpush1.msra.mxu0 %v1256
    %1837 = vmatprep.subr.mxu0 0.0
    %1838 = vmatpush1.msra.mxu0 %v1257
    %1839 = vmatprep.subr.mxu0 0.0
    %1840 = vmatpush1.msra.mxu0 %v1258
    %1841 = vmatprep.subr.mxu0 0.0
    %1842 = vmatpush1.msra.mxu0 %v1259
    %1843 = vmatprep.subr.mxu0 0.0
    %1844 = vmatpush1.msra.mxu0 %v1260
    %1845 = vmatprep.subr.mxu0 0.0
    %1846 = vmatpush1.msra.mxu0 %v1261
    %1847 = vmatprep.subr.mxu0 0.0
    %1848 = vmatpush1.msra.mxu0 %v1262
    %1849 = vmatprep.subr.mxu0 0.0
    %1850 = vmatpush1.msra.mxu0 %v1263
    %1851 = vmatprep.subr.mxu0 0.0
    %1852 = vmatpush1.msra.mxu0 %v1264
    %1853 = vmatprep.subr.mxu0 0.0
    %1854 = vmatpush1.msra.mxu0 %v1265
    %1855 = vmatprep.mubr.f32.mxu0 %v1173
    %1856 = vmatmul.mubr.f32.gmra.mrb[0].mxu0 %v1172
    %v1857 = vpop.f32.mrb[0].mxu0
    %v1858 = vadd.f32 %v1788, %v1857
    %v1859 = vpop.f32.mrb[0].mxu0
    %1860 = vdwg.mxu0
    %1861 = vmatprep.subr.mxu0 0.0
    %1862 = vmatpush1.msra.mxu0 %v1266
    %1863 = vmatprep.subr.mxu0 0.0
    %1864 = vmatpush1.msra.mxu0 %v1267
    %1865 = vmatprep.subr.mxu0 0.0
    %1866 = vmatpush1.msra.mxu0 %v1268
    %1867 = vmatprep.subr.mxu0 0.0
    %1868 = vmatpush1.msra.mxu0 %v1269
    %1869 = vmatprep.subr.mxu0 0.0
    %1870 = vmatpush1.msra.mxu0 %v1270
    %1871 = vmatprep.subr.mxu0 0.0
    %1872 = vmatpush1.msra.mxu0 %v1271
    %1873 = vmatprep.subr.mxu0 0.0
    %1874 = vmatpush1.msra.mxu0 %v1272
    %1875 = vmatprep.subr.mxu0 0.0
    %1876 = vmatpush1.msra.mxu0 %v1273
    %1877 = vmatprep.subr.mxu0 0.0
    %1878 = vmatpush1.msra.mxu0 %v1274
    %1879 = vmatprep.subr.mxu0 0.0
    %1880 = vmatpush1.msra.mxu0 %v1275
    %1881 = vmatprep.subr.mxu0 0.0
    %1882 = vmatpush1.msra.mxu0 %v1276
    %1883 = vmatprep.subr.mxu0 0.0
    %1884 = vmatpush1.msra.mxu0 %v1277
    %1885 = vmatprep.subr.mxu0 0.0
    %1886 = vmatpush1.msra.mxu0 %v1278
    %1887 = vmatprep.subr.mxu0 0.0
    %1888 = vmatpush1.msra.mxu0 %v1279
    %1889 = vmatprep.subr.mxu0 0.0
    %1890 = vmatpush1.msra.mxu0 %v1280
    %1891 = vmatprep.subr.mxu0 0.0
    %1892 = vmatpush1.msra.mxu0 %v1281
    %1893 = vmatprep.subr.mxu0 0.0
    %1894 = vmatpush1.msra.mxu0 %v1282
    %1895 = vmatprep.subr.mxu0 0.0
    %1896 = vmatpush1.msra.mxu0 %v1283
    %1897 = vmatprep.subr.mxu0 0.0
    %1898 = vmatpush1.msra.mxu0 %v1284
    %1899 = vmatprep.subr.mxu0 0.0
    %1900 = vmatpush1.msra.mxu0 %v1285
    %1901 = vmatprep.subr.mxu0 0.0
    %1902 = vmatpush1.msra.mxu0 %v1286
    %1903 = vmatprep.subr.mxu0 0.0
    %1904 = vmatpush1.msra.mxu0 %v1287
    %1905 = vmatprep.subr.mxu0 0.0
    %1906 = vmatpush1.msra.mxu0 %v1288
    %1907 = vmatprep.subr.mxu0 0.0
    %1908 = vmatpush1.msra.mxu0 %v1289
    %1909 = vmatprep.subr.mxu0 0.0
    %1910 = vmatpush1.msra.mxu0 %v1290
    %1911 = vmatprep.subr.mxu0 0.0
    %1912 = vmatpush1.msra.mxu0 %v1291
    %1913 = vmatprep.subr.mxu0 0.0
    %1914 = vmatpush1.msra.mxu0 %v1292
    %1915 = vmatprep.subr.mxu0 0.0
    %1916 = vmatpush1.msra.mxu0 %v1293
    %1917 = vmatprep.subr.mxu0 0.0
    %1918 = vmatpush1.msra.mxu0 %v1294
    %1919 = vmatprep.subr.mxu0 0.0
    %1920 = vmatpush1.msra.mxu0 %v1295
    %1921 = vmatprep.subr.mxu0 0.0
    %1922 = vmatpush1.msra.mxu0 %v1296
    %1923 = vmatprep.subr.mxu0 0.0
    %1924 = vmatpush1.msra.mxu0 %v1297
    %1925 = vmatprep.mubr.f32.mxu0 %v1175
    %1926 = vmatmul.mubr.f32.gmra.mrb[0].mxu0 %v1174
    %v1927 = vpop.f32.mrb[0].mxu0
    %v1928 = vadd.f32 %v1858, %v1927
    %v1929 = vpop.f32.mrb[0].mxu0
    %1930 = vdwg.mxu0
    %1931 = vmatprep.subr.mxu0 0.0
    %1932 = vmatpush1.msra.mxu0 %v1298
    %1933 = vmatprep.subr.mxu0 0.0
    %1934 = vmatpush1.msra.mxu0 %v1299
    %1935 = vmatprep.subr.mxu0 0.0
    %1936 = vmatpush1.msra.mxu0 %v1300
    %1937 = vmatprep.subr.mxu0 0.0
    %1938 = vmatpush1.msra.mxu0 %v1301
    %1939 = vmatprep.subr.mxu0 0.0
    %1940 = vmatpush1.msra.mxu0 %v1302
    %1941 = vmatprep.subr.mxu0 0.0
    %1942 = vmatpush1.msra.mxu0 %v1303
    %1943 = vmatprep.subr.mxu0 0.0
    %1944 = vmatpush1.msra.mxu0 %v1304
    %1945 = vmatprep.subr.mxu0 0.0
    %1946 = vmatpush1.msra.mxu0 %v1305
    %1947 = vmatprep.subr.mxu0 0.0
    %1948 = vmatpush1.msra.mxu0 %v1306
    %1949 = vmatprep.subr.mxu0 0.0
    %1950 = vmatpush1.msra.mxu0 %v1307
    %1951 = vmatprep.subr.mxu0 0.0
    %1952 = vmatpush1.msra.mxu0 %v1308
    %1953 = vmatprep.subr.mxu0 0.0
    %1954 = vmatpush1.msra.mxu0 %v1309
    %1955 = vmatprep.subr.mxu0 0.0
    %1956 = vmatpush1.msra.mxu0 %v1310
    %1957 = vmatprep.subr.mxu0 0.0
    %1958 = vmatpush1.msra.mxu0 %v1311
    %1959 = vmatprep.subr.mxu0 0.0
    %1960 = vmatpush1.msra.mxu0 %v1312
    %1961 = vmatprep.subr.mxu0 0.0
    %1962 = vmatpush1.msra.mxu0 %v1313
    %1963 = vmatprep.subr.mxu0 0.0
    %1964 = vmatpush1.msra.mxu0 %v1314
    %1965 = vmatprep.subr.mxu0 0.0
    %1966 = vmatpush1.msra.mxu0 %v1315
    %1967 = vmatprep.subr.mxu0 0.0
    %1968 = vmatpush1.msra.mxu0 %v1316
    %1969 = vmatprep.subr.mxu0 0.0
    %1970 = vmatpush1.msra.mxu0 %v1317
    %1971 = vmatprep.subr.mxu0 0.0
    %1972 = vmatpush1.msra.mxu0 %v1318
    %1973 = vmatprep.subr.mxu0 0.0
    %1974 = vmatpush1.msra.mxu0 %v1319
    %1975 = vmatprep.subr.mxu0 0.0
    %1976 = vmatpush1.msra.mxu0 %v1320
    %1977 = vmatprep.subr.mxu0 0.0
    %1978 = vmatpush1.msra.mxu0 %v1321
    %1979 = vmatprep.subr.mxu0 0.0
    %1980 = vmatpush1.msra.mxu0 %v1322
    %1981 = vmatprep.subr.mxu0 0.0
    %1982 = vmatpush1.msra.mxu0 %v1323
    %1983 = vmatprep.subr.mxu0 0.0
    %1984 = vmatpush1.msra.mxu0 %v1324
    %1985 = vmatprep.subr.mxu0 0.0
    %1986 = vmatpush1.msra.mxu0 %v1325
    %1987 = vmatprep.subr.mxu0 0.0
    %1988 = vmatpush1.msra.mxu0 %v1326
    %1989 = vmatprep.subr.mxu0 0.0
    %1990 = vmatpush1.msra.mxu0 %v1327
    %1991 = vmatprep.subr.mxu0 0.0
    %1992 = vmatpush1.msra.mxu0 %v1328
    %1993 = vmatprep.subr.mxu0 0.0
    %1994 = vmatpush1.msra.mxu0 %v1329
    %1995 = vmatprep.mubr.f32.mxu0 %v1177
    %1996 = vmatmul.mubr.f32.gmra.mrb[0].mxu0 %v1176
    %v1997 = vpop.f32.mrb[0].mxu0
    %v1998 = vadd.f32 %v1928, %v1997
    %v1999 = vpop.f32.mrb[0].mxu0
    %2000 = vdwg.mxu0
    %2001 = vmatprep.subr.mxu0 0.0
    %2002 = vmatpush1.msra.mxu0 %v1330
    %2003 = vmatprep.subr.mxu0 0.0
    %2004 = vmatpush1.msra.mxu0 %v1331
    %2005 = vmatprep.subr.mxu0 0.0
    %2006 = vmatpush1.msra.mxu0 %v1332
    %2007 = vmatprep.subr.mxu0 0.0
    %2008 = vmatpush1.msra.mxu0 %v1333
    %2009 = vmatprep.subr.mxu0 0.0
    %2010 = vmatpush1.msra.mxu0 %v1334
    %2011 = vmatprep.subr.mxu0 0.0
    %2012 = vmatpush1.msra.mxu0 %v1335
    %2013 = vmatprep.subr.mxu0 0.0
    %2014 = vmatpush1.msra.mxu0 %v1336
    %2015 = vmatprep.subr.mxu0 0.0
    %2016 = vmatpush1.msra.mxu0 %v1337
    %2017 = vmatprep.subr.mxu0 0.0
    %2018 = vmatpush1.msra.mxu0 %v1338
    %2019 = vmatprep.subr.mxu0 0.0
    %2020 = vmatpush1.msra.mxu0 %v1339
    %2021 = vmatprep.subr.mxu0 0.0
    %2022 = vmatpush1.msra.mxu0 %v1340
    %2023 = vmatprep.subr.mxu0 0.0
    %2024 = vmatpush1.msra.mxu0 %v1341
    %2025 = vmatprep.subr.mxu0 0.0
    %2026 = vmatpush1.msra.mxu0 %v1342
    %2027 = vmatprep.subr.mxu0 0.0
    %2028 = vmatpush1.msra.mxu0 %v1343
    %2029 = vmatprep.subr.mxu0 0.0
    %2030 = vmatpush1.msra.mxu0 %v1344
    %2031 = vmatprep.subr.mxu0 0.0
    %2032 = vmatpush1.msra.mxu0 %v1345
    %2033 = vmatprep.subr.mxu0 0.0
    %2034 = vmatpush1.msra.mxu0 %v1346
    %2035 = vmatprep.subr.mxu0 0.0
    %2036 = vmatpush1.msra.mxu0 %v1347
    %2037 = vmatprep.subr.mxu0 0.0
    %2038 = vmatpush1.msra.mxu0 %v1348
    %2039 = vmatprep.subr.mxu0 0.0
    %2040 = vmatpush1.msra.mxu0 %v1349
    %2041 = vmatprep.subr.mxu0 0.0
    %2042 = vmatpush1.msra.mxu0 %v1350
    %2043 = vmatprep.subr.mxu0 0.0
    %2044 = vmatpush1.msra.mxu0 %v1351
    %2045 = vmatprep.subr.mxu0 0.0
    %2046 = vmatpush1.msra.mxu0 %v1352
    %2047 = vmatprep.subr.mxu0 0.0
    %2048 = vmatpush1.msra.mxu0 %v1353
    %2049 = vmatprep.subr.mxu0 0.0
    %2050 = vmatpush1.msra.mxu0 %v1354
    %2051 = vmatprep.subr.mxu0 0.0
    %2052 = vmatpush1.msra.mxu0 %v1355
    %2053 = vmatprep.subr.mxu0 0.0
    %2054 = vmatpush1.msra.mxu0 %v1356
    %2055 = vmatprep.subr.mxu0 0.0
    %2056 = vmatpush1.msra.mxu0 %v1357
    %2057 = vmatprep.subr.mxu0 0.0
    %2058 = vmatpush1.msra.mxu0 %v1358
    %2059 = vmatprep.subr.mxu0 0.0
    %2060 = vmatpush1.msra.mxu0 %v1359
    %2061 = vmatprep.subr.mxu0 0.0
    %2062 = vmatpush1.msra.mxu0 %v1360
    %2063 = vmatprep.subr.mxu0 0.0
    %2064 = vmatpush1.msra.mxu0 %v1361
    %2065 = vmatprep.mubr.f32.mxu0 %v1179
    %2066 = vmatmul.mubr.f32.gmra.mrb[0].mxu0 %v1178
    %v2067 = vpop.f32.mrb[0].mxu0
    %v2068 = vadd.f32 %v1998, %v2067
    %v2069 = vpop.f32.mrb[0].mxu0
    %2070 = vdwg.mxu0
    %2071 = vmatprep.subr.mxu0 0.0
    %2072 = vmatpush1.msra.mxu0 %v1362
    %2073 = vmatprep.subr.mxu0 0.0
    %2074 = vmatpush1.msra.mxu0 %v1363
    %2075 = vmatprep.subr.mxu0 0.0
    %2076 = vmatpush1.msra.mxu0 %v1364
    %2077 = vmatprep.subr.mxu0 0.0
    %2078 = vmatpush1.msra.mxu0 %v1365
    %2079 = vmatprep.subr.mxu0 0.0
    %2080 = vmatpush1.msra.mxu0 %v1366
    %2081 = vmatprep.subr.mxu0 0.0
    %2082 = vmatpush1.msra.mxu0 %v1367
    %2083 = vmatprep.subr.mxu0 0.0
    %2084 = vmatpush1.msra.mxu0 %v1368
    %2085 = vmatprep.subr.mxu0 0.0
    %2086 = vmatpush1.msra.mxu0 %v1369
    %2087 = vmatprep.subr.mxu0 0.0
    %2088 = vmatpush1.msra.mxu0 %v1370
    %2089 = vmatprep.subr.mxu0 0.0
    %2090 = vmatpush1.msra.mxu0 %v1371
    %2091 = vmatprep.subr.mxu0 0.0
    %2092 = vmatpush1.msra.mxu0 %v1372
    %2093 = vmatprep.subr.mxu0 0.0
    %2094 = vmatpush1.msra.mxu0 %v1373
    %2095 = vmatprep.subr.mxu0 0.0
    %2096 = vmatpush1.msra.mxu0 %v1374
    %2097 = vmatprep.subr.mxu0 0.0
    %2098 = vmatpush1.msra.mxu0 %v1375
    %2099 = vmatprep.subr.mxu0 0.0
    %2100 = vmatpush1.msra.mxu0 %v1376
    %2101 = vmatprep.subr.mxu0 0.0
    %2102 = vmatpush1.msra.mxu0 %v1377
    %2103 = vmatprep.subr.mxu0 0.0
    %2104 = vmatpush1.msra.mxu0 %v1378
    %2105 = vmatprep.subr.mxu0 0.0
    %2106 = vmatpush1.msra.mxu0 %v1379
    %2107 = vmatprep.subr.mxu0 0.0
    %2108 = vmatpush1.msra.mxu0 %v1380
    %2109 = vmatprep.subr.mxu0 0.0
    %2110 = vmatpush1.msra.mxu0 %v1381
    %2111 = vmatprep.subr.mxu0 0.0
    %2112 = vmatpush1.msra.mxu0 %v1382
    %2113 = vmatprep.subr.mxu0 0.0
    %2114 = vmatpush1.msra.mxu0 %v1383
    %2115 = vmatprep.subr.mxu0 0.0
    %2116 = vmatpush1.msra.mxu0 %v1384
    %2117 = vmatprep.subr.mxu0 0.0
    %2118 = vmatpush1.msra.mxu0 %v1385
    %2119 = vmatprep.subr.mxu0 0.0
    %2120 = vmatpush1.msra.mxu0 %v1386
    %2121 = vmatprep.subr.mxu0 0.0
    %2122 = vmatpush1.msra.mxu0 %v1387
    %2123 = vmatprep.subr.mxu0 0.0
    %2124 = vmatpush1.msra.mxu0 %v1388
    %2125 = vmatprep.subr.mxu0 0.0
    %2126 = vmatpush1.msra.mxu0 %v1389
    %2127 = vmatprep.subr.mxu0 0.0
    %2128 = vmatpush1.msra.mxu0 %v1390
    %2129 = vmatprep.subr.mxu0 0.0
    %2130 = vmatpush1.msra.mxu0 %v1391
    %2131 = vmatprep.subr.mxu0 0.0
    %2132 = vmatpush1.msra.mxu0 %v1392
    %2133 = vmatprep.subr.mxu0 0.0
    %2134 = vmatpush1.msra.mxu0 %v1393
    %2135 = vmatprep.mubr.f32.mxu0 %v1181
    %2136 = vmatmul.mubr.f32.gmra.mrb[0].mxu0 %v1180
    %v2137 = vpop.f32.mrb[0].mxu0
    %v2138 = vadd.f32 %v2068, %v2137
    %v2139 = vpop.f32.mrb[0].mxu0
    %2140 = vdwg.mxu0
    %2141 = vmatprep.subr.mxu0 0.0
    %2142 = vmatpush1.msra.mxu0 %v1394
    %2143 = vmatprep.subr.mxu0 0.0
    %2144 = vmatpush1.msra.mxu0 %v1395
    %2145 = vmatprep.subr.mxu0 0.0
    %2146 = vmatpush1.msra.mxu0 %v1396
    %2147 = vmatprep.subr.mxu0 0.0
    %2148 = vmatpush1.msra.mxu0 %v1397
    %2149 = vmatprep.subr.mxu0 0.0
    %2150 = vmatpush1.msra.mxu0 %v1398
    %2151 = vmatprep.subr.mxu0 0.0
    %2152 = vmatpush1.msra.mxu0 %v1399
    %2153 = vmatprep.subr.mxu0 0.0
    %2154 = vmatpush1.msra.mxu0 %v1400
    %2155 = vmatprep.subr.mxu0 0.0
    %2156 = vmatpush1.msra.mxu0 %v1401
    %2157 = vmatprep.subr.mxu0 0.0
    %2158 = vmatpush1.msra.mxu0 %v1402
    %2159 = vmatprep.subr.mxu0 0.0
    %2160 = vmatpush1.msra.mxu0 %v1403
    %2161 = vmatprep.subr.mxu0 0.0
    %2162 = vmatpush1.msra.mxu0 %v1404
    %2163 = vmatprep.subr.mxu0 0.0
    %2164 = vmatpush1.msra.mxu0 %v1405
    %2165 = vmatprep.subr.mxu0 0.0
    %2166 = vmatpush1.msra.mxu0 %v1406
    %2167 = vmatprep.subr.mxu0 0.0
    %2168 = vmatpush1.msra.mxu0 %v1407
    %2169 = vmatprep.subr.mxu0 0.0
    %2170 = vmatpush1.msra.mxu0 %v1408
    %2171 = vmatprep.subr.mxu0 0.0
    %2172 = vmatpush1.msra.mxu0 %v1409
    %2173 = vmatprep.subr.mxu0 0.0
    %2174 = vmatpush1.msra.mxu0 %v1410
    %2175 = vmatprep.subr.mxu0 0.0
    %2176 = vmatpush1.msra.mxu0 %v1411
    %2177 = vmatprep.subr.mxu0 0.0
    %2178 = vmatpush1.msra.mxu0 %v1412
    %2179 = vmatprep.subr.mxu0 0.0
    %2180 = vmatpush1.msra.mxu0 %v1413
    %2181 = vmatprep.subr.mxu0 0.0
    %2182 = vmatpush1.msra.mxu0 %v1414
    %2183 = vmatprep.subr.mxu0 0.0
    %2184 = vmatpush1.msra.mxu0 %v1415
    %2185 = vmatprep.subr.mxu0 0.0
    %2186 = vmatpush1.msra.mxu0 %v1416
    %2187 = vmatprep.subr.mxu0 0.0
    %2188 = vmatpush1.msra.mxu0 %v1417
    %2189 = vmatprep.subr.mxu0 0.0
    %2190 = vmatpush1.msra.mxu0 %v1418
    %2191 = vmatprep.subr.mxu0 0.0
    %2192 = vmatpush1.msra.mxu0 %v1419
    %2193 = vmatprep.subr.mxu0 0.0
    %2194 = vmatpush1.msra.mxu0 %v1420
    %2195 = vmatprep.subr.mxu0 0.0
    %2196 = vmatpush1.msra.mxu0 %v1421
    %2197 = vmatprep.subr.mxu0 0.0
    %2198 = vmatpush1.msra.mxu0 %v1422
    %2199 = vmatprep.subr.mxu0 0.0
    %2200 = vmatpush1.msra.mxu0 %v1423
    %2201 = vmatprep.subr.mxu0 0.0
    %2202 = vmatpush1.msra.mxu0 %v1424
    %2203 = vmatprep.subr.mxu0 0.0
    %2204 = vmatpush1.msra.mxu0 %v1425
    %2205 = vmatprep.mubr.f32.mxu0 %v1183
    %2206 = vmatmul.mubr.f32.gmra.mrb[0].mxu0 %v1182
    %v2207 = vpop.f32.mrb[0].mxu0
    %v2208 = vadd.f32 %v2138, %v2207
    %v2209 = vpop.f32.mrb[0].mxu0
    %2210 = vdwg.mxu0
    %2211 = vmatprep.subr.mxu0 0.0
    %2212 = vmatpush1.msra.mxu0 %v1426
    %2213 = vmatprep.subr.mxu0 0.0
    %2214 = vmatpush1.msra.mxu0 %v1427
    %2215 = vmatprep.subr.mxu0 0.0
    %2216 = vmatpush1.msra.mxu0 %v1428
    %2217 = vmatprep.subr.mxu0 0.0
    %2218 = vmatpush1.msra.mxu0 %v1429
    %2219 = vmatprep.subr.mxu0 0.0
    %2220 = vmatpush1.msra.mxu0 %v1430
    %2221 = vmatprep.subr.mxu0 0.0
    %2222 = vmatpush1.msra.mxu0 %v1431
    %2223 = vmatprep.subr.mxu0 0.0
    %2224 = vmatpush1.msra.mxu0 %v1432
    %2225 = vmatprep.subr.mxu0 0.0
    %2226 = vmatpush1.msra.mxu0 %v1433
    %2227 = vmatprep.subr.mxu0 0.0
    %2228 = vmatpush1.msra.mxu0 %v1434
    %2229 = vmatprep.subr.mxu0 0.0
    %2230 = vmatpush1.msra.mxu0 %v1435
    %2231 = vmatprep.subr.mxu0 0.0
    %2232 = vmatpush1.msra.mxu0 %v1436
    %2233 = vmatprep.subr.mxu0 0.0
    %2234 = vmatpush1.msra.mxu0 %v1437
    %2235 = vmatprep.subr.mxu0 0.0
    %2236 = vmatpush1.msra.mxu0 %v1438
    %2237 = vmatprep.subr.mxu0 0.0
    %2238 = vmatpush1.msra.mxu0 %v1439
    %2239 = vmatprep.subr.mxu0 0.0
    %2240 = vmatpush1.msra.mxu0 %v1440
    %2241 = vmatprep.subr.mxu0 0.0
    %2242 = vmatpush1.msra.mxu0 %v1441
    %2243 = vmatprep.subr.mxu0 0.0
    %2244 = vmatpush1.msra.mxu0 %v1442
    %2245 = vmatprep.subr.mxu0 0.0
    %2246 = vmatpush1.msra.mxu0 %v1443
    %2247 = vmatprep.subr.mxu0 0.0
    %2248 = vmatpush1.msra.mxu0 %v1444
    %2249 = vmatprep.subr.mxu0 0.0
    %2250 = vmatpush1.msra.mxu0 %v1445
    %2251 = vmatprep.subr.mxu0 0.0
    %2252 = vmatpush1.msra.mxu0 %v1446
    %2253 = vmatprep.subr.mxu0 0.0
    %2254 = vmatpush1.msra.mxu0 %v1447
    %2255 = vmatprep.subr.mxu0 0.0
    %2256 = vmatpush1.msra.mxu0 %v1448
    %2257 = vmatprep.subr.mxu0 0.0
    %2258 = vmatpush1.msra.mxu0 %v1449
    %2259 = vmatprep.subr.mxu0 0.0
    %2260 = vmatpush1.msra.mxu0 %v1450
    %2261 = vmatprep.subr.mxu0 0.0
    %2262 = vmatpush1.msra.mxu0 %v1451
    %2263 = vmatprep.subr.mxu0 0.0
    %2264 = vmatpush1.msra.mxu0 %v1452
    %2265 = vmatprep.subr.mxu0 0.0
    %2266 = vmatpush1.msra.mxu0 %v1453
    %2267 = vmatprep.subr.mxu0 0.0
    %2268 = vmatpush1.msra.mxu0 %v1454
    %2269 = vmatprep.subr.mxu0 0.0
    %2270 = vmatpush1.msra.mxu0 %v1455
    %2271 = vmatprep.subr.mxu0 0.0
    %2272 = vmatpush1.msra.mxu0 %v1456
    %2273 = vmatprep.subr.mxu0 0.0
    %2274 = vmatpush1.msra.mxu0 %v1457
    %2275 = vmatprep.mubr.f32.mxu0 %v1185
    %2276 = vmatmul.mubr.f32.gmra.mrb[0].mxu0 %v1184
    %v2277 = vpop.f32.mrb[0].mxu0
    %v2278 = vadd.f32 %v2208, %v2277
    %v2279 = vpop.f32.mrb[0].mxu0
    %2280 = vdwg.mxu0
    %2281 = vmatprep.subr.mxu0 0.0
    %2282 = vmatpush1.msra.mxu0 %v1458
    %2283 = vmatprep.subr.mxu0 0.0
    %2284 = vmatpush1.msra.mxu0 %v1459
    %2285 = vmatprep.subr.mxu0 0.0
    %2286 = vmatpush1.msra.mxu0 %v1460
    %2287 = vmatprep.subr.mxu0 0.0
    %2288 = vmatpush1.msra.mxu0 %v1461
    %2289 = vmatprep.subr.mxu0 0.0
    %2290 = vmatpush1.msra.mxu0 %v1462
    %2291 = vmatprep.subr.mxu0 0.0
    %2292 = vmatpush1.msra.mxu0 %v1463
    %2293 = vmatprep.subr.mxu0 0.0
    %2294 = vmatpush1.msra.mxu0 %v1464
    %2295 = vmatprep.subr.mxu0 0.0
    %2296 = vmatpush1.msra.mxu0 %v1465
    %2297 = vmatprep.subr.mxu0 0.0
    %2298 = vmatpush1.msra.mxu0 %v1466
    %2299 = vmatprep.subr.mxu0 0.0
    %2300 = vmatpush1.msra.mxu0 %v1467
    %2301 = vmatprep.subr.mxu0 0.0
    %2302 = vmatpush1.msra.mxu0 %v1468
    %2303 = vmatprep.subr.mxu0 0.0
    %2304 = vmatpush1.msra.mxu0 %v1469
    %2305 = vmatprep.subr.mxu0 0.0
    %2306 = vmatpush1.msra.mxu0 %v1470
    %2307 = vmatprep.subr.mxu0 0.0
    %2308 = vmatpush1.msra.mxu0 %v1471
    %2309 = vmatprep.subr.mxu0 0.0
    %2310 = vmatpush1.msra.mxu0 %v1472
    %2311 = vmatprep.subr.mxu0 0.0
    %2312 = vmatpush1.msra.mxu0 %v1473
    %2313 = vmatprep.subr.mxu0 0.0
    %2314 = vmatpush1.msra.mxu0 %v1474
    %2315 = vmatprep.subr.mxu0 0.0
    %2316 = vmatpush1.msra.mxu0 %v1475
    %2317 = vmatprep.subr.mxu0 0.0
    %2318 = vmatpush1.msra.mxu0 %v1476
    %2319 = vmatprep.subr.mxu0 0.0
    %2320 = vmatpush1.msra.mxu0 %v1477
    %2321 = vmatprep.subr.mxu0 0.0
    %2322 = vmatpush1.msra.mxu0 %v1478
    %2323 = vmatprep.subr.mxu0 0.0
    %2324 = vmatpush1.msra.mxu0 %v1479
    %2325 = vmatprep.subr.mxu0 0.0
    %2326 = vmatpush1.msra.mxu0 %v1480
    %2327 = vmatprep.subr.mxu0 0.0
    %2328 = vmatpush1.msra.mxu0 %v1481
    %2329 = vmatprep.subr.mxu0 0.0
    %2330 = vmatpush1.msra.mxu0 %v1482
    %2331 = vmatprep.subr.mxu0 0.0
    %2332 = vmatpush1.msra.mxu0 %v1483
    %2333 = vmatprep.subr.mxu0 0.0
    %2334 = vmatpush1.msra.mxu0 %v1484
    %2335 = vmatprep.subr.mxu0 0.0
    %2336 = vmatpush1.msra.mxu0 %v1485
    %2337 = vmatprep.subr.mxu0 0.0
    %2338 = vmatpush1.msra.mxu0 %v1486
    %2339 = vmatprep.subr.mxu0 0.0
    %2340 = vmatpush1.msra.mxu0 %v1487
    %2341 = vmatprep.subr.mxu0 0.0
    %2342 = vmatpush1.msra.mxu0 %v1488
    %2343 = vmatprep.subr.mxu0 0.0
    %2344 = vmatpush1.msra.mxu0 %v1489
    %2345 = vmatprep.mubr.f32.mxu0 %v1187
    %2346 = vmatmul.mubr.f32.gmra.mrb[0].mxu0 %v1186
    %v2347 = vpop.f32.mrb[0].mxu0
    %v2348 = vadd.f32 %v2278, %v2347
    %v2349 = vpop.f32.mrb[0].mxu0
    %2350 = vdwg.mxu0
    %2351 = vmatprep.subr.mxu0 0.0
    %2352 = vmatpush1.msra.mxu0 %v1490
    %2353 = vmatprep.subr.mxu0 0.0
    %2354 = vmatpush1.msra.mxu0 %v1491
    %2355 = vmatprep.subr.mxu0 0.0
    %2356 = vmatpush1.msra.mxu0 %v1492
    %2357 = vmatprep.subr.mxu0 0.0
    %2358 = vmatpush1.msra.mxu0 %v1493
    %2359 = vmatprep.subr.mxu0 0.0
    %2360 = vmatpush1.msra.mxu0 %v1494
    %2361 = vmatprep.subr.mxu0 0.0
    %2362 = vmatpush1.msra.mxu0 %v1495
    %2363 = vmatprep.subr.mxu0 0.0
    %2364 = vmatpush1.msra.mxu0 %v1496
    %2365 = vmatprep.subr.mxu0 0.0
    %2366 = vmatpush1.msra.mxu0 %v1497
    %2367 = vmatprep.subr.mxu0 0.0
    %2368 = vmatpush1.msra.mxu0 %v1498
    %2369 = vmatprep.subr.mxu0 0.0
    %2370 = vmatpush1.msra.mxu0 %v1499
    %2371 = vmatprep.subr.mxu0 0.0
    %2372 = vmatpush1.msra.mxu0 %v1500
    %2373 = vmatprep.subr.mxu0 0.0
    %2374 = vmatpush1.msra.mxu0 %v1501
    %2375 = vmatprep.subr.mxu0 0.0
    %2376 = vmatpush1.msra.mxu0 %v1502
    %2377 = vmatprep.subr.mxu0 0.0
    %2378 = vmatpush1.msra.mxu0 %v1503
    %2379 = vmatprep.subr.mxu0 0.0
    %2380 = vmatpush1.msra.mxu0 %v1504
    %2381 = vmatprep.subr.mxu0 0.0
    %2382 = vmatpush1.msra.mxu0 %v1505
    %2383 = vmatprep.subr.mxu0 0.0
    %2384 = vmatpush1.msra.mxu0 %v1506
    %2385 = vmatprep.subr.mxu0 0.0
    %2386 = vmatpush1.msra.mxu0 %v1507
    %2387 = vmatprep.subr.mxu0 0.0
    %2388 = vmatpush1.msra.mxu0 %v1508
    %2389 = vmatprep.subr.mxu0 0.0
    %2390 = vmatpush1.msra.mxu0 %v1509
    %2391 = vmatprep.subr.mxu0 0.0
    %2392 = vmatpush1.msra.mxu0 %v1510
    %2393 = vmatprep.subr.mxu0 0.0
    %2394 = vmatpush1.msra.mxu0 %v1511
    %2395 = vmatprep.subr.mxu0 0.0
    %2396 = vmatpush1.msra.mxu0 %v1512
    %2397 = vmatprep.subr.mxu0 0.0
    %2398 = vmatpush1.msra.mxu0 %v1513
    %2399 = vmatprep.subr.mxu0 0.0
    %2400 = vmatpush1.msra.mxu0 %v1514
    %2401 = vmatprep.subr.mxu0 0.0
    %2402 = vmatpush1.msra.mxu0 %v1515
    %2403 = vmatprep.subr.mxu0 0.0
    %2404 = vmatpush1.msra.mxu0 %v1516
    %2405 = vmatprep.subr.mxu0 0.0
    %2406 = vmatpush1.msra.mxu0 %v1517
    %2407 = vmatprep.subr.mxu0 0.0
    %2408 = vmatpush1.msra.mxu0 %v1518
    %2409 = vmatprep.subr.mxu0 0.0
    %2410 = vmatpush1.msra.mxu0 %v1519
    %2411 = vmatprep.subr.mxu0 0.0
    %2412 = vmatpush1.msra.mxu0 %v1520
    %2413 = vmatprep.subr.mxu0 0.0
    %2414 = vmatpush1.msra.mxu0 %v1521
    %2415 = vmatprep.mubr.f32.mxu0 %v1189
    %2416 = vmatmul.mubr.f32.gmra.mrb[0].mxu0 %v1188
    %v2417 = vpop.f32.mrb[0].mxu0
    %v2418 = vadd.f32 %v2348, %v2417
    %v2419 = vpop.f32.mrb[0].mxu0
    %2420 = vdwg.mxu0
    %2421 = vmatprep.subr.mxu0 0.0
    %2422 = vmatpush1.msra.mxu0 %v1522
    %2423 = vmatprep.subr.mxu0 0.0
    %2424 = vmatpush1.msra.mxu0 %v1523
    %2425 = vmatprep.subr.mxu0 0.0
    %2426 = vmatpush1.msra.mxu0 %v1524
    %2427 = vmatprep.subr.mxu0 0.0
    %2428 = vmatpush1.msra.mxu0 %v1525
    %2429 = vmatprep.subr.mxu0 0.0
    %2430 = vmatpush1.msra.mxu0 %v1526
    %2431 = vmatprep.subr.mxu0 0.0
    %2432 = vmatpush1.msra.mxu0 %v1527
    %2433 = vmatprep.subr.mxu0 0.0
    %2434 = vmatpush1.msra.mxu0 %v1528
    %2435 = vmatprep.subr.mxu0 0.0
    %2436 = vmatpush1.msra.mxu0 %v1529
    %2437 = vmatprep.subr.mxu0 0.0
    %2438 = vmatpush1.msra.mxu0 %v1530
    %2439 = vmatprep.subr.mxu0 0.0
    %2440 = vmatpush1.msra.mxu0 %v1531
    %2441 = vmatprep.subr.mxu0 0.0
    %2442 = vmatpush1.msra.mxu0 %v1532
    %2443 = vmatprep.subr.mxu0 0.0
    %2444 = vmatpush1.msra.mxu0 %v1533
    %2445 = vmatprep.subr.mxu0 0.0
    %2446 = vmatpush1.msra.mxu0 %v1534
    %2447 = vmatprep.subr.mxu0 0.0
    %2448 = vmatpush1.msra.mxu0 %v1535
    %2449 = vmatprep.subr.mxu0 0.0
    %2450 = vmatpush1.msra.mxu0 %v1536
    %2451 = vmatprep.subr.mxu0 0.0
    %2452 = vmatpush1.msra.mxu0 %v1537
    %2453 = vmatprep.subr.mxu0 0.0
    %2454 = vmatpush1.msra.mxu0 %v1538
    %2455 = vmatprep.subr.mxu0 0.0
    %2456 = vmatpush1.msra.mxu0 %v1539
    %2457 = vmatprep.subr.mxu0 0.0
    %2458 = vmatpush1.msra.mxu0 %v1540
    %2459 = vmatprep.subr.mxu0 0.0
    %2460 = vmatpush1.msra.mxu0 %v1541
    %2461 = vmatprep.subr.mxu0 0.0
    %2462 = vmatpush1.msra.mxu0 %v1542
    %2463 = vmatprep.subr.mxu0 0.0
    %2464 = vmatpush1.msra.mxu0 %v1543
    %2465 = vmatprep.subr.mxu0 0.0
    %2466 = vmatpush1.msra.mxu0 %v1544
    %2467 = vmatprep.subr.mxu0 0.0
    %2468 = vmatpush1.msra.mxu0 %v1545
    %2469 = vmatprep.subr.mxu0 0.0
    %2470 = vmatpush1.msra.mxu0 %v1546
    %2471 = vmatprep.subr.mxu0 0.0
    %2472 = vmatpush1.msra.mxu0 %v1547
    %2473 = vmatprep.subr.mxu0 0.0
    %2474 = vmatpush1.msra.mxu0 %v1548
    %2475 = vmatprep.subr.mxu0 0.0
    %2476 = vmatpush1.msra.mxu0 %v1549
    %2477 = vmatprep.subr.mxu0 0.0
    %2478 = vmatpush1.msra.mxu0 %v1550
    %2479 = vmatprep.subr.mxu0 0.0
    %2480 = vmatpush1.msra.mxu0 %v1551
    %2481 = vmatprep.subr.mxu0 0.0
    %2482 = vmatpush1.msra.mxu0 %v1552
    %2483 = vmatprep.subr.mxu0 0.0
    %2484 = vmatpush1.msra.mxu0 %v1553
    %2485 = vmatprep.mubr.f32.mxu0 %v1191
    %2486 = vmatmul.mubr.f32.gmra.mrb[0].mxu0 %v1190
    %v2487 = vpop.f32.mrb[0].mxu0
    %v2488 = vadd.f32 %v2418, %v2487
    %v2489 = vpop.f32.mrb[0].mxu0
    %2490 = vdwg.mxu0
    %2491 = vmatprep.subr.mxu0 0.0
    %2492 = vmatpush1.msra.mxu0 %v1554
    %2493 = vmatprep.subr.mxu0 0.0
    %2494 = vmatpush1.msra.mxu0 %v1555
    %2495 = vmatprep.subr.mxu0 0.0
    %2496 = vmatpush1.msra.mxu0 %v1556
    %2497 = vmatprep.subr.mxu0 0.0
    %2498 = vmatpush1.msra.mxu0 %v1557
    %2499 = vmatprep.subr.mxu0 0.0
    %2500 = vmatpush1.msra.mxu0 %v1558
    %2501 = vmatprep.subr.mxu0 0.0
    %2502 = vmatpush1.msra.mxu0 %v1559
    %2503 = vmatprep.subr.mxu0 0.0
    %2504 = vmatpush1.msra.mxu0 %v1560
    %2505 = vmatprep.subr.mxu0 0.0
    %2506 = vmatpush1.msra.mxu0 %v1561
    %2507 = vmatprep.subr.mxu0 0.0
    %2508 = vmatpush1.msra.mxu0 %v1562
    %2509 = vmatprep.subr.mxu0 0.0
    %2510 = vmatpush1.msra.mxu0 %v1563
    %2511 = vmatprep.subr.mxu0 0.0
    %2512 = vmatpush1.msra.mxu0 %v1564
    %2513 = vmatprep.subr.mxu0 0.0
    %2514 = vmatpush1.msra.mxu0 %v1565
    %2515 = vmatprep.subr.mxu0 0.0
    %2516 = vmatpush1.msra.mxu0 %v1566
    %2517 = vmatprep.subr.mxu0 0.0
    %2518 = vmatpush1.msra.mxu0 %v1567
    %2519 = vmatprep.subr.mxu0 0.0
    %2520 = vmatpush1.msra.mxu0 %v1568
    %2521 = vmatprep.subr.mxu0 0.0
    %2522 = vmatpush1.msra.mxu0 %v1569
    %2523 = vmatprep.subr.mxu0 0.0
    %2524 = vmatpush1.msra.mxu0 %v1570
    %2525 = vmatprep.subr.mxu0 0.0
    %2526 = vmatpush1.msra.mxu0 %v1571
    %2527 = vmatprep.subr.mxu0 0.0
    %2528 = vmatpush1.msra.mxu0 %v1572
    %2529 = vmatprep.subr.mxu0 0.0
    %2530 = vmatpush1.msra.mxu0 %v1573
    %2531 = vmatprep.subr.mxu0 0.0
    %2532 = vmatpush1.msra.mxu0 %v1574
    %2533 = vmatprep.subr.mxu0 0.0
    %2534 = vmatpush1.msra.mxu0 %v1575
    %2535 = vmatprep.subr.mxu0 0.0
    %2536 = vmatpush1.msra.mxu0 %v1576
    %2537 = vmatprep.subr.mxu0 0.0
    %2538 = vmatpush1.msra.mxu0 %v1577
    %2539 = vmatprep.subr.mxu0 0.0
    %2540 = vmatpush1.msra.mxu0 %v1578
    %2541 = vmatprep.subr.mxu0 0.0
    %2542 = vmatpush1.msra.mxu0 %v1579
    %2543 = vmatprep.subr.mxu0 0.0
    %2544 = vmatpush1.msra.mxu0 %v1580
    %2545 = vmatprep.subr.mxu0 0.0
    %2546 = vmatpush1.msra.mxu0 %v1581
    %2547 = vmatprep.subr.mxu0 0.0
    %2548 = vmatpush1.msra.mxu0 %v1582
    %2549 = vmatprep.subr.mxu0 0.0
    %2550 = vmatpush1.msra.mxu0 %v1583
    %2551 = vmatprep.subr.mxu0 0.0
    %2552 = vmatpush1.msra.mxu0 %v1584
    %2553 = vmatprep.subr.mxu0 0.0
    %2554 = vmatpush1.msra.mxu0 %v1585
    %2555 = vmatprep.mubr.f32.mxu0 %v1193
    %2556 = vmatmul.mubr.f32.gmra.mrb[0].mxu0 %v1192
    %v2557 = vpop.f32.mrb[0].mxu0
    %v2558 = vadd.f32 %v2488, %v2557
    %v2559 = vpop.f32.mrb[0].mxu0
    %2560 = vdwg.mxu0
    %2561 = vmatprep.subr.mxu0 0.0
    %2562 = vmatpush1.msra.mxu0 %v1586
    %2563 = vmatprep.subr.mxu0 0.0
    %2564 = vmatpush1.msra.mxu0 %v1587
    %2565 = vmatprep.subr.mxu0 0.0
    %2566 = vmatpush1.msra.mxu0 %v1588
    %2567 = vmatprep.subr.mxu0 0.0
    %2568 = vmatpush1.msra.mxu0 %v1589
    %2569 = vmatprep.subr.mxu0 0.0
    %2570 = vmatpush1.msra.mxu0 %v1590
    %2571 = vmatprep.subr.mxu0 0.0
    %2572 = vmatpush1.msra.mxu0 %v1591
    %2573 = vmatprep.subr.mxu0 0.0
    %2574 = vmatpush1.msra.mxu0 %v1592
    %2575 = vmatprep.subr.mxu0 0.0
    %2576 = vmatpush1.msra.mxu0 %v1593
    %2577 = vmatprep.subr.mxu0 0.0
    %2578 = vmatpush1.msra.mxu0 %v1594
    %2579 = vmatprep.subr.mxu0 0.0
    %2580 = vmatpush1.msra.mxu0 %v1595
    %2581 = vmatprep.subr.mxu0 0.0
    %2582 = vmatpush1.msra.mxu0 %v1596
    %2583 = vmatprep.subr.mxu0 0.0
    %2584 = vmatpush1.msra.mxu0 %v1597
    %2585 = vmatprep.subr.mxu0 0.0
    %2586 = vmatpush1.msra.mxu0 %v1598
    %2587 = vmatprep.subr.mxu0 0.0
    %2588 = vmatpush1.msra.mxu0 %v1599
    %2589 = vmatprep.subr.mxu0 0.0
    %2590 = vmatpush1.msra.mxu0 %v1600
    %2591 = vmatprep.subr.mxu0 0.0
    %2592 = vmatpush1.msra.mxu0 %v1601
    %2593 = vmatprep.subr.mxu0 0.0
    %2594 = vmatpush1.msra.mxu0 %v1602
    %2595 = vmatprep.subr.mxu0 0.0
    %2596 = vmatpush1.msra.mxu0 %v1603
    %2597 = vmatprep.subr.mxu0 0.0
    %2598 = vmatpush1.msra.mxu0 %v1604
    %2599 = vmatprep.subr.mxu0 0.0
    %2600 = vmatpush1.msra.mxu0 %v1605
    %2601 = vmatprep.subr.mxu0 0.0
    %2602 = vmatpush1.msra.mxu0 %v1606
    %2603 = vmatprep.subr.mxu0 0.0
    %2604 = vmatpush1.msra.mxu0 %v1607
    %2605 = vmatprep.subr.mxu0 0.0
    %2606 = vmatpush1.msra.mxu0 %v1608
    %2607 = vmatprep.subr.mxu0 0.0
    %2608 = vmatpush1.msra.mxu0 %v1609
    %2609 = vmatprep.subr.mxu0 0.0
    %2610 = vmatpush1.msra.mxu0 %v1610
    %2611 = vmatprep.subr.mxu0 0.0
    %2612 = vmatpush1.msra.mxu0 %v1611
    %2613 = vmatprep.subr.mxu0 0.0
    %2614 = vmatpush1.msra.mxu0 %v1612
    %2615 = vmatprep.subr.mxu0 0.0
    %2616 = vmatpush1.msra.mxu0 %v1613
    %2617 = vmatprep.subr.mxu0 0.0
    %2618 = vmatpush1.msra.mxu0 %v1614
    %2619 = vmatprep.subr.mxu0 0.0
    %2620 = vmatpush1.msra.mxu0 %v1615
    %2621 = vmatprep.subr.mxu0 0.0
    %2622 = vmatpush1.msra.mxu0 %v1616
    %2623 = vmatprep.subr.mxu0 0.0
    %2624 = vmatpush1.msra.mxu0 %v1617
    %2625 = vmatprep.mubr.f32.mxu0 %v1195
    %2626 = vmatmul.mubr.f32.gmra.mrb[0].mxu0 %v1194
    %v2627 = vpop.f32.mrb[0].mxu0
    %v2628 = vadd.f32 %v2558, %v2627
    %v2629 = vpop.f32.mrb[0].mxu0
    %2630 = vdwg.mxu0
    %2631 = vmatprep.subr.mxu0 0.0
    %2632 = vmatpush1.msra.mxu0 %v1618
    %2633 = vmatprep.subr.mxu0 0.0
    %2634 = vmatpush1.msra.mxu0 %v1619
    %2635 = vmatprep.subr.mxu0 0.0
    %2636 = vmatpush1.msra.mxu0 %v1620
    %2637 = vmatprep.subr.mxu0 0.0
    %2638 = vmatpush1.msra.mxu0 %v1621
    %2639 = vmatprep.subr.mxu0 0.0
    %2640 = vmatpush1.msra.mxu0 %v1622
    %2641 = vmatprep.subr.mxu0 0.0
    %2642 = vmatpush1.msra.mxu0 %v1623
    %2643 = vmatprep.subr.mxu0 0.0
    %2644 = vmatpush1.msra.mxu0 %v1624
    %2645 = vmatprep.subr.mxu0 0.0
    %2646 = vmatpush1.msra.mxu0 %v1625
    %2647 = vmatprep.subr.mxu0 0.0
    %2648 = vmatpush1.msra.mxu0 %v1626
    %2649 = vmatprep.subr.mxu0 0.0
    %2650 = vmatpush1.msra.mxu0 %v1627
    %2651 = vmatprep.subr.mxu0 0.0
    %2652 = vmatpush1.msra.mxu0 %v1628
    %2653 = vmatprep.subr.mxu0 0.0
    %2654 = vmatpush1.msra.mxu0 %v1629
    %2655 = vmatprep.subr.mxu0 0.0
    %2656 = vmatpush1.msra.mxu0 %v1630
    %2657 = vmatprep.subr.mxu0 0.0
    %2658 = vmatpush1.msra.mxu0 %v1631
    %2659 = vmatprep.subr.mxu0 0.0
    %2660 = vmatpush1.msra.mxu0 %v1632
    %2661 = vmatprep.subr.mxu0 0.0
    %2662 = vmatpush1.msra.mxu0 %v1633
    %2663 = vmatprep.subr.mxu0 0.0
    %2664 = vmatpush1.msra.mxu0 %v1634
    %2665 = vmatprep.subr.mxu0 0.0
    %2666 = vmatpush1.msra.mxu0 %v1635
    %2667 = vmatprep.subr.mxu0 0.0
    %2668 = vmatpush1.msra.mxu0 %v1636
    %2669 = vmatprep.subr.mxu0 0.0
    %2670 = vmatpush1.msra.mxu0 %v1637
    %2671 = vmatprep.subr.mxu0 0.0
    %2672 = vmatpush1.msra.mxu0 %v1638
    %2673 = vmatprep.subr.mxu0 0.0
    %2674 = vmatpush1.msra.mxu0 %v1639
    %2675 = vmatprep.subr.mxu0 0.0
    %2676 = vmatpush1.msra.mxu0 %v1640
    %2677 = vmatprep.subr.mxu0 0.0
    %2678 = vmatpush1.msra.mxu0 %v1641
    %2679 = vmatprep.subr.mxu0 0.0
    %2680 = vmatpush1.msra.mxu0 %v1642
    %2681 = vmatprep.subr.mxu0 0.0
    %2682 = vmatpush1.msra.mxu0 %v1643
    %2683 = vmatprep.subr.mxu0 0.0
    %2684 = vmatpush1.msra.mxu0 %v1644
    %2685 = vmatprep.subr.mxu0 0.0
    %2686 = vmatpush1.msra.mxu0 %v1645
    %2687 = vmatprep.subr.mxu0 0.0
    %2688 = vmatpush1.msra.mxu0 %v1646
    %2689 = vmatprep.subr.mxu0 0.0
    %2690 = vmatpush1.msra.mxu0 %v1647
    %2691 = vmatprep.subr.mxu0 0.0
    %2692 = vmatpush1.msra.mxu0 %v1648
    %2693 = vmatprep.subr.mxu0 0.0
    %2694 = vmatpush1.msra.mxu0 %v1649
    %2695 = vmatprep.mubr.f32.mxu0 %v1197
    %2696 = vmatmul.mubr.f32.gmra.mrb[0].mxu0 %v1196
    %v2697 = vpop.f32.mrb[0].mxu0
    %v2698 = vadd.f32 %v2628, %v2697
    %v2699 = vpop.f32.mrb[0].mxu0
    %2700 = vdwg.mxu0
    %2701 = vmatprep.subr.mxu0 0.0
    %2702 = vmatpush1.msra.mxu0 %v1650
    %2703 = vmatprep.subr.mxu0 0.0
    %2704 = vmatpush1.msra.mxu0 %v1651
    %2705 = vmatprep.subr.mxu0 0.0
    %2706 = vmatpush1.msra.mxu0 %v1652
    %2707 = vmatprep.subr.mxu0 0.0
    %2708 = vmatpush1.msra.mxu0 %v1653
    %2709 = vmatprep.subr.mxu0 0.0
    %2710 = vmatpush1.msra.mxu0 %v1654
    %2711 = vmatprep.subr.mxu0 0.0
    %2712 = vmatpush1.msra.mxu0 %v1655
    %2713 = vmatprep.subr.mxu0 0.0
    %2714 = vmatpush1.msra.mxu0 %v1656
    %2715 = vmatprep.subr.mxu0 0.0
    %2716 = vmatpush1.msra.mxu0 %v1657
    %2717 = vmatprep.subr.mxu0 0.0
    %2718 = vmatpush1.msra.mxu0 %v1658
    %2719 = vmatprep.subr.mxu0 0.0
    %2720 = vmatpush1.msra.mxu0 %v1659
    %2721 = vmatprep.subr.mxu0 0.0
    %2722 = vmatpush1.msra.mxu0 %v1660
    %2723 = vmatprep.subr.mxu0 0.0
    %2724 = vmatpush1.msra.mxu0 %v1661
    %2725 = vmatprep.subr.mxu0 0.0
    %2726 = vmatpush1.msra.mxu0 %v1662
    %2727 = vmatprep.subr.mxu0 0.0
    %2728 = vmatpush1.msra.mxu0 %v1663
    %2729 = vmatprep.subr.mxu0 0.0
    %2730 = vmatpush1.msra.mxu0 %v1664
    %2731 = vmatprep.subr.mxu0 0.0
    %2732 = vmatpush1.msra.mxu0 %v1665
    %2733 = vmatprep.subr.mxu0 0.0
    %2734 = vmatpush1.msra.mxu0 %v1666
    %2735 = vmatprep.subr.mxu0 0.0
    %2736 = vmatpush1.msra.mxu0 %v1667
    %2737 = vmatprep.subr.mxu0 0.0
    %2738 = vmatpush1.msra.mxu0 %v1668
    %2739 = vmatprep.subr.mxu0 0.0
    %2740 = vmatpush1.msra.mxu0 %v1669
    %2741 = vmatprep.subr.mxu0 0.0
    %2742 = vmatpush1.msra.mxu0 %v1670
    %2743 = vmatprep.subr.mxu0 0.0
    %2744 = vmatpush1.msra.mxu0 %v1671
    %2745 = vmatprep.subr.mxu0 0.0
    %2746 = vmatpush1.msra.mxu0 %v1672
    %2747 = vmatprep.subr.mxu0 0.0
    %2748 = vmatpush1.msra.mxu0 %v1673
    %2749 = vmatprep.subr.mxu0 0.0
    %2750 = vmatpush1.msra.mxu0 %v1674
    %2751 = vmatprep.subr.mxu0 0.0
    %2752 = vmatpush1.msra.mxu0 %v1675
    %2753 = vmatprep.subr.mxu0 0.0
    %2754 = vmatpush1.msra.mxu0 %v1676
    %2755 = vmatprep.subr.mxu0 0.0
    %2756 = vmatpush1.msra.mxu0 %v1677
    %2757 = vmatprep.subr.mxu0 0.0
    %2758 = vmatpush1.msra.mxu0 %v1678
    %2759 = vmatprep.subr.mxu0 0.0
    %2760 = vmatpush1.msra.mxu0 %v1679
    %2761 = vmatprep.subr.mxu0 0.0
    %2762 = vmatpush1.msra.mxu0 %v1680
    %2763 = vmatprep.subr.mxu0 0.0
    %2764 = vmatpush1.msra.mxu0 %v1681
    %2765 = vmatprep.mubr.f32.mxu0 %v1199
    %2766 = vmatmul.mubr.f32.gmra.mrb[0].mxu0 %v1198
    %v2767 = vpop.f32.mrb[0].mxu0
    %v2768 = vadd.f32 %v2698, %v2767
    %v2769 = vpop.f32.mrb[0].mxu0
    %2770 = vdwg.mxu0
    %2771 = vmatprep.subr.mxu0 0.0
    %2772 = vmatpush1.msra.mxu0 %v1682
    %2773 = vmatprep.subr.mxu0 0.0
    %2774 = vmatpush1.msra.mxu0 %v1683
    %2775 = vmatprep.subr.mxu0 0.0
    %2776 = vmatpush1.msra.mxu0 %v1684
    %2777 = vmatprep.subr.mxu0 0.0
    %2778 = vmatpush1.msra.mxu0 %v1685
    %2779 = vmatprep.subr.mxu0 0.0
    %2780 = vmatpush1.msra.mxu0 %v1686
    %2781 = vmatprep.subr.mxu0 0.0
    %2782 = vmatpush1.msra.mxu0 %v1687
    %2783 = vmatprep.subr.mxu0 0.0
    %2784 = vmatpush1.msra.mxu0 %v1688
    %2785 = vmatprep.subr.mxu0 0.0
    %2786 = vmatpush1.msra.mxu0 %v1689
    %2787 = vmatprep.subr.mxu0 0.0
    %2788 = vmatpush1.msra.mxu0 %v1690
    %2789 = vmatprep.subr.mxu0 0.0
    %2790 = vmatpush1.msra.mxu0 %v1691
    %2791 = vmatprep.subr.mxu0 0.0
    %2792 = vmatpush1.msra.mxu0 %v1692
    %2793 = vmatprep.subr.mxu0 0.0
    %2794 = vmatpush1.msra.mxu0 %v1693
    %2795 = vmatprep.subr.mxu0 0.0
    %2796 = vmatpush1.msra.mxu0 %v1694
    %2797 = vmatprep.subr.mxu0 0.0
    %2798 = vmatpush1.msra.mxu0 %v1695
    %2799 = vmatprep.subr.mxu0 0.0
    %2800 = vmatpush1.msra.mxu0 %v1696
    %2801 = vmatprep.subr.mxu0 0.0
    %2802 = vmatpush1.msra.mxu0 %v1697
    %2803 = vmatprep.subr.mxu0 0.0
    %2804 = vmatpush1.msra.mxu0 %v1698
    %2805 = vmatprep.subr.mxu0 0.0
    %2806 = vmatpush1.msra.mxu0 %v1699
    %2807 = vmatprep.subr.mxu0 0.0
    %2808 = vmatpush1.msra.mxu0 %v1700
    %2809 = vmatprep.subr.mxu0 0.0
    %2810 = vmatpush1.msra.mxu0 %v1701
    %2811 = vmatprep.subr.mxu0 0.0
    %2812 = vmatpush1.msra.mxu0 %v1702
    %2813 = vmatprep.subr.mxu0 0.0
    %2814 = vmatpush1.msra.mxu0 %v1703
    %2815 = vmatprep.subr.mxu0 0.0
    %2816 = vmatpush1.msra.mxu0 %v1704
    %2817 = vmatprep.subr.mxu0 0.0
    %2818 = vmatpush1.msra.mxu0 %v1705
    %2819 = vmatprep.subr.mxu0 0.0
    %2820 = vmatpush1.msra.mxu0 %v1706
    %2821 = vmatprep.subr.mxu0 0.0
    %2822 = vmatpush1.msra.mxu0 %v1707
    %2823 = vmatprep.subr.mxu0 0.0
    %2824 = vmatpush1.msra.mxu0 %v1708
    %2825 = vmatprep.subr.mxu0 0.0
    %2826 = vmatpush1.msra.mxu0 %v1709
    %2827 = vmatprep.subr.mxu0 0.0
    %2828 = vmatpush1.msra.mxu0 %v1710
    %2829 = vmatprep.subr.mxu0 0.0
    %2830 = vmatpush1.msra.mxu0 %v1711
    %2831 = vmatprep.subr.mxu0 0.0
    %2832 = vmatpush1.msra.mxu0 %v1712
    %2833 = vmatprep.subr.mxu0 0.0
    %2834 = vmatpush1.msra.mxu0 %v1713
    %2835 = vmatprep.mubr.f32.mxu0 %v1201
    %2836 = vmatmul.mubr.f32.gmra.mrb[0].mxu0 %v1200
    %v2837 = vpop.f32.mrb[0].mxu0
    %v2838 = vadd.f32 %v2768, %v2837
    %v2839 = vpop.f32.mrb[0].mxu0
    %2840 = vdwg.mxu0
    %2841 = vst [vmem:[%s7] sm:$0x3] %v2838
    %v2842 = vsel %vm466, %v2838, -inf
    %2843 = vmax.xlane.f32.xlu0 %v2842
    %v2844 = vpop.xlane.xlu0 %2843
    %v2845 = vsub.f32 %v2838, %v2844
    %v2846 = vmul.f32 %v2845, 1.442695
    %v2847 = vpow.pop %v2846
    %v2848 = vsel %vm466, %v2847, 0.0
    %2849 = vadd.xlane.f32.xlu0 %v2848
    %v2850 = vpop.xlane.xlu0 %2849
    %v2851 = vrcp.pop %v2850
    %v2852 = vmul.f32 %v2847, %v2851
    %2853 = vst [vmem:[#allocation10] sm:$0x3] %v2852
    // Predicated region
    $region46: #{_forward_impl.1} parent=1 // pred_check
      _
    $region47: #{_forward_impl.1} parent=1 // pred_check_branch
      %2855 = sbr.rel (0) target = $region49
    $region48: #{_forward_impl.1} parent=1 // pred_region
      _
    $region49: #{_forward_impl.1} parent=1 // pred_fallthru
      _
    // Predicated region
    $region50: #{_forward_impl.1} parent=1 // pred_check
      _
    $region51: #{_forward_impl.1} parent=1 // pred_check_branch
      %2857 = sbr.rel (0) target = $region53
    $region52: #{_forward_impl.1} parent=1 // pred_region
      %s2859 = ssub.s32 32, 32
      %2860 = vsyncadd [#allocation4], %s2859
      %s2862 = sshll.u32 [#allocation10], 4
      %s2863 = int_to_ptr.vmem [resolvable:$true] %s2862
      %2865 = dma.vmem_to_hbm [thread:$0]  %s2863, 32, %s8, [#allocation4]
    $region53: #{_forward_impl.1} parent=1 // pred_fallthru
      _
    // Predicated region
    $region54: #{_forward_impl.1} parent=1 // pred_check
      _
    $region55: #{_forward_impl.1} parent=1 // pred_check_branch
      %2867 = sbr.rel (0) target = $region57
    $region56: #{_forward_impl.1} parent=1 // pred_region
      _
    $region57: #{_forward_impl.1} parent=1 // pred_fallthru
      _
    // Predicated region
    $region58: #{_forward_impl.1} parent=1 // pred_check
      _
    $region59: #{_forward_impl.1} parent=1 // pred_check_branch
      %2869 = sbr.rel (0) target = $region61
    $region60: #{_forward_impl.1} parent=1 // pred_region
      %2870 = dma.done [#allocation4], 32
    $region61: #{_forward_impl.1} parent=1 // pred_fallthru
      _
    %2871 = vsyncpa [#allocation3], 1
    %2872 = vsyncpa [#allocation6], 1
    %2873 = vsyncpa [#allocation9], 1
    %2874 = vsyncpa [#allocation4], 1

</llo_original>
